<compile_context>
chip_gen: v5e
topology: v5e:2x2
jax: 0.10.0
libtpu: 0.0.40
codegen_flags: <defaults>
</compile_context>

<pallas_src>
import functools

import jax
import jax.numpy as jnp
from jax.experimental import pallas as pl
from jax.experimental.pallas import tpu as pltpu


_VMEM_LIMIT = 48 * 1024 * 1024   # safe on v5e/v6e (128 MiB phys) and v7x (64 MiB)


# ------------------------------ tiling helper ------------------------------ #

def _pick_tile(dim, target, align):
    """Largest tile <= target that divides `dim` and is a multiple of `align`.
    Falls back to the full dim (block == full array dim is always legal)."""
    if dim <= target:
        return dim
    t = (target // align) * align
    while t >= align:
        if dim % t == 0:
            return t
        t -= align
    return dim


# -------------------- tiled matmul (+ bias, optional gelu) ------------------ #

def _matmul_kernel(x_ref, w_ref, b_ref, o_ref, acc_ref, *, activation):
    @pl.when(pl.program_id(2) == 0)
    def _():
        acc_ref[...] = jnp.zeros_like(acc_ref)

    # x and w are both bf16 -> MXU with f32 accumulation (no per-step cast).
    acc_ref[...] += jnp.dot(x_ref[...], w_ref[...],
                            preferred_element_type=jnp.float32)

    @pl.when(pl.program_id(2) == pl.num_programs(2) - 1)
    def _():
        y = acc_ref[...] + b_ref[...]
        if activation == "gelu":
            # TODO(synk): HF BERT uses exact erf GELU; tanh approximation used
            # here for a TPU-friendly (EUP) lowering.
            y = jax.nn.gelu(y, approximate=True)
        o_ref[...] = y.astype(o_ref.dtype)


def matmul_bias_act(x, w, b, activation=None, out_dtype=jnp.bfloat16):
    M, K = x.shape
    N = w.shape[1]
    tm = _pick_tile(M, 1024, 16)      # large M tile: cut weight re-streaming
    tn = _pick_tile(N, 512, 128)
    tk = _pick_tile(K, 512, 128)
    return pl.pallas_call(
        functools.partial(_matmul_kernel, activation=activation),
        out_shape=jax.ShapeDtypeStruct((M, N), out_dtype),
        grid=(M // tm, N // tn, K // tk),
        in_specs=[
            pl.BlockSpec((tm, tk), lambda i, j, k: (i, k)),
            pl.BlockSpec((tk, tn), lambda i, j, k: (k, j)),
            pl.BlockSpec((1, tn), lambda i, j, k: (0, j)),
        ],
        out_specs=pl.BlockSpec((tm, tn), lambda i, j, k: (i, j)),
        scratch_shapes=[pltpu.VMEM((tm, tn), jnp.float32)],
        compiler_params=pltpu.CompilerParams(
            dimension_semantics=("parallel", "parallel", "arbitrary"),
            vmem_limit_bytes=_VMEM_LIMIT),
    )(x, w, b.reshape(1, N).astype(jnp.float32))


# -------- tiled matmul with fused bias + residual + LayerNorm epilogue ------ #

def _matmul_res_ln_kernel(x_ref, w_ref, b_ref, r_ref, g_ref, bt_ref, o_ref,
                          acc_ref, *, eps):
    @pl.when(pl.program_id(1) == 0)
    def _():
        acc_ref[...] = jnp.zeros_like(acc_ref)

    acc_ref[...] += jnp.dot(x_ref[...], w_ref[...],
                            preferred_element_type=jnp.float32)

    @pl.when(pl.program_id(1) == pl.num_programs(1) - 1)
    def _():
        y = acc_ref[...] + b_ref[...] + r_ref[...].astype(jnp.float32)
        mu = jnp.mean(y, axis=-1, keepdims=True)
        var = jnp.mean(jnp.square(y - mu), axis=-1, keepdims=True)
        yn = (y - mu) * jax.lax.rsqrt(var + eps)
        o_ref[...] = (yn * g_ref[...] + bt_ref[...]).astype(o_ref.dtype)


def matmul_bias_residual_ln(x, w, b, residual, gamma, beta, eps=1e-12,
                            out_dtype=jnp.bfloat16):
    """(x @ w + b + residual) -> LayerNorm, all inside the matmul finalize."""
    M, K = x.shape
    N = w.shape[1]          # output dim is the full LayerNorm axis (kept whole)
    tm = _pick_tile(M, 512, 16)
    tk = _pick_tile(K, 512, 128)
    return pl.pallas_call(
        functools.partial(_matmul_res_ln_kernel, eps=eps),
        out_shape=jax.ShapeDtypeStruct((M, N), out_dtype),
        grid=(M // tm, K // tk),
        in_specs=[
            pl.BlockSpec((tm, tk), lambda i, k: (i, k)),
            pl.BlockSpec((tk, N), lambda i, k: (k, 0)),
            pl.BlockSpec((1, N), lambda i, k: (0, 0)),
            pl.BlockSpec((tm, N), lambda i, k: (i, 0)),
            pl.BlockSpec((1, N), lambda i, k: (0, 0)),
            pl.BlockSpec((1, N), lambda i, k: (0, 0)),
        ],
        out_specs=pl.BlockSpec((tm, N), lambda i, k: (i, 0)),
        scratch_shapes=[pltpu.VMEM((tm, N), jnp.float32)],
        compiler_params=pltpu.CompilerParams(
            dimension_semantics=("parallel", "arbitrary"),
            vmem_limit_bytes=_VMEM_LIMIT),
    )(x, w, b.reshape(1, N).astype(jnp.float32), residual,
      gamma.reshape(1, N), beta.reshape(1, N))


# ------------------------ LayerNorm (no residual) --------------------------- #

def _ln_kernel(x_ref, g_ref, b_ref, o_ref, *, eps):
    x = x_ref[...].astype(jnp.float32)
    mu = jnp.mean(x, axis=-1, keepdims=True)
    var = jnp.mean(jnp.square(x - mu), axis=-1, keepdims=True)
    y = (x - mu) * jax.lax.rsqrt(var + eps)
    o_ref[...] = (y * g_ref[...] + b_ref[...]).astype(o_ref.dtype)


def layernorm(x, gamma, beta, eps=1e-12, out_dtype=jnp.bfloat16):
    M, H = x.shape
    tm = _pick_tile(M, 512, 8)
    return pl.pallas_call(
        functools.partial(_ln_kernel, eps=eps),
        out_shape=jax.ShapeDtypeStruct((M, H), out_dtype),
        grid=(M // tm,),
        in_specs=[pl.BlockSpec((tm, H), lambda i: (i, 0)),
                  pl.BlockSpec((1, H), lambda i: (0, 0)),
                  pl.BlockSpec((1, H), lambda i: (0, 0))],
        out_specs=pl.BlockSpec((tm, H), lambda i: (i, 0)),
        compiler_params=pltpu.CompilerParams(dimension_semantics=("parallel",)),
    )(x, gamma.reshape(1, H), beta.reshape(1, H))


# ------------------------- multi-head self-attention ------------------------ #
# Consumes the fused QKV matmul output (B, S, 3H) directly (lane-dense blocks),
# splits heads in-kernel, and writes a lane-dense (B, S, H) context the
# O-projection can consume without any HBM relayout.

def _attend_one_head(qh, kh, vh, mask):
    # qh/kh/vh: (S, dh) bf16; mask: (1, S) additive f32.
    s = jax.lax.dot_general(qh, kh, (((1,), (1,)), ((), ())),
                            preferred_element_type=jnp.float32)    # (S, S)
    s = s + mask
    s = s - jnp.max(s, axis=-1, keepdims=True)
    # TODO(synk): compute exp in bf16 on v6e/v7x (bf16 EUP) once validated.
    p = jnp.exp(s)
    inv = pl.reciprocal(jnp.sum(p, axis=-1, keepdims=True), approx=True)
    return jnp.dot((p * inv).astype(vh.dtype), vh,
                   preferred_element_type=jnp.float32)             # (S, dh)


def _attention_kernel_headblk(q_ref, k_ref, v_ref, m_ref, o_ref, *,
                              heads, dh, scale):
    mask = m_ref[0]                                  # (1, S)
    for h in range(heads):                           # heads-per-block is small
        sl = pl.ds(h * dh, dh)
        ctx = _attend_one_head(q_ref[0, :, sl] * scale,   # fold 1/sqrt(dh) into Q
                               k_ref[0, :, sl], v_ref[0, :, sl], mask)
        o_ref[0, :, sl] = ctx.astype(o_ref.dtype)


def _attention_kernel_packed(qkv_ref, m_ref, o_ref, *, num_heads, dh, scale):
    # Fallback for tiny models where no head-block gives a 128-multiple lane dim.
    H = num_heads * dh
    mask = m_ref[0]
    for h in range(num_heads):
        qh = qkv_ref[0, :, pl.ds(h * dh, dh)] * scale
        kh = qkv_ref[0, :, pl.ds(H + h * dh, dh)]
        vh = qkv_ref[0, :, pl.ds(2 * H + h * dh, dh)]
        ctx = _attend_one_head(qh, kh, vh, mask)
        o_ref[0, :, pl.ds(h * dh, dh)] = ctx.astype(o_ref.dtype)


def multi_head_attention(qkv, add_mask, num_heads, out_dtype=jnp.bfloat16):
    """qkv: (B, S, 3H) bf16 straight from the fused QKV projection."""
    B, S, H3 = qkv.shape
    H = H3 // 3
    dh = H // num_heads
    scale = 1.0 / float(dh) ** 0.5

    # Heads per block such that the block lane dim is a multiple of 128
    # (lane-dense DMA) and VMEM per step stays bounded (v5e/v7x budgets).
    hb = None
    for cand in range(1, num_heads + 1):
        if num_heads % cand == 0 and (cand * dh) % 128 == 0:
            hb = cand
            break

    if hb is not None:
        bd = hb * dh
        nblk = num_heads // hb

        def qkv_spec(off):
            return pl.BlockSpec((1, S, bd),
                                lambda b, j, off=off: (b, 0, off * nblk + j))

        # TODO(synk): for long sequences add KV tiling with online softmax.
        return pl.pallas_call(
            functools.partial(_attention_kernel_headblk,
                              heads=hb, dh=dh, scale=scale),
            out_shape=jax.ShapeDtypeStruct((B, S, H), out_dtype),
            grid=(B, nblk),
            in_specs=[qkv_spec(0), qkv_spec(1), qkv_spec(2),
                      pl.BlockSpec((1, 1, S), lambda b, j: (b, 0, 0))],
            out_specs=pl.BlockSpec((1, S, bd), lambda b, j: (b, 0, j)),
            compiler_params=pltpu.CompilerParams(
                dimension_semantics=("parallel", "parallel"),
                vmem_limit_bytes=_VMEM_LIMIT),
        )(qkv, qkv, qkv, add_mask)

    return pl.pallas_call(
        functools.partial(_attention_kernel_packed,
                          num_heads=num_heads, dh=dh, scale=scale),
        out_shape=jax.ShapeDtypeStruct((B, S, H), out_dtype),
        grid=(B,),
        in_specs=[pl.BlockSpec((1, S, H3), lambda b: (b, 0, 0)),
                  pl.BlockSpec((1, 1, S), lambda b: (b, 0, 0))],
        out_specs=pl.BlockSpec((1, S, H), lambda b: (b, 0, 0)),
        compiler_params=pltpu.CompilerParams(
            dimension_semantics=("parallel",),
            vmem_limit_bytes=_VMEM_LIMIT),
    )(qkv, add_mask)


# --------------------- batched group-mean aggregation ----------------------- #
# One pallas_call aggregates ALL (L+1) hidden states: the one-hot group matrix
# is built once per batch element and reused; CLS/SEP stripping is encoded in
# the extended index array (those positions map to group -1), so no stacked /
# sliced copy of the hidden states is ever materialized in HBM.

def _group_mean_kernel(idx_ref, *refs, num_groups, n_states):
    x_refs = refs[:n_states]
    o_refs = refs[n_states:]
    idx = idx_ref[0]                                       # (1, S) int32
    s_len = idx.shape[-1]
    gids = jax.lax.broadcasted_iota(jnp.int32, (num_groups, s_len), 0)
    onehot = (gids == idx).astype(jnp.float32)             # (T, S)
    counts = jnp.sum(onehot, axis=-1, keepdims=True)       # (T, 1)
    denom = jnp.maximum(counts, 1.0)                       # empty group -> 0
    oh = onehot.astype(jnp.bfloat16)
    for xr, orf in zip(x_refs, o_refs):
        sums = jnp.dot(oh, xr[0], preferred_element_type=jnp.float32)  # (T, H)
        orf[0] = (sums / denom).astype(orf.dtype)          # exact divide


def group_mean_aggregate_all(hidden_states, idx_full, num_groups):
    """SequenceGroupAggregating(mode='mean') for every hidden state in ONE call.
    hidden_states: list of (B, S, H); idx_full: (B, S) int32 (-1 = no group)."""
    n_states = len(hidden_states)
    B, S, H = hidden_states[0].shape
    idx3 = idx_full.astype(jnp.int32).reshape(B, 1, S)
    in_specs = [pl.BlockSpec((1, 1, S), lambda b: (b, 0, 0))]
    in_specs += [pl.BlockSpec((1, S, H), lambda b: (b, 0, 0))
                 for _ in range(n_states)]
    out_specs = [pl.BlockSpec((1, num_groups, H), lambda b: (b, 0, 0))
                 for _ in range(n_states)]
    out_shape = tuple(jax.ShapeDtypeStruct((B, num_groups, H), jnp.float32)
                      for _ in range(n_states))
    outs = pl.pallas_call(
        functools.partial(_group_mean_kernel, num_groups=num_groups,
                          n_states=n_states),
        out_shape=out_shape,
        grid=(B,),
        in_specs=in_specs,
        out_specs=out_specs,
        compiler_params=pltpu.CompilerParams(dimension_semantics=("parallel",)),
    )(idx3, *hidden_states)
    return list(outs)


# ------------------------------- parameters --------------------------------- #

def init_params(key, *, vocab, max_pos, hid, ff, num_layers):
    def nrm(k, shape):
        return jax.random.normal(k, shape, jnp.float32) * 0.02

    keys = jax.random.split(key, 4 + num_layers)
    params = {
        "word_emb": nrm(keys[0], (vocab, hid)),
        "pos_emb": nrm(keys[1], (max_pos, hid)),
        "type_emb": nrm(keys[2], (2, hid)),
        "emb_ln_g": jnp.ones((hid,), jnp.float32),
        "emb_ln_b": jnp.zeros((hid,), jnp.float32),
        "layers": [],
    }
    for l in range(num_layers):
        lk = jax.random.split(keys[4 + l], 4)
        params["layers"].append({
            # fused QKV projection weight; weights stored bf16 (MXU inputs)
            "wqkv": nrm(lk[0], (hid, 3 * hid)).astype(jnp.bfloat16),
            "bqkv": jnp.zeros((3 * hid,), jnp.float32),
            "wo": nrm(lk[1], (hid, hid)).astype(jnp.bfloat16),
            "bo": jnp.zeros((hid,), jnp.float32),
            "w1": nrm(lk[2], (hid, ff)).astype(jnp.bfloat16),
            "b1": jnp.zeros((ff,), jnp.float32),
            "w2": nrm(lk[3], (ff, hid)).astype(jnp.bfloat16),
            "b2": jnp.zeros((hid,), jnp.float32),
            "ln1_g": jnp.ones((hid,), jnp.float32), "ln1_b": jnp.zeros((hid,), jnp.float32),
            "ln2_g": jnp.ones((hid,), jnp.float32), "ln2_b": jnp.zeros((hid,), jnp.float32),
        })
    return params


# ------------------------------- forward pass -------------------------------- #

def bert_like_embedder_forward(params, sub_tok_ids, sub_mask, ori_indexes,
                               *, num_heads, num_groups):
    B, S = sub_tok_ids.shape
    H = params["word_emb"].shape[1]

    # BERT embeddings: table gathers stay in plain JAX (data-dependent gather);
    # the (no-residual) LayerNorm runs as a Pallas kernel (bf16 output).
    emb = (params["word_emb"][sub_tok_ids]
           + params["pos_emb"][None, :S]
           + params["type_emb"][0][None, None, :])
    x2d = layernorm(emb.reshape(B * S, H), params["emb_ln_g"], params["emb_ln_b"])
    hidden_states = [x2d.reshape(B, S, H)]

    add_mask = ((1.0 - sub_mask.astype(jnp.float32)) * -1e9).reshape(B, 1, S)

    for lp in params["layers"]:
        # fused QKV projection -> (B*S, 3H) bf16 (one matmul)
        qkv = matmul_bias_act(x2d, lp["wqkv"], lp["bqkv"], out_dtype=jnp.bfloat16)
        # attention consumes (B, S, 3H) directly; no HBM transposes
        ctx = multi_head_attention(qkv.reshape(B, S, 3 * H), add_mask, num_heads)
        # O-projection with fused bias + residual + LayerNorm epilogue (bf16 out)
        x2d = matmul_bias_residual_ln(ctx.reshape(B * S, H), lp["wo"], lp["bo"],
                                      x2d, lp["ln1_g"], lp["ln1_b"])
        # FFN1 (+GELU) fused; FFN2 with fused bias + residual + LayerNorm
        ff_h = matmul_bias_act(x2d, lp["w1"], lp["b1"], activation="gelu",
                               out_dtype=jnp.bfloat16)
        x2d = matmul_bias_residual_ln(ff_h, lp["w2"], lp["b2"], x2d,
                                      lp["ln2_g"], lp["ln2_b"])
        hidden_states.append(x2d.reshape(B, S, H))

    # --- BertLikeEmbedder.forward semantics ---
    # strip [CLS]/[SEP] by mapping position 0 and position S-1 to group -1 (and
    # keeping the padded -1 entries of ori_indexes), then group-mean aggregate
    # EVERY hidden state in one batched pallas_call (no stack/slice HBM copy);
    # bert_hidden == aggregation of the last hidden state.
    # NOTE: the reference also computes sub_mask[:, 2:] but never uses it.
    neg = jnp.full((B, 1), -1, jnp.int32)
    idx_full = jnp.concatenate([neg, ori_indexes.astype(jnp.int32), neg], axis=1)
    all_bert_hidden = group_mean_aggregate_all(hidden_states, idx_full, num_groups)
    bert_hidden = all_bert_hidden[-1]
    return bert_hidden, all_bert_hidden


# ----------------------------------- main ------------------------------------ #

if __name__ == "__main__":
    B, S_IDS, H, N_HEADS, FF, N_LAYERS = 2, 10, 128, 2, 256, 2
    VOCAB, MAX_POS, NUM_TOKENS = 50, 64, 6
    S_SUB = S_IDS - 2

    key = jax.random.PRNGKey(0)
    pkey, ikey = jax.random.split(key)
    params = init_params(pkey, vocab=VOCAB, max_pos=MAX_POS, hid=H, ff=FF,
                         num_layers=N_LAYERS)

    # sub-token ids: [CLS]=1 ... [SEP]=2, pad=0
    body = jax.random.randint(ikey, (B, S_IDS), 5, VOCAB)
    sub_tok_ids = body.at[:, 0].set(1)
    sub_tok_ids = sub_tok_ids.at[0, S_IDS - 1].set(2)   # batch 0: length 10
    sub_tok_ids = sub_tok_ids.at[1, 7].set(2)           # batch 1: length 8
    sub_tok_ids = sub_tok_ids.at[1, 8:].set(0)
    sub_mask = jnp.array([[True] * 10,
                          [True] * 8 + [False] * 2])
    ori_indexes = jnp.array([[0, 0, 1, 2, 2, 3, 4, 5],
                             [0, 1, 1, 2, 3, 4, -1, -1]], dtype=jnp.int32)

    fwd = jax.jit(functools.partial(bert_like_embedder_forward,
                                    num_heads=N_HEADS, num_groups=NUM_TOKENS))
    bert_hidden, all_bert_hidden = fwd(params, sub_tok_ids, sub_mask, ori_indexes)
    jax.block_until_ready((bert_hidden, all_bert_hidden))

    assert bert_hidden.shape == (B, NUM_TOKENS, H)
    assert len(all_bert_hidden) == N_LAYERS + 1
    assert all(h.shape == (B, NUM_TOKENS, H) for h in all_bert_hidden)
    print("KERNEL_OK")
</pallas_src>

<mosaic_0001>
module attributes {stable_mosaic.version = 11 : i64} {
  func.func @_ln_kernel(%arg0: i32, %arg1: memref<20x128xf32, #tpu.memory_space<vmem>>, %arg2: memref<1x128xf32, #tpu.memory_space<vmem>>, %arg3: memref<1x128xf32, #tpu.memory_space<vmem>>, %arg4: memref<20x128xbf16, #tpu.memory_space<vmem>>) attributes {dimension_semantics = [#tpu.dimension_semantics<parallel>], iteration_bounds = array<i64: 1>, scalar_prefetch = 0 : i64, scratch_operands = 0 : i64, tpu.core_type = #tpu.core_type<tc>, window_params = [{transform_indices = @transform_0, window_bounds = array<i64: 20, 128>}, {pipeline_mode = #tpu.pipeline_mode<synchronous>, transform_indices = @transform_1, window_bounds = array<i64: 1, 128>}, {pipeline_mode = #tpu.pipeline_mode<synchronous>, transform_indices = @transform_2, window_bounds = array<i64: 1, 128>}, {transform_indices = @transform_3, window_bounds = array<i64: 20, 128>}]} {
    %c0 = arith.constant 0 : index
    %c0_0 = arith.constant 0 : index
    %0 = vector.load %arg1[%c0, %c0_0] : memref<20x128xf32, #tpu.memory_space<vmem>>, vector<20x128xf32>
    %cst = arith.constant dense<0.000000e+00> : vector<20xf32>
    %1 = vector.multi_reduction <add>, %0, %cst [1] : vector<20x128xf32> to vector<20xf32>
    %2 = vector.shape_cast %1 : vector<20xf32> to vector<20x1xf32>
    %cst_1 = arith.constant 1.280000e+02 : f32
    %3 = vector.broadcast %cst_1 : f32 to vector<20x1xf32>
    %4 = arith.divf %2, %3 : vector<20x1xf32>
    %5 = vector.broadcast %4 : vector<20x1xf32> to vector<20x128xf32>
    %6 = arith.subf %0, %5 : vector<20x128xf32>
    %7 = arith.mulf %6, %6 : vector<20x128xf32>
    %cst_2 = arith.constant dense<0.000000e+00> : vector<20xf32>
    %8 = vector.multi_reduction <add>, %7, %cst_2 [1] : vector<20x128xf32> to vector<20xf32>
    %9 = vector.shape_cast %8 : vector<20xf32> to vector<20x1xf32>
    %cst_3 = arith.constant 1.280000e+02 : f32
    %10 = vector.broadcast %cst_3 : f32 to vector<20x1xf32>
    %11 = arith.divf %9, %10 : vector<20x1xf32>
    %12 = vector.broadcast %4 : vector<20x1xf32> to vector<20x128xf32>
    %13 = arith.subf %0, %12 : vector<20x128xf32>
    %cst_4 = arith.constant 9.99999996E-13 : f32
    %14 = vector.broadcast %cst_4 : f32 to vector<20x1xf32>
    %15 = arith.addf %11, %14 : vector<20x1xf32>
    %16 = math.rsqrt %15 : vector<20x1xf32>
    %17 = vector.broadcast %16 : vector<20x1xf32> to vector<20x128xf32>
    %18 = arith.mulf %13, %17 : vector<20x128xf32>
    %c0_5 = arith.constant 0 : index
    %c0_6 = arith.constant 0 : index
    %19 = vector.load %arg2[%c0_5, %c0_6] : memref<1x128xf32, #tpu.memory_space<vmem>>, vector<1x128xf32>
    %20 = vector.broadcast %19 : vector<1x128xf32> to vector<20x128xf32>
    %21 = arith.mulf %18, %20 : vector<20x128xf32>
    %c0_7 = arith.constant 0 : index
    %c0_8 = arith.constant 0 : index
    %22 = vector.load %arg3[%c0_7, %c0_8] : memref<1x128xf32, #tpu.memory_space<vmem>>, vector<1x128xf32>
    %23 = vector.broadcast %22 : vector<1x128xf32> to vector<20x128xf32>
    %24 = arith.addf %21, %23 : vector<20x128xf32>
    %25 = arith.truncf %24 : vector<20x128xf32> to vector<20x128xbf16>
    %c0_9 = arith.constant 0 : index
    %c0_10 = arith.constant 0 : index
    %26 = vector.load %arg4[%c0_9, %c0_10] : memref<20x128xbf16, #tpu.memory_space<vmem>>, vector<20x128xbf16>
    tpu.vector_store %arg4[%c0_9, %c0_10], %25 {strides = array<i32>} : memref<20x128xbf16, #tpu.memory_space<vmem>>, vector<20x128xbf16>,
    return
  }
  func.func @transform_0(%arg0: i32) -> (i32, i32) {
    %c0_i32 = arith.constant 0 : i32
    %c0_i32_0 = arith.constant 0 : i32
    return %arg0, %c0_i32 : i32, i32
  }
  func.func @transform_1(%arg0: i32) -> (i32, i32) {
    %c0_i32 = arith.constant 0 : i32
    %c0_i32_0 = arith.constant 0 : i32
    %c0_i32_1 = arith.constant 0 : i32
    return %c0_i32, %c0_i32_0 : i32, i32
  }
  func.func @transform_2(%arg0: i32) -> (i32, i32) {
    %c0_i32 = arith.constant 0 : i32
    %c0_i32_0 = arith.constant 0 : i32
    %c0_i32_1 = arith.constant 0 : i32
    return %c0_i32, %c0_i32_0 : i32, i32
  }
  func.func @transform_3(%arg0: i32) -> (i32, i32) {
    %c0_i32 = arith.constant 0 : i32
    %c0_i32_0 = arith.constant 0 : i32
    return %arg0, %c0_i32 : i32, i32
  }
}

module attributes {stable_mosaic.version = 11 : i64} {
  func.func @_matmul_kernel(%arg0: i32, %arg1: i32, %arg2: i32, %arg3: memref<20x128xbf16, #tpu.memory_space<vmem>>, %arg4: memref<128x384xbf16, #tpu.memory_space<vmem>>, %arg5: memref<1x384xf32, #tpu.memory_space<vmem>>, %arg6: memref<20x384xbf16, #tpu.memory_space<vmem>>, %arg7: memref<20x384xf32, #tpu.memory_space<vmem>>) attributes {dimension_semantics = [#tpu.dimension_semantics<parallel>, #tpu.dimension_semantics<parallel>, #tpu.dimension_semantics<arbitrary>], iteration_bounds = array<i64: 1, 1, 1>, scalar_prefetch = 0 : i64, scratch_operands = 1 : i64, tpu.core_type = #tpu.core_type<tc>, window_params = [{transform_indices = @transform_0, window_bounds = array<i64: 20, 128>}, {transform_indices = @transform_1, window_bounds = array<i64: 128, 384>}, {transform_indices = @transform_2, window_bounds = array<i64: 1, 384>}, {transform_indices = @transform_3, window_bounds = array<i64: 20, 384>}]} {
    %c0_i32 = arith.constant 0 : i32
    %0 = arith.cmpi eq, %arg2, %c0_i32 : i32
    %1 = arith.extui %0 : i1 to i32
    %c0_i32_0 = arith.constant 0 : i32
    %2 = arith.cmpi ne, %1, %c0_i32_0 : i32
    scf.if %2 {
      %cst_10 = arith.constant 0.000000e+00 : f32
      %12 = vector.broadcast %cst_10 : f32 to vector<20x384xf32>
      %c0_11 = arith.constant 0 : index
      %c0_12 = arith.constant 0 : index
      %13 = vector.load %arg7[%c0_11, %c0_12] : memref<20x384xf32, #tpu.memory_space<vmem>>, vector<20x384xf32>
      tpu.vector_store %arg7[%c0_11, %c0_12], %12 {strides = array<i32>} : memref<20x384xf32, #tpu.memory_space<vmem>>, vector<20x384xf32>,
    } else {
    }
    %c0 = arith.constant 0 : index
    %c0_1 = arith.constant 0 : index
    %3 = vector.load %arg7[%c0, %c0_1] : memref<20x384xf32, #tpu.memory_space<vmem>>, vector<20x384xf32>
    %c0_2 = arith.constant 0 : index
    %c0_3 = arith.constant 0 : index
    %4 = vector.load %arg3[%c0_2, %c0_3] : memref<20x128xbf16, #tpu.memory_space<vmem>>, vector<20x128xbf16>
    %c0_4 = arith.constant 0 : index
    %c0_5 = arith.constant 0 : index
    %5 = vector.load %arg4[%c0_4, %c0_5] : memref<128x384xbf16, #tpu.memory_space<vmem>>, vector<128x384xbf16>
    %cst = arith.constant dense<0.000000e+00> : vector<20x384xf32>
    %6 = tpu.matmul %4, %5, %cst {dimension_numbers = #tpu.dot_dimension_numbers<[1], [0], [0], [1], [0, 0, 1, 1], [], []>} : vector<20x128xbf16>, vector<128x384xbf16>, vector<20x384xf32> -> vector<20x384xf32>
    %7 = arith.addf %3, %6 : vector<20x384xf32>
    %c0_6 = arith.constant 0 : index
    %c0_7 = arith.constant 0 : index
    %8 = vector.load %arg7[%c0_6, %c0_7] : memref<20x384xf32, #tpu.memory_space<vmem>>, vector<20x384xf32>
    tpu.vector_store %arg7[%c0_6, %c0_7], %7 {strides = array<i32>} : memref<20x384xf32, #tpu.memory_space<vmem>>, vector<20x384xf32>,
    %c0_i32_8 = arith.constant 0 : i32
    %9 = arith.cmpi eq, %arg2, %c0_i32_8 : i32
    %10 = arith.extui %9 : i1 to i32
    %c0_i32_9 = arith.constant 0 : i32
    %11 = arith.cmpi ne, %10, %c0_i32_9 : i32
    scf.if %11 {
      %c0_10 = arith.constant 0 : index
      %c0_11 = arith.constant 0 : index
      %12 = vector.load %arg7[%c0_10, %c0_11] : memref<20x384xf32, #tpu.memory_space<vmem>>, vector<20x384xf32>
      %c0_12 = arith.constant 0 : index
      %c0_13 = arith.constant 0 : index
      %13 = vector.load %arg5[%c0_12, %c0_13] : memref<1x384xf32, #tpu.memory_space<vmem>>, vector<1x384xf32>
      %14 = vector.broadcast %13 : vector<1x384xf32> to vector<20x384xf32>
      %15 = arith.addf %12, %14 : vector<20x384xf32>
      %16 = arith.truncf %15 : vector<20x384xf32> to vector<20x384xbf16>
      %c0_14 = arith.constant 0 : index
      %c0_15 = arith.constant 0 : index
      %17 = vector.load %arg6[%c0_14, %c0_15] : memref<20x384xbf16, #tpu.memory_space<vmem>>, vector<20x384xbf16>
      tpu.vector_store %arg6[%c0_14, %c0_15], %16 {strides = array<i32>} : memref<20x384xbf16, #tpu.memory_space<vmem>>, vector<20x384xbf16>,
    } else {
    }
    return
  }
  func.func @transform_0(%arg0: i32, %arg1: i32, %arg2: i32) -> (i32, i32) {
    %c0_i32 = arith.constant 0 : i32
    return %arg0, %arg2 : i32, i32
  }
  func.func @transform_1(%arg0: i32, %arg1: i32, %arg2: i32) -> (i32, i32) {
    %c0_i32 = arith.constant 0 : i32
    return %arg2, %arg1 : i32, i32
  }
  func.func @transform_2(%arg0: i32, %arg1: i32, %arg2: i32) -> (i32, i32) {
    %c0_i32 = arith.constant 0 : i32
    %c0_i32_0 = arith.constant 0 : i32
    return %c0_i32, %arg1 : i32, i32
  }
  func.func @transform_3(%arg0: i32, %arg1: i32, %arg2: i32) -> (i32, i32) {
    %c0_i32 = arith.constant 0 : i32
    return %arg0, %arg1 : i32, i32
  }
}

module attributes {stable_mosaic.version = 11 : i64} {
  func.func @_matmul_res_ln_kernel(%arg0: i32, %arg1: i32, %arg2: memref<20x128xbf16, #tpu.memory_space<vmem>>, %arg3: memref<128x128xbf16, #tpu.memory_space<vmem>>, %arg4: memref<1x128xf32, #tpu.memory_space<vmem>>, %arg5: memref<20x128xbf16, #tpu.memory_space<vmem>>, %arg6: memref<1x128xf32, #tpu.memory_space<vmem>>, %arg7: memref<1x128xf32, #tpu.memory_space<vmem>>, %arg8: memref<20x128xbf16, #tpu.memory_space<vmem>>, %arg9: memref<20x128xf32, #tpu.memory_space<vmem>>) attributes {dimension_semantics = [#tpu.dimension_semantics<parallel>, #tpu.dimension_semantics<arbitrary>], iteration_bounds = array<i64: 1, 1>, scalar_prefetch = 0 : i64, scratch_operands = 1 : i64, tpu.core_type = #tpu.core_type<tc>, window_params = [{transform_indices = @transform_0, window_bounds = array<i64: 20, 128>}, {transform_indices = @transform_1, window_bounds = array<i64: 128, 128>}, {pipeline_mode = #tpu.pipeline_mode<synchronous>, transform_indices = @transform_2, window_bounds = array<i64: 1, 128>}, {transform_indices = @transform_3, window_bounds = array<i64: 20, 128>}, {pipeline_mode = #tpu.pipeline_mode<synchronous>, transform_indices = @transform_4, window_bounds = array<i64: 1, 128>}, {pipeline_mode = #tpu.pipeline_mode<synchronous>, transform_indices = @transform_5, window_bounds = array<i64: 1, 128>}, {transform_indices = @transform_6, window_bounds = array<i64: 20, 128>}]} {
    %c0_i32 = arith.constant 0 : i32
    %0 = arith.cmpi eq, %arg1, %c0_i32 : i32
    %1 = arith.extui %0 : i1 to i32
    %c0_i32_0 = arith.constant 0 : i32
    %2 = arith.cmpi ne, %1, %c0_i32_0 : i32
    scf.if %2 {
      %cst_10 = arith.constant 0.000000e+00 : f32
      %12 = vector.broadcast %cst_10 : f32 to vector<20x128xf32>
      %c0_11 = arith.constant 0 : index
      %c0_12 = arith.constant 0 : index
      %13 = vector.load %arg9[%c0_11, %c0_12] : memref<20x128xf32, #tpu.memory_space<vmem>>, vector<20x128xf32>
      tpu.vector_store %arg9[%c0_11, %c0_12], %12 {strides = array<i32>} : memref<20x128xf32, #tpu.memory_space<vmem>>, vector<20x128xf32>,
    } else {
    }
    %c0 = arith.constant 0 : index
    %c0_1 = arith.constant 0 : index
    %3 = vector.load %arg9[%c0, %c0_1] : memref<20x128xf32, #tpu.memory_space<vmem>>, vector<20x128xf32>
    %c0_2 = arith.constant 0 : index
    %c0_3 = arith.constant 0 : index
    %4 = vector.load %arg2[%c0_2, %c0_3] : memref<20x128xbf16, #tpu.memory_space<vmem>>, vector<20x128xbf16>
    %c0_4 = arith.constant 0 : index
    %c0_5 = arith.constant 0 : index
    %5 = vector.load %arg3[%c0_4, %c0_5] : memref<128x128xbf16, #tpu.memory_space<vmem>>, vector<128x128xbf16>
    %cst = arith.constant dense<0.000000e+00> : vector<20x128xf32>
    %6 = tpu.matmul %4, %5, %cst {dimension_numbers = #tpu.dot_dimension_numbers<[1], [0], [0], [1], [0, 0, 1, 1], [], []>} : vector<20x128xbf16>, vector<128x128xbf16>, vector<20x128xf32> -> vector<20x128xf32>
    %7 = arith.addf %3, %6 : vector<20x128xf32>
    %c0_6 = arith.constant 0 : index
    %c0_7 = arith.constant 0 : index
    %8 = vector.load %arg9[%c0_6, %c0_7] : memref<20x128xf32, #tpu.memory_space<vmem>>, vector<20x128xf32>
    tpu.vector_store %arg9[%c0_6, %c0_7], %7 {strides = array<i32>} : memref<20x128xf32, #tpu.memory_space<vmem>>, vector<20x128xf32>,
    %c0_i32_8 = arith.constant 0 : i32
    %9 = arith.cmpi eq, %arg1, %c0_i32_8 : i32
    %10 = arith.extui %9 : i1 to i32
    %c0_i32_9 = arith.constant 0 : i32
    %11 = arith.cmpi ne, %10, %c0_i32_9 : i32
    scf.if %11 {
      %c0_10 = arith.constant 0 : index
      %c0_11 = arith.constant 0 : index
      %12 = vector.load %arg9[%c0_10, %c0_11] : memref<20x128xf32, #tpu.memory_space<vmem>>, vector<20x128xf32>
      %c0_12 = arith.constant 0 : index
      %c0_13 = arith.constant 0 : index
      %13 = vector.load %arg4[%c0_12, %c0_13] : memref<1x128xf32, #tpu.memory_space<vmem>>, vector<1x128xf32>
      %14 = vector.broadcast %13 : vector<1x128xf32> to vector<20x128xf32>
      %15 = arith.addf %12, %14 : vector<20x128xf32>
      %c0_14 = arith.constant 0 : index
      %c0_15 = arith.constant 0 : index
      %16 = vector.load %arg5[%c0_14, %c0_15] : memref<20x128xbf16, #tpu.memory_space<vmem>>, vector<20x128xbf16>
      %17 = arith.extf %16 : vector<20x128xbf16> to vector<20x128xf32>
      %18 = arith.addf %15, %17 : vector<20x128xf32>
      %cst_16 = arith.constant dense<0.000000e+00> : vector<20xf32>
      %19 = vector.multi_reduction <add>, %18, %cst_16 [1] : vector<20x128xf32> to vector<20xf32>
      %20 = vector.shape_cast %19 : vector<20xf32> to vector<20x1xf32>
      %cst_17 = arith.constant 1.280000e+02 : f32
      %21 = vector.broadcast %cst_17 : f32 to vector<20x1xf32>
      %22 = arith.divf %20, %21 : vector<20x1xf32>
      %23 = vector.broadcast %22 : vector<20x1xf32> to vector<20x128xf32>
      %24 = arith.subf %18, %23 : vector<20x128xf32>
      %25 = arith.mulf %24, %24 : vector<20x128xf32>
      %cst_18 = arith.constant dense<0.000000e+00> : vector<20xf32>
      %26 = vector.multi_reduction <add>, %25, %cst_18 [1] : vector<20x128xf32> to vector<20xf32>
      %27 = vector.shape_cast %26 : vector<20xf32> to vector<20x1xf32>
      %cst_19 = arith.constant 1.280000e+02 : f32
      %28 = vector.broadcast %cst_19 : f32 to vector<20x1xf32>
      %29 = arith.divf %27, %28 : vector<20x1xf32>
      %30 = vector.broadcast %22 : vector<20x1xf32> to vector<20x128xf32>
      %31 = arith.subf %18, %30 : vector<20x128xf32>
      %cst_20 = arith.constant 9.99999996E-13 : f32
      %32 = vector.broadcast %cst_20 : f32 to vector<20x1xf32>
      %33 = arith.addf %29, %32 : vector<20x1xf32>
      %34 = math.rsqrt %33 : vector<20x1xf32>
      %35 = vector.broadcast %34 : vector<20x1xf32> to vector<20x128xf32>
      %36 = arith.mulf %31, %35 : vector<20x128xf32>
      %c0_21 = arith.constant 0 : index
      %c0_22 = arith.constant 0 : index
      %37 = vector.load %arg6[%c0_21, %c0_22] : memref<1x128xf32, #tpu.memory_space<vmem>>, vector<1x128xf32>
      %38 = vector.broadcast %37 : vector<1x128xf32> to vector<20x128xf32>
      %39 = arith.mulf %36, %38 : vector<20x128xf32>
      %c0_23 = arith.constant 0 : index
      %c0_24 = arith.constant 0 : index
      %40 = vector.load %arg7[%c0_23, %c0_24] : memref<1x128xf32, #tpu.memory_space<vmem>>, vector<1x128xf32>
      %41 = vector.broadcast %40 : vector<1x128xf32> to vector<20x128xf32>
      %42 = arith.addf %39, %41 : vector<20x128xf32>
      %43 = arith.truncf %42 : vector<20x128xf32> to vector<20x128xbf16>
      %c0_25 = arith.constant 0 : index
      %c0_26 = arith.constant 0 : index
      %44 = vector.load %arg8[%c0_25, %c0_26] : memref<20x128xbf16, #tpu.memory_space<vmem>>, vector<20x128xbf16>
      tpu.vector_store %arg8[%c0_25, %c0_26], %43 {strides = array<i32>} : memref<20x128xbf16, #tpu.memory_space<vmem>>, vector<20x128xbf16>,
    } else {
    }
    return
  }
  func.func @transform_0(%arg0: i32, %arg1: i32) -> (i32, i32) {
    %c0_i32 = arith.constant 0 : i32
    return %arg0, %arg1 : i32, i32
  }
  func.func @transform_1(%arg0: i32, %arg1: i32) -> (i32, i32) {
    %c0_i32 = arith.constant 0 : i32
    %c0_i32_0 = arith.constant 0 : i32
    return %arg1, %c0_i32 : i32, i32
  }
  func.func @transform_2(%arg0: i32, %arg1: i32) -> (i32, i32) {
    %c0_i32 = arith.constant 0 : i32
    %c0_i32_0 = arith.constant 0 : i32
    %c0_i32_1 = arith.constant 0 : i32
    return %c0_i32, %c0_i32_0 : i32, i32
  }
  func.func @transform_3(%arg0: i32, %arg1: i32) -> (i32, i32) {
    %c0_i32 = arith.constant 0 : i32
    %c0_i32_0 = arith.constant 0 : i32
    return %arg0, %c0_i32 : i32, i32
  }
  func.func @transform_4(%arg0: i32, %arg1: i32) -> (i32, i32) {
    %c0_i32 = arith.constant 0 : i32
    %c0_i32_0 = arith.constant 0 : i32
    %c0_i32_1 = arith.constant 0 : i32
    return %c0_i32, %c0_i32_0 : i32, i32
  }
  func.func @transform_5(%arg0: i32, %arg1: i32) -> (i32, i32) {
    %c0_i32 = arith.constant 0 : i32
    %c0_i32_0 = arith.constant 0 : i32
    %c0_i32_1 = arith.constant 0 : i32
    return %c0_i32, %c0_i32_0 : i32, i32
  }
  func.func @transform_6(%arg0: i32, %arg1: i32) -> (i32, i32) {
    %c0_i32 = arith.constant 0 : i32
    %c0_i32_0 = arith.constant 0 : i32
    return %arg0, %c0_i32 : i32, i32
  }
}

module attributes {stable_mosaic.version = 11 : i64} {
  func.func @_attention_kernel_headblk(%arg0: i32, %arg1: i32, %arg2: memref<1x10x128xbf16, #tpu.memory_space<vmem>>, %arg3: memref<1x10x128xbf16, #tpu.memory_space<vmem>>, %arg4: memref<1x10x128xbf16, #tpu.memory_space<vmem>>, %arg5: memref<1x1x10xf32, #tpu.memory_space<vmem>>, %arg6: memref<1x10x128xbf16, #tpu.memory_space<vmem>>) attributes {dimension_semantics = [#tpu.dimension_semantics<parallel>, #tpu.dimension_semantics<parallel>], iteration_bounds = array<i64: 2, 1>, scalar_prefetch = 0 : i64, scratch_operands = 0 : i64, tpu.core_type = #tpu.core_type<tc>, window_params = [{transform_indices = @transform_0, window_bounds = array<i64: 1, 10, 128>}, {transform_indices = @transform_1, window_bounds = array<i64: 1, 10, 128>}, {transform_indices = @transform_2, window_bounds = array<i64: 1, 10, 128>}, {transform_indices = @transform_3, window_bounds = array<i64: 1, 1, 10>}, {transform_indices = @transform_4, window_bounds = array<i64: 1, 10, 128>}]} {
    %c0 = arith.constant 0 : index
    %c0_0 = arith.constant 0 : index
    %c0_1 = arith.constant 0 : index
    %0 = vector.load %arg5[%c0, %c0_0, %c0_1] : memref<1x1x10xf32, #tpu.memory_space<vmem>>, vector<1x1x10xf32>
    %1 = vector.shape_cast %0 : vector<1x1x10xf32> to vector<1x10xf32>
    %c0_2 = arith.constant 0 : index
    %c0_3 = arith.constant 0 : index
    %c0_4 = arith.constant 0 : index
    %2 = vector.load %arg2[%c0_2, %c0_3, %c0_4] : memref<1x10x128xbf16, #tpu.memory_space<vmem>>, vector<1x10x64xbf16>
    %3 = vector.shape_cast %2 : vector<1x10x64xbf16> to vector<10x64xbf16>
    %cst = arith.constant 1.250000e-01 : bf16
    %4 = vector.broadcast %cst : bf16 to vector<10x64xbf16>
    %5 = arith.mulf %3, %4 : vector<10x64xbf16>
    %c0_5 = arith.constant 0 : index
    %c0_6 = arith.constant 0 : index
    %c0_7 = arith.constant 0 : index
    %6 = vector.load %arg3[%c0_5, %c0_6, %c0_7] : memref<1x10x128xbf16, #tpu.memory_space<vmem>>, vector<1x10x64xbf16>
    %7 = vector.shape_cast %6 : vector<1x10x64xbf16> to vector<10x64xbf16>
    %c0_8 = arith.constant 0 : index
    %c0_9 = arith.constant 0 : index
    %c0_10 = arith.constant 0 : index
    %8 = vector.load %arg4[%c0_8, %c0_9, %c0_10] : memref<1x10x128xbf16, #tpu.memory_space<vmem>>, vector<1x10x64xbf16>
    %9 = vector.shape_cast %8 : vector<1x10x64xbf16> to vector<10x64xbf16>
    %cst_11 = arith.constant dense<0.000000e+00> : vector<10x10xf32>
    %10 = tpu.matmul %5, %7, %cst_11 {dimension_numbers = #tpu.dot_dimension_numbers<[1], [1], [0], [0], [0, 0, 1, 0], [], []>} : vector<10x64xbf16>, vector<10x64xbf16>, vector<10x10xf32> -> vector<10x10xf32>
    %11 = vector.broadcast %1 : vector<1x10xf32> to vector<10x10xf32>
    %12 = arith.addf %10, %11 : vector<10x10xf32>
    %cst_12 = arith.constant dense<0xFF800000> : vector<10xf32>
    %13 = vector.multi_reduction <maximumf>, %12, %cst_12 [1] : vector<10x10xf32> to vector<10xf32>
    %14 = vector.shape_cast %13 : vector<10xf32> to vector<10x1xf32>
    %15 = vector.broadcast %14 : vector<10x1xf32> to vector<10x10xf32>
    %16 = arith.subf %12, %15 : vector<10x10xf32>
    %17 = math.exp %16 : vector<10x10xf32>
    %cst_13 = arith.constant dense<0.000000e+00> : vector<10xf32>
    %18 = vector.multi_reduction <add>, %17, %cst_13 [1] : vector<10x10xf32> to vector<10xf32>
    %19 = vector.shape_cast %18 : vector<10xf32> to vector<10x1xf32>
    %20 = tpu.reciprocal %19 {approx = true} : vector<10x1xf32> -> vector<10x1xf32>
    %21 = vector.broadcast %20 : vector<10x1xf32> to vector<10x10xf32>
    %22 = arith.mulf %17, %21 : vector<10x10xf32>
    %23 = arith.truncf %22 : vector<10x10xf32> to vector<10x10xbf16>
    %cst_14 = arith.constant dense<0.000000e+00> : vector<10x64xf32>
    %24 = tpu.matmul %23, %9, %cst_14 {dimension_numbers = #tpu.dot_dimension_numbers<[1], [0], [0], [1], [0, 0, 1, 1], [], []>} : vector<10x10xbf16>, vector<10x64xbf16>, vector<10x64xf32> -> vector<10x64xf32>
    %25 = arith.truncf %24 : vector<10x64xf32> to vector<10x64xbf16>
    %c0_15 = arith.constant 0 : index
    %c0_16 = arith.constant 0 : index
    %c0_17 = arith.constant 0 : index
    %26 = vector.load %arg6[%c0_15, %c0_16, %c0_17] : memref<1x10x128xbf16, #tpu.memory_space<vmem>>, vector<1x10x64xbf16>
    %27 = vector.shape_cast %26 : vector<1x10x64xbf16> to vector<10x64xbf16>
    %28 = vector.shape_cast %25 : vector<10x64xbf16> to vector<1x10x64xbf16>
    tpu.vector_store %arg6[%c0_15, %c0_16, %c0_17], %28 {strides = array<i32>} : memref<1x10x128xbf16, #tpu.memory_space<vmem>>, vector<1x10x64xbf16>,
    %c0_18 = arith.constant 0 : index
    %c0_19 = arith.constant 0 : index
    %c64 = arith.constant 64 : index
    %29 = vector.load %arg2[%c0_18, %c0_19, %c64] : memref<1x10x128xbf16, #tpu.memory_space<vmem>>, vector<1x10x64xbf16>
    %30 = vector.shape_cast %29 : vector<1x10x64xbf16> to vector<10x64xbf16>
    %cst_20 = arith.constant 1.250000e-01 : bf16
    %31 = vector.broadcast %cst_20 : bf16 to vector<10x64xbf16>
    %32 = arith.mulf %30, %31 : vector<10x64xbf16>
    %c0_21 = arith.constant 0 : index
    %c0_22 = arith.constant 0 : index
    %c64_23 = arith.constant 64 : index
    %33 = vector.load %arg3[%c0_21, %c0_22, %c64_23] : memref<1x10x128xbf16, #tpu.memory_space<vmem>>, vector<1x10x64xbf16>
    %34 = vector.shape_cast %33 : vector<1x10x64xbf16> to vector<10x64xbf16>
    %c0_24 = arith.constant 0 : index
    %c0_25 = arith.constant 0 : index
    %c64_26 = arith.constant 64 : index
    %35 = vector.load %arg4[%c0_24, %c0_25, %c64_26] : memref<1x10x128xbf16, #tpu.memory_space<vmem>>, vector<1x10x64xbf16>
    %36 = vector.shape_cast %35 : vector<1x10x64xbf16> to vector<10x64xbf16>
    %cst_27 = arith.constant dense<0.000000e+00> : vector<10x10xf32>
    %37 = tpu.matmul %32, %34, %cst_27 {dimension_numbers = #tpu.dot_dimension_numbers<[1], [1], [0], [0], [0, 0, 1, 0], [], []>} : vector<10x64xbf16>, vector<10x64xbf16>, vector<10x10xf32> -> vector<10x10xf32>
    %38 = vector.broadcast %1 : vector<1x10xf32> to vector<10x10xf32>
    %39 = arith.addf %37, %38 : vector<10x10xf32>
    %cst_28 = arith.constant dense<0xFF800000> : vector<10xf32>
    %40 = vector.multi_reduction <maximumf>, %39, %cst_28 [1] : vector<10x10xf32> to vector<10xf32>
    %41 = vector.shape_cast %40 : vector<10xf32> to vector<10x1xf32>
    %42 = vector.broadcast %41 : vector<10x1xf32> to vector<10x10xf32>
    %43 = arith.subf %39, %42 : vector<10x10xf32>
    %44 = math.exp %43 : vector<10x10xf32>
    %cst_29 = arith.constant dense<0.000000e+00> : vector<10xf32>
    %45 = vector.multi_reduction <add>, %44, %cst_29 [1] : vector<10x10xf32> to vector<10xf32>
    %46 = vector.shape_cast %45 : vector<10xf32> to vector<10x1xf32>
    %47 = tpu.reciprocal %46 {approx = true} : vector<10x1xf32> -> vector<10x1xf32>
    %48 = vector.broadcast %47 : vector<10x1xf32> to vector<10x10xf32>
    %49 = arith.mulf %44, %48 : vector<10x10xf32>
    %50 = arith.truncf %49 : vector<10x10xf32> to vector<10x10xbf16>
    %cst_30 = arith.constant dense<0.000000e+00> : vector<10x64xf32>
    %51 = tpu.matmul %50, %36, %cst_30 {dimension_numbers = #tpu.dot_dimension_numbers<[1], [0], [0], [1], [0, 0, 1, 1], [], []>} : vector<10x10xbf16>, vector<10x64xbf16>, vector<10x64xf32> -> vector<10x64xf32>
    %52 = arith.truncf %51 : vector<10x64xf32> to vector<10x64xbf16>
    %c0_31 = arith.constant 0 : index
    %c0_32 = arith.constant 0 : index
    %c64_33 = arith.constant 64 : index
    %53 = vector.load %arg6[%c0_31, %c0_32, %c64_33] : memref<1x10x128xbf16, #tpu.memory_space<vmem>>, vector<1x10x64xbf16>
    %54 = vector.shape_cast %53 : vector<1x10x64xbf16> to vector<10x64xbf16>
    %55 = vector.shape_cast %52 : vector<10x64xbf16> to vector<1x10x64xbf16>
    tpu.vector_store %arg6[%c0_31, %c0_32, %c64_33], %55 {strides = array<i32>} : memref<1x10x128xbf16, #tpu.memory_space<vmem>>, vector<1x10x64xbf16>,
    return
  }
  func.func @transform_0(%arg0: i32, %arg1: i32) -> (i32, i32, i32) {
    %c0_i32 = arith.constant 0 : i32
    %0 = arith.addi %c0_i32, %arg1 : i32
    %c0_i32_0 = arith.constant 0 : i32
    %c0_i32_1 = arith.constant 0 : i32
    return %arg0, %c0_i32_0, %0 : i32, i32, i32
  }
  func.func @transform_1(%arg0: i32, %arg1: i32) -> (i32, i32, i32) {
    %c1_i32 = arith.constant 1 : i32
    %0 = arith.addi %c1_i32, %arg1 : i32
    %c0_i32 = arith.constant 0 : i32
    %c0_i32_0 = arith.constant 0 : i32
    return %arg0, %c0_i32, %0 : i32, i32, i32
  }
  func.func @transform_2(%arg0: i32, %arg1: i32) -> (i32, i32, i32) {
    %c2_i32 = arith.constant 2 : i32
    %0 = arith.addi %c2_i32, %arg1 : i32
    %c0_i32 = arith.constant 0 : i32
    %c0_i32_0 = arith.constant 0 : i32
    return %arg0, %c0_i32, %0 : i32, i32, i32
  }
  func.func @transform_3(%arg0: i32, %arg1: i32) -> (i32, i32, i32) {
    %c0_i32 = arith.constant 0 : i32
    %c0_i32_0 = arith.constant 0 : i32
    %c0_i32_1 = arith.constant 0 : i32
    return %arg0, %c0_i32, %c0_i32_0 : i32, i32, i32
  }
  func.func @transform_4(%arg0: i32, %arg1: i32) -> (i32, i32, i32) {
    %c0_i32 = arith.constant 0 : i32
    %c0_i32_0 = arith.constant 0 : i32
    return %arg0, %c0_i32, %arg1 : i32, i32, i32
  }
}

module attributes {stable_mosaic.version = 11 : i64} {
  func.func @_matmul_kernel(%arg0: i32, %arg1: i32, %arg2: i32, %arg3: memref<20x128xbf16, #tpu.memory_space<vmem>>, %arg4: memref<128x256xbf16, #tpu.memory_space<vmem>>, %arg5: memref<1x256xf32, #tpu.memory_space<vmem>>, %arg6: memref<20x256xbf16, #tpu.memory_space<vmem>>, %arg7: memref<20x256xf32, #tpu.memory_space<vmem>>) attributes {dimension_semantics = [#tpu.dimension_semantics<parallel>, #tpu.dimension_semantics<parallel>, #tpu.dimension_semantics<arbitrary>], iteration_bounds = array<i64: 1, 1, 1>, scalar_prefetch = 0 : i64, scratch_operands = 1 : i64, tpu.core_type = #tpu.core_type<tc>, window_params = [{transform_indices = @transform_0, window_bounds = array<i64: 20, 128>}, {transform_indices = @transform_1, window_bounds = array<i64: 128, 256>}, {transform_indices = @transform_2, window_bounds = array<i64: 1, 256>}, {transform_indices = @transform_3, window_bounds = array<i64: 20, 256>}]} {
    %c0_i32 = arith.constant 0 : i32
    %0 = arith.cmpi eq, %arg2, %c0_i32 : i32
    %1 = arith.extui %0 : i1 to i32
    %c0_i32_0 = arith.constant 0 : i32
    %2 = arith.cmpi ne, %1, %c0_i32_0 : i32
    scf.if %2 {
      %cst_10 = arith.constant 0.000000e+00 : f32
      %12 = vector.broadcast %cst_10 : f32 to vector<20x256xf32>
      %c0_11 = arith.constant 0 : index
      %c0_12 = arith.constant 0 : index
      %13 = vector.load %arg7[%c0_11, %c0_12] : memref<20x256xf32, #tpu.memory_space<vmem>>, vector<20x256xf32>
      tpu.vector_store %arg7[%c0_11, %c0_12], %12 {strides = array<i32>} : memref<20x256xf32, #tpu.memory_space<vmem>>, vector<20x256xf32>,
    } else {
    }
    %c0 = arith.constant 0 : index
    %c0_1 = arith.constant 0 : index
    %3 = vector.load %arg7[%c0, %c0_1] : memref<20x256xf32, #tpu.memory_space<vmem>>, vector<20x256xf32>
    %c0_2 = arith.constant 0 : index
    %c0_3 = arith.constant 0 : index
    %4 = vector.load %arg3[%c0_2, %c0_3] : memref<20x128xbf16, #tpu.memory_space<vmem>>, vector<20x128xbf16>
    %c0_4 = arith.constant 0 : index
    %c0_5 = arith.constant 0 : index
    %5 = vector.load %arg4[%c0_4, %c0_5] : memref<128x256xbf16, #tpu.memory_space<vmem>>, vector<128x256xbf16>
    %cst = arith.constant dense<0.000000e+00> : vector<20x256xf32>
    %6 = tpu.matmul %4, %5, %cst {dimension_numbers = #tpu.dot_dimension_numbers<[1], [0], [0], [1], [0, 0, 1, 1], [], []>} : vector<20x128xbf16>, vector<128x256xbf16>, vector<20x256xf32> -> vector<20x256xf32>
    %7 = arith.addf %3, %6 : vector<20x256xf32>
    %c0_6 = arith.constant 0 : index
    %c0_7 = arith.constant 0 : index
    %8 = vector.load %arg7[%c0_6, %c0_7] : memref<20x256xf32, #tpu.memory_space<vmem>>, vector<20x256xf32>
    tpu.vector_store %arg7[%c0_6, %c0_7], %7 {strides = array<i32>} : memref<20x256xf32, #tpu.memory_space<vmem>>, vector<20x256xf32>,
    %c0_i32_8 = arith.constant 0 : i32
    %9 = arith.cmpi eq, %arg2, %c0_i32_8 : i32
    %10 = arith.extui %9 : i1 to i32
    %c0_i32_9 = arith.constant 0 : i32
    %11 = arith.cmpi ne, %10, %c0_i32_9 : i32
    scf.if %11 {
      %c0_10 = arith.constant 0 : index
      %c0_11 = arith.constant 0 : index
      %12 = vector.load %arg7[%c0_10, %c0_11] : memref<20x256xf32, #tpu.memory_space<vmem>>, vector<20x256xf32>
      %c0_12 = arith.constant 0 : index
      %c0_13 = arith.constant 0 : index
      %13 = vector.load %arg5[%c0_12, %c0_13] : memref<1x256xf32, #tpu.memory_space<vmem>>, vector<1x256xf32>
      %14 = vector.broadcast %13 : vector<1x256xf32> to vector<20x256xf32>
      %15 = arith.addf %12, %14 : vector<20x256xf32>
      %16 = arith.mulf %15, %15 : vector<20x256xf32>
      %17 = arith.mulf %15, %16 : vector<20x256xf32>
      %cst_14 = arith.constant 4.471500e-02 : f32
      %18 = vector.broadcast %cst_14 : f32 to vector<20x256xf32>
      %19 = arith.mulf %18, %17 : vector<20x256xf32>
      %20 = arith.addf %15, %19 : vector<20x256xf32>
      %cst_15 = arith.constant 0.797884583 : f32
      %21 = vector.broadcast %cst_15 : f32 to vector<20x256xf32>
      %22 = arith.mulf %21, %20 : vector<20x256xf32>
      %23 = math.tanh %22 : vector<20x256xf32>
      %cst_16 = arith.constant 1.000000e+00 : f32
      %24 = vector.broadcast %cst_16 : f32 to vector<20x256xf32>
      %25 = arith.addf %24, %23 : vector<20x256xf32>
      %cst_17 = arith.constant 5.000000e-01 : f32
      %26 = vector.broadcast %cst_17 : f32 to vector<20x256xf32>
      %27 = arith.mulf %26, %25 : vector<20x256xf32>
      %28 = arith.mulf %15, %27 : vector<20x256xf32>
      %29 = arith.truncf %28 : vector<20x256xf32> to vector<20x256xbf16>
      %c0_18 = arith.constant 0 : index
      %c0_19 = arith.constant 0 : index
      %30 = vector.load %arg6[%c0_18, %c0_19] : memref<20x256xbf16, #tpu.memory_space<vmem>>, vector<20x256xbf16>
      tpu.vector_store %arg6[%c0_18, %c0_19], %29 {strides = array<i32>} : memref<20x256xbf16, #tpu.memory_space<vmem>>, vector<20x256xbf16>,
    } else {
    }
    return
  }
  func.func @transform_0(%arg0: i32, %arg1: i32, %arg2: i32) -> (i32, i32) {
    %c0_i32 = arith.constant 0 : i32
    return %arg0, %arg2 : i32, i32
  }
  func.func @transform_1(%arg0: i32, %arg1: i32, %arg2: i32) -> (i32, i32) {
    %c0_i32 = arith.constant 0 : i32
    return %arg2, %arg1 : i32, i32
  }
  func.func @transform_2(%arg0: i32, %arg1: i32, %arg2: i32) -> (i32, i32) {
    %c0_i32 = arith.constant 0 : i32
    %c0_i32_0 = arith.constant 0 : i32
    return %c0_i32, %arg1 : i32, i32
  }
  func.func @transform_3(%arg0: i32, %arg1: i32, %arg2: i32) -> (i32, i32) {
    %c0_i32 = arith.constant 0 : i32
    return %arg0, %arg1 : i32, i32
  }
}

module attributes {stable_mosaic.version = 11 : i64} {
  func.func @_matmul_res_ln_kernel(%arg0: i32, %arg1: i32, %arg2: memref<20x256xbf16, #tpu.memory_space<vmem>>, %arg3: memref<256x128xbf16, #tpu.memory_space<vmem>>, %arg4: memref<1x128xf32, #tpu.memory_space<vmem>>, %arg5: memref<20x128xbf16, #tpu.memory_space<vmem>>, %arg6: memref<1x128xf32, #tpu.memory_space<vmem>>, %arg7: memref<1x128xf32, #tpu.memory_space<vmem>>, %arg8: memref<20x128xbf16, #tpu.memory_space<vmem>>, %arg9: memref<20x128xf32, #tpu.memory_space<vmem>>) attributes {dimension_semantics = [#tpu.dimension_semantics<parallel>, #tpu.dimension_semantics<arbitrary>], iteration_bounds = array<i64: 1, 1>, scalar_prefetch = 0 : i64, scratch_operands = 1 : i64, tpu.core_type = #tpu.core_type<tc>, window_params = [{transform_indices = @transform_0, window_bounds = array<i64: 20, 256>}, {transform_indices = @transform_1, window_bounds = array<i64: 256, 128>}, {pipeline_mode = #tpu.pipeline_mode<synchronous>, transform_indices = @transform_2, window_bounds = array<i64: 1, 128>}, {transform_indices = @transform_3, window_bounds = array<i64: 20, 128>}, {pipeline_mode = #tpu.pipeline_mode<synchronous>, transform_indices = @transform_4, window_bounds = array<i64: 1, 128>}, {pipeline_mode = #tpu.pipeline_mode<synchronous>, transform_indices = @transform_5, window_bounds = array<i64: 1, 128>}, {transform_indices = @transform_6, window_bounds = array<i64: 20, 128>}]} {
    %c0_i32 = arith.constant 0 : i32
    %0 = arith.cmpi eq, %arg1, %c0_i32 : i32
    %1 = arith.extui %0 : i1 to i32
    %c0_i32_0 = arith.constant 0 : i32
    %2 = arith.cmpi ne, %1, %c0_i32_0 : i32
    scf.if %2 {
      %cst_10 = arith.constant 0.000000e+00 : f32
      %12 = vector.broadcast %cst_10 : f32 to vector<20x128xf32>
      %c0_11 = arith.constant 0 : index
      %c0_12 = arith.constant 0 : index
      %13 = vector.load %arg9[%c0_11, %c0_12] : memref<20x128xf32, #tpu.memory_space<vmem>>, vector<20x128xf32>
      tpu.vector_store %arg9[%c0_11, %c0_12], %12 {strides = array<i32>} : memref<20x128xf32, #tpu.memory_space<vmem>>, vector<20x128xf32>,
    } else {
    }
    %c0 = arith.constant 0 : index
    %c0_1 = arith.constant 0 : index
    %3 = vector.load %arg9[%c0, %c0_1] : memref<20x128xf32, #tpu.memory_space<vmem>>, vector<20x128xf32>
    %c0_2 = arith.constant 0 : index
    %c0_3 = arith.constant 0 : index
    %4 = vector.load %arg2[%c0_2, %c0_3] : memref<20x256xbf16, #tpu.memory_space<vmem>>, vector<20x256xbf16>
    %c0_4 = arith.constant 0 : index
    %c0_5 = arith.constant 0 : index
    %5 = vector.load %arg3[%c0_4, %c0_5] : memref<256x128xbf16, #tpu.memory_space<vmem>>, vector<256x128xbf16>
    %cst = arith.constant dense<0.000000e+00> : vector<20x128xf32>
    %6 = tpu.matmul %4, %5, %cst {dimension_numbers = #tpu.dot_dimension_numbers<[1], [0], [0], [1], [0, 0, 1, 1], [], []>} : vector<20x256xbf16>, vector<256x128xbf16>, vector<20x128xf32> -> vector<20x128xf32>
    %7 = arith.addf %3, %6 : vector<20x128xf32>
    %c0_6 = arith.constant 0 : index
    %c0_7 = arith.constant 0 : index
    %8 = vector.load %arg9[%c0_6, %c0_7] : memref<20x128xf32, #tpu.memory_space<vmem>>, vector<20x128xf32>
    tpu.vector_store %arg9[%c0_6, %c0_7], %7 {strides = array<i32>} : memref<20x128xf32, #tpu.memory_space<vmem>>, vector<20x128xf32>,
    %c0_i32_8 = arith.constant 0 : i32
    %9 = arith.cmpi eq, %arg1, %c0_i32_8 : i32
    %10 = arith.extui %9 : i1 to i32
    %c0_i32_9 = arith.constant 0 : i32
    %11 = arith.cmpi ne, %10, %c0_i32_9 : i32
    scf.if %11 {
      %c0_10 = arith.constant 0 : index
      %c0_11 = arith.constant 0 : index
      %12 = vector.load %arg9[%c0_10, %c0_11] : memref<20x128xf32, #tpu.memory_space<vmem>>, vector<20x128xf32>
      %c0_12 = arith.constant 0 : index
      %c0_13 = arith.constant 0 : index
      %13 = vector.load %arg4[%c0_12, %c0_13] : memref<1x128xf32, #tpu.memory_space<vmem>>, vector<1x128xf32>
      %14 = vector.broadcast %13 : vector<1x128xf32> to vector<20x128xf32>
      %15 = arith.addf %12, %14 : vector<20x128xf32>
      %c0_14 = arith.constant 0 : index
      %c0_15 = arith.constant 0 : index
      %16 = vector.load %arg5[%c0_14, %c0_15] : memref<20x128xbf16, #tpu.memory_space<vmem>>, vector<20x128xbf16>
      %17 = arith.extf %16 : vector<20x128xbf16> to vector<20x128xf32>
      %18 = arith.addf %15, %17 : vector<20x128xf32>
      %cst_16 = arith.constant dense<0.000000e+00> : vector<20xf32>
      %19 = vector.multi_reduction <add>, %18, %cst_16 [1] : vector<20x128xf32> to vector<20xf32>
      %20 = vector.shape_cast %19 : vector<20xf32> to vector<20x1xf32>
      %cst_17 = arith.constant 1.280000e+02 : f32
      %21 = vector.broadcast %cst_17 : f32 to vector<20x1xf32>
      %22 = arith.divf %20, %21 : vector<20x1xf32>
      %23 = vector.broadcast %22 : vector<20x1xf32> to vector<20x128xf32>
      %24 = arith.subf %18, %23 : vector<20x128xf32>
      %25 = arith.mulf %24, %24 : vector<20x128xf32>
      %cst_18 = arith.constant dense<0.000000e+00> : vector<20xf32>
      %26 = vector.multi_reduction <add>, %25, %cst_18 [1] : vector<20x128xf32> to vector<20xf32>
      %27 = vector.shape_cast %26 : vector<20xf32> to vector<20x1xf32>
      %cst_19 = arith.constant 1.280000e+02 : f32
      %28 = vector.broadcast %cst_19 : f32 to vector<20x1xf32>
      %29 = arith.divf %27, %28 : vector<20x1xf32>
      %30 = vector.broadcast %22 : vector<20x1xf32> to vector<20x128xf32>
      %31 = arith.subf %18, %30 : vector<20x128xf32>
      %cst_20 = arith.constant 9.99999996E-13 : f32
      %32 = vector.broadcast %cst_20 : f32 to vector<20x1xf32>
      %33 = arith.addf %29, %32 : vector<20x1xf32>
      %34 = math.rsqrt %33 : vector<20x1xf32>
      %35 = vector.broadcast %34 : vector<20x1xf32> to vector<20x128xf32>
      %36 = arith.mulf %31, %35 : vector<20x128xf32>
      %c0_21 = arith.constant 0 : index
      %c0_22 = arith.constant 0 : index
      %37 = vector.load %arg6[%c0_21, %c0_22] : memref<1x128xf32, #tpu.memory_space<vmem>>, vector<1x128xf32>
      %38 = vector.broadcast %37 : vector<1x128xf32> to vector<20x128xf32>
      %39 = arith.mulf %36, %38 : vector<20x128xf32>
      %c0_23 = arith.constant 0 : index
      %c0_24 = arith.constant 0 : index
      %40 = vector.load %arg7[%c0_23, %c0_24] : memref<1x128xf32, #tpu.memory_space<vmem>>, vector<1x128xf32>
      %41 = vector.broadcast %40 : vector<1x128xf32> to vector<20x128xf32>
      %42 = arith.addf %39, %41 : vector<20x128xf32>
      %43 = arith.truncf %42 : vector<20x128xf32> to vector<20x128xbf16>
      %c0_25 = arith.constant 0 : index
      %c0_26 = arith.constant 0 : index
      %44 = vector.load %arg8[%c0_25, %c0_26] : memref<20x128xbf16, #tpu.memory_space<vmem>>, vector<20x128xbf16>
      tpu.vector_store %arg8[%c0_25, %c0_26], %43 {strides = array<i32>} : memref<20x128xbf16, #tpu.memory_space<vmem>>, vector<20x128xbf16>,
    } else {
    }
    return
  }
  func.func @transform_0(%arg0: i32, %arg1: i32) -> (i32, i32) {
    %c0_i32 = arith.constant 0 : i32
    return %arg0, %arg1 : i32, i32
  }
  func.func @transform_1(%arg0: i32, %arg1: i32) -> (i32, i32) {
    %c0_i32 = arith.constant 0 : i32
    %c0_i32_0 = arith.constant 0 : i32
    return %arg1, %c0_i32 : i32, i32
  }
  func.func @transform_2(%arg0: i32, %arg1: i32) -> (i32, i32) {
    %c0_i32 = arith.constant 0 : i32
    %c0_i32_0 = arith.constant 0 : i32
    %c0_i32_1 = arith.constant 0 : i32
    return %c0_i32, %c0_i32_0 : i32, i32
  }
  func.func @transform_3(%arg0: i32, %arg1: i32) -> (i32, i32) {
    %c0_i32 = arith.constant 0 : i32
    %c0_i32_0 = arith.constant 0 : i32
    return %arg0, %c0_i32 : i32, i32
  }
  func.func @transform_4(%arg0: i32, %arg1: i32) -> (i32, i32) {
    %c0_i32 = arith.constant 0 : i32
    %c0_i32_0 = arith.constant 0 : i32
    %c0_i32_1 = arith.constant 0 : i32
    return %c0_i32, %c0_i32_0 : i32, i32
  }
  func.func @transform_5(%arg0: i32, %arg1: i32) -> (i32, i32) {
    %c0_i32 = arith.constant 0 : i32
    %c0_i32_0 = arith.constant 0 : i32
    %c0_i32_1 = arith.constant 0 : i32
    return %c0_i32, %c0_i32_0 : i32, i32
  }
  func.func @transform_6(%arg0: i32, %arg1: i32) -> (i32, i32) {
    %c0_i32 = arith.constant 0 : i32
    %c0_i32_0 = arith.constant 0 : i32
    return %arg0, %c0_i32 : i32, i32
  }
}

module attributes {stable_mosaic.version = 11 : i64} {
  func.func @_matmul_kernel(%arg0: i32, %arg1: i32, %arg2: i32, %arg3: memref<20x128xbf16, #tpu.memory_space<vmem>>, %arg4: memref<128x384xbf16, #tpu.memory_space<vmem>>, %arg5: memref<1x384xf32, #tpu.memory_space<vmem>>, %arg6: memref<20x384xbf16, #tpu.memory_space<vmem>>, %arg7: memref<20x384xf32, #tpu.memory_space<vmem>>) attributes {dimension_semantics = [#tpu.dimension_semantics<parallel>, #tpu.dimension_semantics<parallel>, #tpu.dimension_semantics<arbitrary>], iteration_bounds = array<i64: 1, 1, 1>, scalar_prefetch = 0 : i64, scratch_operands = 1 : i64, tpu.core_type = #tpu.core_type<tc>, window_params = [{transform_indices = @transform_0, window_bounds = array<i64: 20, 128>}, {transform_indices = @transform_1, window_bounds = array<i64: 128, 384>}, {transform_indices = @transform_2, window_bounds = array<i64: 1, 384>}, {transform_indices = @transform_3, window_bounds = array<i64: 20, 384>}]} {
    %c0_i32 = arith.constant 0 : i32
    %0 = arith.cmpi eq, %arg2, %c0_i32 : i32
    %1 = arith.extui %0 : i1 to i32
    %c0_i32_0 = arith.constant 0 : i32
    %2 = arith.cmpi ne, %1, %c0_i32_0 : i32
    scf.if %2 {
      %cst_10 = arith.constant 0.000000e+00 : f32
      %12 = vector.broadcast %cst_10 : f32 to vector<20x384xf32>
      %c0_11 = arith.constant 0 : index
      %c0_12 = arith.constant 0 : index
      %13 = vector.load %arg7[%c0_11, %c0_12] : memref<20x384xf32, #tpu.memory_space<vmem>>, vector<20x384xf32>
      tpu.vector_store %arg7[%c0_11, %c0_12], %12 {strides = array<i32>} : memref<20x384xf32, #tpu.memory_space<vmem>>, vector<20x384xf32>,
    } else {
    }
    %c0 = arith.constant 0 : index
    %c0_1 = arith.constant 0 : index
    %3 = vector.load %arg7[%c0, %c0_1] : memref<20x384xf32, #tpu.memory_space<vmem>>, vector<20x384xf32>
    %c0_2 = arith.constant 0 : index
    %c0_3 = arith.constant 0 : index
    %4 = vector.load %arg3[%c0_2, %c0_3] : memref<20x128xbf16, #tpu.memory_space<vmem>>, vector<20x128xbf16>
    %c0_4 = arith.constant 0 : index
    %c0_5 = arith.constant 0 : index
    %5 = vector.load %arg4[%c0_4, %c0_5] : memref<128x384xbf16, #tpu.memory_space<vmem>>, vector<128x384xbf16>
    %cst = arith.constant dense<0.000000e+00> : vector<20x384xf32>
    %6 = tpu.matmul %4, %5, %cst {dimension_numbers = #tpu.dot_dimension_numbers<[1], [0], [0], [1], [0, 0, 1, 1], [], []>} : vector<20x128xbf16>, vector<128x384xbf16>, vector<20x384xf32> -> vector<20x384xf32>
    %7 = arith.addf %3, %6 : vector<20x384xf32>
    %c0_6 = arith.constant 0 : index
    %c0_7 = arith.constant 0 : index
    %8 = vector.load %arg7[%c0_6, %c0_7] : memref<20x384xf32, #tpu.memory_space<vmem>>, vector<20x384xf32>
    tpu.vector_store %arg7[%c0_6, %c0_7], %7 {strides = array<i32>} : memref<20x384xf32, #tpu.memory_space<vmem>>, vector<20x384xf32>,
    %c0_i32_8 = arith.constant 0 : i32
    %9 = arith.cmpi eq, %arg2, %c0_i32_8 : i32
    %10 = arith.extui %9 : i1 to i32
    %c0_i32_9 = arith.constant 0 : i32
    %11 = arith.cmpi ne, %10, %c0_i32_9 : i32
    scf.if %11 {
      %c0_10 = arith.constant 0 : index
      %c0_11 = arith.constant 0 : index
      %12 = vector.load %arg7[%c0_10, %c0_11] : memref<20x384xf32, #tpu.memory_space<vmem>>, vector<20x384xf32>
      %c0_12 = arith.constant 0 : index
      %c0_13 = arith.constant 0 : index
      %13 = vector.load %arg5[%c0_12, %c0_13] : memref<1x384xf32, #tpu.memory_space<vmem>>, vector<1x384xf32>
      %14 = vector.broadcast %13 : vector<1x384xf32> to vector<20x384xf32>
      %15 = arith.addf %12, %14 : vector<20x384xf32>
      %16 = arith.truncf %15 : vector<20x384xf32> to vector<20x384xbf16>
      %c0_14 = arith.constant 0 : index
      %c0_15 = arith.constant 0 : index
      %17 = vector.load %arg6[%c0_14, %c0_15] : memref<20x384xbf16, #tpu.memory_space<vmem>>, vector<20x384xbf16>
      tpu.vector_store %arg6[%c0_14, %c0_15], %16 {strides = array<i32>} : memref<20x384xbf16, #tpu.memory_space<vmem>>, vector<20x384xbf16>,
    } else {
    }
    return
  }
  func.func @transform_0(%arg0: i32, %arg1: i32, %arg2: i32) -> (i32, i32) {
    %c0_i32 = arith.constant 0 : i32
    return %arg0, %arg2 : i32, i32
  }
  func.func @transform_1(%arg0: i32, %arg1: i32, %arg2: i32) -> (i32, i32) {
    %c0_i32 = arith.constant 0 : i32
    return %arg2, %arg1 : i32, i32
  }
  func.func @transform_2(%arg0: i32, %arg1: i32, %arg2: i32) -> (i32, i32) {
    %c0_i32 = arith.constant 0 : i32
    %c0_i32_0 = arith.constant 0 : i32
    return %c0_i32, %arg1 : i32, i32
  }
  func.func @transform_3(%arg0: i32, %arg1: i32, %arg2: i32) -> (i32, i32) {
    %c0_i32 = arith.constant 0 : i32
    return %arg0, %arg1 : i32, i32
  }
}

module attributes {stable_mosaic.version = 11 : i64} {
  func.func @_group_mean_kernel(%arg0: i32, %arg1: memref<1x1x10xi32, #tpu.memory_space<vmem>>, %arg2: memref<1x10x128xbf16, #tpu.memory_space<vmem>>, %arg3: memref<1x10x128xbf16, #tpu.memory_space<vmem>>, %arg4: memref<1x10x128xbf16, #tpu.memory_space<vmem>>, %arg5: memref<1x6x128xf32, #tpu.memory_space<vmem>>, %arg6: memref<1x6x128xf32, #tpu.memory_space<vmem>>, %arg7: memref<1x6x128xf32, #tpu.memory_space<vmem>>) attributes {dimension_semantics = [#tpu.dimension_semantics<parallel>], iteration_bounds = array<i64: 2>, scalar_prefetch = 0 : i64, scratch_operands = 0 : i64, tpu.core_type = #tpu.core_type<tc>, window_params = [{transform_indices = @transform_0, window_bounds = array<i64: 1, 1, 10>}, {transform_indices = @transform_1, window_bounds = array<i64: 1, 10, 128>}, {transform_indices = @transform_2, window_bounds = array<i64: 1, 10, 128>}, {transform_indices = @transform_3, window_bounds = array<i64: 1, 10, 128>}, {transform_indices = @transform_4, window_bounds = array<i64: 1, 6, 128>}, {transform_indices = @transform_5, window_bounds = array<i64: 1, 6, 128>}, {transform_indices = @transform_6, window_bounds = array<i64: 1, 6, 128>}]} {
    %c0 = arith.constant 0 : index
    %c0_0 = arith.constant 0 : index
    %c0_1 = arith.constant 0 : index
    %0 = vector.load %arg1[%c0, %c0_0, %c0_1] : memref<1x1x10xi32, #tpu.memory_space<vmem>>, vector<1x1x10xi32>
    %1 = vector.shape_cast %0 : vector<1x1x10xi32> to vector<1x10xi32>
    %2 = tpu.iota {dimensions = array<i32: 0>} : vector<6x10xi32>
    %3 = vector.broadcast %1 : vector<1x10xi32> to vector<6x10xi32>
    %4 = arith.cmpi eq, %2, %3 : vector<6x10xi32>
    %5 = arith.extui %4 : vector<6x10xi1> to vector<6x10xi32>
    %6 = arith.sitofp %5 : vector<6x10xi32> to vector<6x10xf32>
    %cst = arith.constant dense<0.000000e+00> : vector<6xf32>
    %7 = vector.multi_reduction <add>, %6, %cst [1] : vector<6x10xf32> to vector<6xf32>
    %8 = vector.shape_cast %7 : vector<6xf32> to vector<6x1xf32>
    %cst_2 = arith.constant 1.000000e+00 : f32
    %9 = vector.broadcast %cst_2 : f32 to vector<6x1xf32>
    %10 = arith.maximumf %8, %9 : vector<6x1xf32>
    %11 = arith.truncf %6 : vector<6x10xf32> to vector<6x10xbf16>
    %c0_3 = arith.constant 0 : index
    %c0_4 = arith.constant 0 : index
    %c0_5 = arith.constant 0 : index
    %12 = vector.load %arg2[%c0_3, %c0_4, %c0_5] : memref<1x10x128xbf16, #tpu.memory_space<vmem>>, vector<1x10x128xbf16>
    %13 = vector.shape_cast %12 : vector<1x10x128xbf16> to vector<10x128xbf16>
    %cst_6 = arith.constant dense<0.000000e+00> : vector<6x128xf32>
    %14 = tpu.matmul %11, %13, %cst_6 {dimension_numbers = #tpu.dot_dimension_numbers<[1], [0], [0], [1], [0, 0, 1, 1], [], []>} : vector<6x10xbf16>, vector<10x128xbf16>, vector<6x128xf32> -> vector<6x128xf32>
    %15 = vector.broadcast %10 : vector<6x1xf32> to vector<6x128xf32>
    %16 = arith.divf %14, %15 : vector<6x128xf32>
    %c0_7 = arith.constant 0 : index
    %c0_8 = arith.constant 0 : index
    %c0_9 = arith.constant 0 : index
    %17 = vector.load %arg5[%c0_7, %c0_8, %c0_9] : memref<1x6x128xf32, #tpu.memory_space<vmem>>, vector<1x6x128xf32>
    %18 = vector.shape_cast %17 : vector<1x6x128xf32> to vector<6x128xf32>
    %19 = vector.shape_cast %16 : vector<6x128xf32> to vector<1x6x128xf32>
    tpu.vector_store %arg5[%c0_7, %c0_8, %c0_9], %19 {strides = array<i32>} : memref<1x6x128xf32, #tpu.memory_space<vmem>>, vector<1x6x128xf32>,
    %c0_10 = arith.constant 0 : index
    %c0_11 = arith.constant 0 : index
    %c0_12 = arith.constant 0 : index
    %20 = vector.load %arg3[%c0_10, %c0_11, %c0_12] : memref<1x10x128xbf16, #tpu.memory_space<vmem>>, vector<1x10x128xbf16>
    %21 = vector.shape_cast %20 : vector<1x10x128xbf16> to vector<10x128xbf16>
    %cst_13 = arith.constant dense<0.000000e+00> : vector<6x128xf32>
    %22 = tpu.matmul %11, %21, %cst_13 {dimension_numbers = #tpu.dot_dimension_numbers<[1], [0], [0], [1], [0, 0, 1, 1], [], []>} : vector<6x10xbf16>, vector<10x128xbf16>, vector<6x128xf32> -> vector<6x128xf32>
    %23 = vector.broadcast %10 : vector<6x1xf32> to vector<6x128xf32>
    %24 = arith.divf %22, %23 : vector<6x128xf32>
    %c0_14 = arith.constant 0 : index
    %c0_15 = arith.constant 0 : index
    %c0_16 = arith.constant 0 : index
    %25 = vector.load %arg6[%c0_14, %c0_15, %c0_16] : memref<1x6x128xf32, #tpu.memory_space<vmem>>, vector<1x6x128xf32>
    %26 = vector.shape_cast %25 : vector<1x6x128xf32> to vector<6x128xf32>
    %27 = vector.shape_cast %24 : vector<6x128xf32> to vector<1x6x128xf32>
    tpu.vector_store %arg6[%c0_14, %c0_15, %c0_16], %27 {strides = array<i32>} : memref<1x6x128xf32, #tpu.memory_space<vmem>>, vector<1x6x128xf32>,
    %c0_17 = arith.constant 0 : index
    %c0_18 = arith.constant 0 : index
    %c0_19 = arith.constant 0 : index
    %28 = vector.load %arg4[%c0_17, %c0_18, %c0_19] : memref<1x10x128xbf16, #tpu.memory_space<vmem>>, vector<1x10x128xbf16>
    %29 = vector.shape_cast %28 : vector<1x10x128xbf16> to vector<10x128xbf16>
    %cst_20 = arith.constant dense<0.000000e+00> : vector<6x128xf32>
    %30 = tpu.matmul %11, %29, %cst_20 {dimension_numbers = #tpu.dot_dimension_numbers<[1], [0], [0], [1], [0, 0, 1, 1], [], []>} : vector<6x10xbf16>, vector<10x128xbf16>, vector<6x128xf32> -> vector<6x128xf32>
    %31 = vector.broadcast %10 : vector<6x1xf32> to vector<6x128xf32>
    %32 = arith.divf %30, %31 : vector<6x128xf32>
    %c0_21 = arith.constant 0 : index
    %c0_22 = arith.constant 0 : index
    %c0_23 = arith.constant 0 : index
    %33 = vector.load %arg7[%c0_21, %c0_22, %c0_23] : memref<1x6x128xf32, #tpu.memory_space<vmem>>, vector<1x6x128xf32>
    %34 = vector.shape_cast %33 : vector<1x6x128xf32> to vector<6x128xf32>
    %35 = vector.shape_cast %32 : vector<6x128xf32> to vector<1x6x128xf32>
    tpu.vector_store %arg7[%c0_21, %c0_22, %c0_23], %35 {strides = array<i32>} : memref<1x6x128xf32, #tpu.memory_space<vmem>>, vector<1x6x128xf32>,
    return
  }
  func.func @transform_0(%arg0: i32) -> (i32, i32, i32) {
    %c0_i32 = arith.constant 0 : i32
    %c0_i32_0 = arith.constant 0 : i32
    %c0_i32_1 = arith.constant 0 : i32
    return %arg0, %c0_i32, %c0_i32_0 : i32, i32, i32
  }
  func.func @transform_1(%arg0: i32) -> (i32, i32, i32) {
    %c0_i32 = arith.constant 0 : i32
    %c0_i32_0 = arith.constant 0 : i32
    %c0_i32_1 = arith.constant 0 : i32
    return %arg0, %c0_i32, %c0_i32_0 : i32, i32, i32
  }
  func.func @transform_2(%arg0: i32) -> (i32, i32, i32) {
    %c0_i32 = arith.constant 0 : i32
    %c0_i32_0 = arith.constant 0 : i32
    %c0_i32_1 = arith.constant 0 : i32
    return %arg0, %c0_i32, %c0_i32_0 : i32, i32, i32
  }
  func.func @transform_3(%arg0: i32) -> (i32, i32, i32) {
    %c0_i32 = arith.constant 0 : i32
    %c0_i32_0 = arith.constant 0 : i32
    %c0_i32_1 = arith.constant 0 : i32
    return %arg0, %c0_i32, %c0_i32_0 : i32, i32, i32
  }
  func.func @transform_4(%arg0: i32) -> (i32, i32, i32) {
    %c0_i32 = arith.constant 0 : i32
    %c0_i32_0 = arith.constant 0 : i32
    %c0_i32_1 = arith.constant 0 : i32
    return %arg0, %c0_i32, %c0_i32_0 : i32, i32, i32
  }
  func.func @transform_5(%arg0: i32) -> (i32, i32, i32) {
    %c0_i32 = arith.constant 0 : i32
    %c0_i32_0 = arith.constant 0 : i32
    %c0_i32_1 = arith.constant 0 : i32
    return %arg0, %c0_i32, %c0_i32_0 : i32, i32, i32
  }
  func.func @transform_6(%arg0: i32) -> (i32, i32, i32) {
    %c0_i32 = arith.constant 0 : i32
    %c0_i32_0 = arith.constant 0 : i32
    %c0_i32_1 = arith.constant 0 : i32
    return %arg0, %c0_i32, %c0_i32_0 : i32, i32, i32
  }
}

</mosaic_0001>

<llo_original>
// kernel: bert_like_embedder_forward.12
$region0: #{bert_like_embedder_forward.12}
  #allocation0 [shape = 'u32[]', space=smem, size = 0x4, offset = 0x4, fixed_abs, tag = 'smem constant byte address 0x4 - core index']
  #allocation1 [shape = 'u32[72,128]{1,0:T(1,128)}', space=vmem, size = 0x9000, scoped, tag = 'internal scratch']
  %s0 = inlined_call_operand.vmem [shape: f32[20,128], index: 0, kind: input, shape index: {}]
  %s1 = inlined_call_operand.vmem [shape: f32[1,128], index: 1, kind: input, shape index: {}]
  %s2 = inlined_call_operand.vmem [shape: f32[1,128], index: 2, kind: input, shape index: {}]
  %s3 = inlined_call_operand.vmem [shape: bf16[20,128], index: 3, kind: output, shape index: {}]
  %s4 = sld [smem:[#allocation0]]
  $region22: #{bert_like_embedder_forward.12} parent=0
    _
  %s6 = ssub.s32 1, %s4
  %s7 = scalar_select 0, %s6, %s4
  // Predicated region
  $region2: #{bert_like_embedder_forward.12} parent=0 // pred_check
    _
  $region3: #{bert_like_embedder_forward.12} parent=0 // pred_check_branch
    %9 = sbr.rel (0) target = $region5
  $region4: #{bert_like_embedder_forward.12} parent=0 // pred_region
    _
  $region5: #{bert_like_embedder_forward.12} parent=0 // pred_fallthru
    _
  // Predicated region
  $region6: #{bert_like_embedder_forward.12} parent=0 // pred_check
    _
  $region7: #{bert_like_embedder_forward.12} parent=0 // pred_check_branch
    %11 = sbr.rel (0) target = $region9
  $region8: #{bert_like_embedder_forward.12} parent=0 // pred_region
    _
  $region9: #{bert_like_embedder_forward.12} parent=0 // pred_fallthru
    _
  // Predicated region
  $region10: #{bert_like_embedder_forward.12} parent=0 // pred_check
    _
  $region11: #{bert_like_embedder_forward.12} parent=0 // pred_check_branch
    %13 = sbr.rel (0) target = $region13
  $region12: #{bert_like_embedder_forward.12} parent=0 // pred_region
    _
  $region13: #{bert_like_embedder_forward.12} parent=0 // pred_fallthru
    _
  %v14 = vld [vmem:[%s0] sm:$0xff]
  %v15 = vld [vmem:[%s0 + $0x8] sm:$0xff]
  %v16 = vld [vmem:[%s0 + $0x10] sm:$0xf]
  %17 = vadd.xlane.f32.xlu0 %v14
  %v18 = vpop.xlane.xlu0 %17
  %19 = vadd.xlane.f32.xlu0 %v15
  %v20 = vpop.xlane.xlu0 %19
  %vm21 = vcmask 1043456
  %v22 = vsel %vm21, %v16, 0.0
  %23 = vadd.xlane.f32.xlu0 %v22
  %v24 = vpop.xlane.xlu0 %23
  %v25 = vrcp.pop 128.0
  %v26 = vmul.f32 128.0, %v25
  %v27 = vsub.f32 1.0, %v26
  %v28 = vmul.f32 %v25, %v27
  %v29 = vadd.f32 %v25, %v28
  %vm30 = vweird.f32 %v25
  %v31 = vsel %vm30, %v25, %v29
  %v32 = vmul.f32 %v18, %v31
  %v33 = vmul.f32 %v20, %v31
  %v34 = vmul.f32 %v24, %v31
  %v35 = vsub.f32 %v14, %v32
  %v36 = vsub.f32 %v15, %v33
  %v37 = vsub.f32 %v16, %v34
  %v38 = vmul.f32 %v35, %v35
  %v39 = vmul.f32 %v36, %v36
  %v40 = vmul.f32 %v37, %v37
  %41 = vadd.xlane.f32.xlu0 %v38
  %v42 = vpop.xlane.xlu0 %41
  %43 = vadd.xlane.f32.xlu0 %v39
  %v44 = vpop.xlane.xlu0 %43
  %v45 = vsel %vm21, %v40, 0.0
  %46 = vadd.xlane.f32.xlu0 %v45
  %v47 = vpop.xlane.xlu0 %46
  %v48 = vmul.f32 %v42, %v31
  %v49 = vmul.f32 %v44, %v31
  %v50 = vmul.f32 %v47, %v31
  %v51 = vadd.f32 %v48, 1e-12
  %v52 = vadd.f32 %v49, 1e-12
  %v53 = vadd.f32 %v50, 1e-12
  %v54 = vrsqrt.pop %v51
  %v55 = vmul.f32 %v54, %v51
  %v56 = vmul.f32 %v55, %v54
  %v57 = vmul.f32 0.5, %v56
  %v58 = vsub.f32 1.5, %v57
  %v59 = vmul.f32 %v54, %v58
  %vm60 = vweird.f32 %v51
  %vm61 = vweird.f32 %v54
  %vm62 = vmor %vm60, %vm61
  %v63 = vsel %vm62, %v54, %v59
  %v64 = vrsqrt.pop %v52
  %v65 = vmul.f32 %v64, %v52
  %v66 = vmul.f32 %v65, %v64
  %v67 = vmul.f32 0.5, %v66
  %v68 = vsub.f32 1.5, %v67
  %v69 = vmul.f32 %v64, %v68
  %vm70 = vweird.f32 %v52
  %vm71 = vweird.f32 %v64
  %vm72 = vmor %vm70, %vm71
  %v73 = vsel %vm72, %v64, %v69
  %v74 = vrsqrt.pop %v53
  %v75 = vmul.f32 %v74, %v53
  %v76 = vmul.f32 %v75, %v74
  %v77 = vmul.f32 0.5, %v76
  %v78 = vsub.f32 1.5, %v77
  %v79 = vmul.f32 %v74, %v78
  %vm80 = vweird.f32 %v53
  %vm81 = vweird.f32 %v74
  %vm82 = vmor %vm80, %vm81
  %v83 = vsel %vm82, %v74, %v79
  %v84 = vmul.f32 %v35, %v63
  %v85 = vmul.f32 %v36, %v73
  %v86 = vmul.f32 %v37, %v83
  %v87 = vld [vmem:[%s1] sm:$0x1]
  %v89 = vperm.slane %v87, 0
  %v91 = vmul.f32 %v84, %v89
  %v92 = vmul.f32 %v85, %v89
  %v93 = vmul.f32 %v86, %v89
  %v94 = vld [vmem:[%s2] sm:$0x1]
  %v96 = vperm.slane %v94, 0
  %v98 = vadd.f32 %v91, %v96
  %v99 = vadd.f32 %v92, %v96
  %v100 = vadd.f32 %v93, %v96
  %v101 = vpack.c.bf16 %v98, %v98
  %v102 = vpack.c.bf16 %v99, %v99
  %v103 = vpack.c.bf16 %v100, %v100
  %104 = vst [vmem:[%s3] sm:$0xf] %v101
  %105 = vst [vmem:[%s3 + $0x4] sm:$0xf] %v102
  %106 = vst [vmem:[%s3 + $0x8] sm:$0x3] %v103
  // Predicated region
  $region14: #{bert_like_embedder_forward.12} parent=0 // pred_check
    _
  $region15: #{bert_like_embedder_forward.12} parent=0 // pred_check_branch
    %108 = sbr.rel (0) target = $region17
  $region16: #{bert_like_embedder_forward.12} parent=0 // pred_region
    _
  $region17: #{bert_like_embedder_forward.12} parent=0 // pred_fallthru
    _
  // Predicated region
  $region18: #{bert_like_embedder_forward.12} parent=0 // pred_check
    _
  $region19: #{bert_like_embedder_forward.12} parent=0 // pred_check_branch
    %110 = sbr.rel (0) target = $region21
  $region20: #{bert_like_embedder_forward.12} parent=0 // pred_region
    _
  $region21: #{bert_like_embedder_forward.12} parent=0 // pred_fallthru
    _

// kernel: bert_like_embedder_forward.13
$region0: #{bert_like_embedder_forward.13}
  #allocation0 [shape = 'u32[]', space=smem, size = 0x4, offset = 0x4, fixed_abs, tag = 'smem constant byte address 0x4 - core index']
  #allocation1 [shape = 'u32[72,128]{1,0:T(1,128)}', space=vmem, size = 0x9000, scoped, tag = 'internal scratch']
  #allocation2 [shape = 'f32[20,384]{1,0:T(8,128)}', space=vmem, size = 0x9000, scoped, tag = 'scratch operand']
  %s0 = inlined_call_operand.vmem [shape: bf16[20,128], index: 0, kind: input, shape index: {}]
  %s1 = inlined_call_operand.vmem [shape: bf16[128,384], index: 1, kind: input, shape index: {}]
  %s2 = inlined_call_operand.vmem [shape: f32[1,384], index: 2, kind: input, shape index: {}]
  %s3 = inlined_call_operand.vmem [shape: bf16[20,384], index: 3, kind: output, shape index: {}]
  %s4 = sld [smem:[#allocation0]]
  $region30: #{bert_like_embedder_forward.13} parent=0
    _
  %s6 = ssub.s32 1, %s4
  %s7 = scalar_select 0, %s6, %s4
  // Predicated region
  $region2: #{bert_like_embedder_forward.13} parent=0 // pred_check
    _
  $region3: #{bert_like_embedder_forward.13} parent=0 // pred_check_branch
    %9 = sbr.rel (0) target = $region5
  $region4: #{bert_like_embedder_forward.13} parent=0 // pred_region
    _
  $region5: #{bert_like_embedder_forward.13} parent=0 // pred_fallthru
    _
  // Predicated region
  $region6: #{bert_like_embedder_forward.13} parent=0 // pred_check
    _
  $region7: #{bert_like_embedder_forward.13} parent=0 // pred_check_branch
    %11 = sbr.rel (0) target = $region9
  $region8: #{bert_like_embedder_forward.13} parent=0 // pred_region
    _
  $region9: #{bert_like_embedder_forward.13} parent=0 // pred_fallthru
    _
  // Predicated region
  $region10: #{bert_like_embedder_forward.13} parent=0 // pred_check
    _
  $region11: #{bert_like_embedder_forward.13} parent=0 // pred_check_branch
    %13 = sbr.rel (0) target = $region13
  $region12: #{bert_like_embedder_forward.13} parent=0 // pred_region
    _
  $region13: #{bert_like_embedder_forward.13} parent=0 // pred_fallthru
    _
  %p14 = scmp.eq.s32.totalorder 0, 0
  // Predicated region
  $region14: #{bert_like_embedder_forward.13} parent=0 // pred_check
    %p15 = pneg %p14
  $region15: #{bert_like_embedder_forward.13} parent=0 // pred_check_branch
    %17 = sbr.rel (%p15) target = $region17
  $region16: #{bert_like_embedder_forward.13} parent=0 // pred_region
    %18 = vst [vmem:[#allocation2] sm:$0xff] 0.0
    %19 = vst [vmem:[#allocation2 + $0x8] sm:$0xff] 0.0
    %20 = vst [vmem:[#allocation2 + $0x10] sm:$0xff] 0.0
    %21 = vst [vmem:[#allocation2 + $0x18] sm:$0xff] 0.0
    %22 = vst [vmem:[#allocation2 + $0x20] sm:$0xff] 0.0
    %23 = vst [vmem:[#allocation2 + $0x28] sm:$0xff] 0.0
    %24 = vst [vmem:[#allocation2 + $0x30] sm:$0xf] 0.0
    %25 = vst [vmem:[#allocation2 + $0x38] sm:$0xf] 0.0
    %26 = vst [vmem:[#allocation2 + $0x40] sm:$0xf] 0.0
  $region17: #{bert_like_embedder_forward.13} parent=0 // pred_fallthru
    _
  %v27 = vld [vmem:[#allocation2] sm:$0xff]
  %v28 = vld [vmem:[#allocation2 + $0x8] sm:$0xff]
  %v29 = vld [vmem:[#allocation2 + $0x10] sm:$0xff]
  %v30 = vld [vmem:[#allocation2 + $0x18] sm:$0xff]
  %v31 = vld [vmem:[#allocation2 + $0x20] sm:$0xff]
  %v32 = vld [vmem:[#allocation2 + $0x28] sm:$0xff]
  %v33 = vld [vmem:[#allocation2 + $0x30] sm:$0xf]
  %v34 = vld [vmem:[#allocation2 + $0x38] sm:$0xf]
  %v35 = vld [vmem:[#allocation2 + $0x40] sm:$0xf]
  %v36 = vld [vmem:[%s0] sm:$0xf]
  %v37 = vld [vmem:[%s0 + $0x4] sm:$0xf]
  %v38 = vld [vmem:[%s0 + $0x8] sm:$0x3]
  %v39 = vld [vmem:[%s1] sm:$0xff]
  %v40 = vld [vmem:[%s1 + $0x8] sm:$0xf]
  %v41 = vld [vmem:[%s1 + $0xc] sm:$0xff]
  %v42 = vld [vmem:[%s1 + $0x14] sm:$0xf]
  %v43 = vld [vmem:[%s1 + $0x18] sm:$0xff]
  %v44 = vld [vmem:[%s1 + $0x20] sm:$0xf]
  %v45 = vld [vmem:[%s1 + $0x24] sm:$0xff]
  %v46 = vld [vmem:[%s1 + $0x2c] sm:$0xf]
  %v47 = vld [vmem:[%s1 + $0x30] sm:$0xff]
  %v48 = vld [vmem:[%s1 + $0x38] sm:$0xf]
  %v49 = vld [vmem:[%s1 + $0x3c] sm:$0xff]
  %v50 = vld [vmem:[%s1 + $0x44] sm:$0xf]
  %v51 = vld [vmem:[%s1 + $0x48] sm:$0xff]
  %v52 = vld [vmem:[%s1 + $0x50] sm:$0xf]
  %v53 = vld [vmem:[%s1 + $0x54] sm:$0xff]
  %v54 = vld [vmem:[%s1 + $0x5c] sm:$0xf]
  %v55 = vld [vmem:[%s1 + $0x60] sm:$0xff]
  %v56 = vld [vmem:[%s1 + $0x68] sm:$0xf]
  %v57 = vld [vmem:[%s1 + $0x6c] sm:$0xff]
  %v58 = vld [vmem:[%s1 + $0x74] sm:$0xf]
  %v59 = vld [vmem:[%s1 + $0x78] sm:$0xff]
  %v60 = vld [vmem:[%s1 + $0x80] sm:$0xf]
  %v61 = vld [vmem:[%s1 + $0x84] sm:$0xff]
  %v62 = vld [vmem:[%s1 + $0x8c] sm:$0xf]
  %v63 = vld [vmem:[%s1 + $0x90] sm:$0xff]
  %v64 = vld [vmem:[%s1 + $0x98] sm:$0xf]
  %v65 = vld [vmem:[%s1 + $0x9c] sm:$0xff]
  %v66 = vld [vmem:[%s1 + $0xa4] sm:$0xf]
  %v67 = vld [vmem:[%s1 + $0xa8] sm:$0xff]
  %v68 = vld [vmem:[%s1 + $0xb0] sm:$0xf]
  %v69 = vld [vmem:[%s1 + $0xb4] sm:$0xff]
  %v70 = vld [vmem:[%s1 + $0xbc] sm:$0xf]
  %v74 = vunpack.c.l.b16 %v36
  %v75 = vunpack.c.l.b16 %v37
  %v76 = vunpack.c.l.b16 %v38
  %v77 = vpack.c.b16 %v75, %v74
  %v78 = vpack.c.b16 %v76, %v76
  %v113 = vunpack.c.l.b16 %v39
  %v114 = vunpack.c.h.b16 %v39
  %v115 = vunpack.c.l.b16 %v40
  %v116 = vunpack.c.l.b16 %v41
  %v117 = vunpack.c.h.b16 %v41
  %v118 = vunpack.c.l.b16 %v42
  %v119 = vunpack.c.l.b16 %v43
  %v120 = vunpack.c.h.b16 %v43
  %v121 = vunpack.c.l.b16 %v44
  %v122 = vunpack.c.l.b16 %v45
  %v123 = vunpack.c.h.b16 %v45
  %v124 = vunpack.c.l.b16 %v46
  %v125 = vunpack.c.l.b16 %v47
  %v126 = vunpack.c.h.b16 %v47
  %v127 = vunpack.c.l.b16 %v48
  %v128 = vunpack.c.l.b16 %v49
  %v129 = vunpack.c.h.b16 %v49
  %v130 = vunpack.c.l.b16 %v50
  %v131 = vunpack.c.l.b16 %v51
  %v132 = vunpack.c.h.b16 %v51
  %v133 = vunpack.c.l.b16 %v52
  %v134 = vunpack.c.l.b16 %v53
  %v135 = vunpack.c.h.b16 %v53
  %v136 = vunpack.c.l.b16 %v54
  %v137 = vunpack.c.l.b16 %v55
  %v138 = vunpack.c.h.b16 %v55
  %v139 = vunpack.c.l.b16 %v56
  %v140 = vunpack.c.l.b16 %v57
  %v141 = vunpack.c.h.b16 %v57
  %v142 = vunpack.c.l.b16 %v58
  %v143 = vunpack.c.l.b16 %v59
  %v144 = vunpack.c.h.b16 %v59
  %v145 = vunpack.c.l.b16 %v60
  %v146 = vunpack.c.l.b16 %v61
  %v147 = vunpack.c.h.b16 %v61
  %v148 = vunpack.c.l.b16 %v62
  %v149 = vunpack.c.l.b16 %v63
  %v150 = vunpack.c.h.b16 %v63
  %v151 = vunpack.c.l.b16 %v64
  %v152 = vunpack.c.l.b16 %v65
  %v153 = vunpack.c.h.b16 %v65
  %v154 = vunpack.c.l.b16 %v66
  %v155 = vunpack.c.l.b16 %v67
  %v156 = vunpack.c.h.b16 %v67
  %v157 = vunpack.c.l.b16 %v68
  %v158 = vunpack.c.l.b16 %v69
  %v159 = vunpack.c.h.b16 %v69
  %v160 = vunpack.c.l.b16 %v70
  %v161 = vpack.c.b16 %v116, %v113
  %v162 = vpack.c.b16 %v117, %v114
  %v163 = vpack.c.b16 %v118, %v115
  %v164 = vpack.c.b16 %v122, %v119
  %v165 = vpack.c.b16 %v123, %v120
  %v166 = vpack.c.b16 %v124, %v121
  %v167 = vpack.c.b16 %v128, %v125
  %v168 = vpack.c.b16 %v129, %v126
  %v169 = vpack.c.b16 %v130, %v127
  %v170 = vpack.c.b16 %v134, %v131
  %v171 = vpack.c.b16 %v135, %v132
  %v172 = vpack.c.b16 %v136, %v133
  %v173 = vpack.c.b16 %v140, %v137
  %v174 = vpack.c.b16 %v141, %v138
  %v175 = vpack.c.b16 %v142, %v139
  %v176 = vpack.c.b16 %v146, %v143
  %v177 = vpack.c.b16 %v147, %v144
  %v178 = vpack.c.b16 %v148, %v145
  %v179 = vpack.c.b16 %v152, %v149
  %v180 = vpack.c.b16 %v153, %v150
  %v181 = vpack.c.b16 %v154, %v151
  %v182 = vpack.c.b16 %v158, %v155
  %v183 = vpack.c.b16 %v159, %v156
  %v184 = vpack.c.b16 %v160, %v157
  %209 = vmatpush.bf16.msra.mxu0 %v182
  %210 = vmatpush.bf16.msra.mxu0 %v179
  %211 = vmatpush.bf16.msra.mxu0 %v176
  %212 = vmatpush.bf16.msra.mxu0 %v173
  %213 = vmatpush.bf16.msra.mxu0 %v170
  %214 = vmatpush.bf16.msra.mxu0 %v167
  %215 = vmatpush.bf16.msra.mxu0 %v164
  %216 = vmatpush.bf16.msra.mxu0 %v161
  %217 = vmatmul.bf16.gmra.mxu0 %v77
  %v218 = vpop.f32.mrf.mxu0
  %v219 = vadd.f32 0.0, %v218
  %v220 = vpop.f32.mrf.mxu0
  %v221 = vadd.f32 0.0, %v220
  %222 = vmatmul.bf16.gmra.mxu0 %v78
  %v223 = vpop.f32.mrf.mxu0
  %v224 = vadd.f32 0.0, %v223
  %v225 = vpop.f32.mrf.mxu0
  %226 = vdwg.mxu0
  %227 = vmatpush.bf16.msra.mxu0 %v183
  %228 = vmatpush.bf16.msra.mxu0 %v180
  %229 = vmatpush.bf16.msra.mxu0 %v177
  %230 = vmatpush.bf16.msra.mxu0 %v174
  %231 = vmatpush.bf16.msra.mxu0 %v171
  %232 = vmatpush.bf16.msra.mxu0 %v168
  %233 = vmatpush.bf16.msra.mxu0 %v165
  %234 = vmatpush.bf16.msra.mxu0 %v162
  %235 = vmatmul.bf16.gmra.mxu0 %v77
  %v236 = vpop.f32.mrf.mxu0
  %v237 = vadd.f32 0.0, %v236
  %v238 = vpop.f32.mrf.mxu0
  %v239 = vadd.f32 0.0, %v238
  %240 = vmatmul.bf16.gmra.mxu0 %v78
  %v241 = vpop.f32.mrf.mxu0
  %v242 = vadd.f32 0.0, %v241
  %v243 = vpop.f32.mrf.mxu0
  %244 = vdwg.mxu0
  %245 = vmatpush.bf16.msra.mxu0 %v184
  %246 = vmatpush.bf16.msra.mxu0 %v181
  %247 = vmatpush.bf16.msra.mxu0 %v178
  %248 = vmatpush.bf16.msra.mxu0 %v175
  %249 = vmatpush.bf16.msra.mxu0 %v172
  %250 = vmatpush.bf16.msra.mxu0 %v169
  %251 = vmatpush.bf16.msra.mxu0 %v166
  %252 = vmatpush.bf16.msra.mxu0 %v163
  %253 = vmatmul.bf16.gmra.mxu0 %v77
  %v254 = vpop.f32.mrf.mxu0
  %v255 = vadd.f32 0.0, %v254
  %v256 = vpop.f32.mrf.mxu0
  %v257 = vadd.f32 0.0, %v256
  %258 = vmatmul.bf16.gmra.mxu0 %v78
  %v259 = vpop.f32.mrf.mxu0
  %v260 = vadd.f32 0.0, %v259
  %v261 = vpop.f32.mrf.mxu0
  %262 = vdwg.mxu0
  %v263 = vadd.f32 %v27, %v219
  %v264 = vadd.f32 %v28, %v237
  %v265 = vadd.f32 %v29, %v255
  %v266 = vadd.f32 %v30, %v221
  %v267 = vadd.f32 %v31, %v239
  %v268 = vadd.f32 %v32, %v257
  %v269 = vadd.f32 %v33, %v224
  %v270 = vadd.f32 %v34, %v242
  %v271 = vadd.f32 %v35, %v260
  %272 = vst [vmem:[#allocation2] sm:$0xff] %v263
  %273 = vst [vmem:[#allocation2 + $0x8] sm:$0xff] %v264
  %274 = vst [vmem:[#allocation2 + $0x10] sm:$0xff] %v265
  %275 = vst [vmem:[#allocation2 + $0x18] sm:$0xff] %v266
  %276 = vst [vmem:[#allocation2 + $0x20] sm:$0xff] %v267
  %277 = vst [vmem:[#allocation2 + $0x28] sm:$0xff] %v268
  %278 = vst [vmem:[#allocation2 + $0x30] sm:$0xf] %v269
  %279 = vst [vmem:[#allocation2 + $0x38] sm:$0xf] %v270
  %280 = vst [vmem:[#allocation2 + $0x40] sm:$0xf] %v271
  // Predicated region
  $region18: #{bert_like_embedder_forward.13} parent=0 // pred_check
    %p281 = pneg %p14
  $region19: #{bert_like_embedder_forward.13} parent=0 // pred_check_branch
    %283 = sbr.rel (%p281) target = $region21
  $region20: #{bert_like_embedder_forward.13} parent=0 // pred_region
    %v284 = vld [vmem:[#allocation2] sm:$0xff]
    %v285 = vld [vmem:[#allocation2 + $0x8] sm:$0xff]
    %v286 = vld [vmem:[#allocation2 + $0x10] sm:$0xff]
    %v287 = vld [vmem:[#allocation2 + $0x18] sm:$0xff]
    %v288 = vld [vmem:[#allocation2 + $0x20] sm:$0xff]
    %v289 = vld [vmem:[#allocation2 + $0x28] sm:$0xff]
    %v290 = vld [vmem:[#allocation2 + $0x30] sm:$0xf]
    %v291 = vld [vmem:[#allocation2 + $0x38] sm:$0xf]
    %v292 = vld [vmem:[#allocation2 + $0x40] sm:$0xf]
    %v293 = vld [vmem:[%s2] sm:$0x7]
    %v295 = vperm.slane %v293, 0
    %v296 = vperm.slane %v293, 1
    %v297 = vperm.slane %v293, 2
    %v301 = vadd.f32 %v284, %v295
    %v302 = vadd.f32 %v285, %v296
    %v303 = vadd.f32 %v286, %v297
    %v304 = vadd.f32 %v287, %v295
    %v305 = vadd.f32 %v288, %v296
    %v306 = vadd.f32 %v289, %v297
    %v307 = vadd.f32 %v290, %v295
    %v308 = vadd.f32 %v291, %v296
    %v309 = vadd.f32 %v292, %v297
    %v310 = vpack.c.bf16 %v302, %v301
    %v311 = vpack.c.bf16 %v303, %v303
    %v312 = vpack.c.bf16 %v305, %v304
    %v313 = vpack.c.bf16 %v306, %v306
    %v314 = vpack.c.bf16 %v308, %v307
    %v315 = vpack.c.bf16 %v309, %v309
    %316 = vst [vmem:[%s3] sm:$0xff] %v310
    %317 = vst [vmem:[%s3 + $0x8] sm:$0xf] %v311
    %318 = vst [vmem:[%s3 + $0xc] sm:$0xff] %v312
    %319 = vst [vmem:[%s3 + $0x14] sm:$0xf] %v313
    %320 = vst [vmem:[%s3 + $0x18] sm:$0x33] %v314
    %321 = vst [vmem:[%s3 + $0x20] sm:$0x3] %v315
  $region21: #{bert_like_embedder_forward.13} parent=0 // pred_fallthru
    _
  // Predicated region
  $region22: #{bert_like_embedder_forward.13} parent=0 // pred_check
    _
  $region23: #{bert_like_embedder_forward.13} parent=0 // pred_check_branch
    %323 = sbr.rel (0) target = $region25
  $region24: #{bert_like_embedder_forward.13} parent=0 // pred_region
    _
  $region25: #{bert_like_embedder_forward.13} parent=0 // pred_fallthru
    _
  // Predicated region
  $region26: #{bert_like_embedder_forward.13} parent=0 // pred_check
    _
  $region27: #{bert_like_embedder_forward.13} parent=0 // pred_check_branch
    %325 = sbr.rel (0) target = $region29
  $region28: #{bert_like_embedder_forward.13} parent=0 // pred_region
    _
  $region29: #{bert_like_embedder_forward.13} parent=0 // pred_fallthru
    _

// kernel: bert_like_embedder_forward.15
$region0: #{bert_like_embedder_forward.15}
  #allocation0 [shape = 'u32[]', space=smem, size = 0x4, offset = 0x4, fixed_abs, tag = 'smem constant byte address 0x4 - core index']
  #allocation1 [shape = 'u32[72,128]{1,0:T(1,128)}', space=vmem, size = 0x9000, scoped, tag = 'internal scratch']
  #allocation2 [shape = 'f32[20,128]{1,0:T(8,128)}', space=vmem, size = 0x3000, scoped, tag = 'scratch operand']
  %s0 = inlined_call_operand.vmem [shape: bf16[20,128], index: 0, kind: input, shape index: {}]
  %s1 = inlined_call_operand.hbm [shape: bf16[128,128], index: 1, kind: input, shape index: {}]
  %s2 = inlined_call_operand.vmem [shape: f32[1,128], index: 2, kind: input, shape index: {}]
  %s3 = inlined_call_operand.vmem [shape: bf16[20,128], index: 3, kind: input, shape index: {}]
  %s4 = inlined_call_operand.vmem [shape: f32[1,128], index: 4, kind: input, shape index: {}]
  %s5 = inlined_call_operand.vmem [shape: f32[1,128], index: 5, kind: input, shape index: {}]
  %s6 = inlined_call_operand.vmem [shape: bf16[20,128], index: 6, kind: output, shape index: {}]
  %s7 = sld [smem:[#allocation0]]
  $region46: #{bert_like_embedder_forward.15} parent=0
    _
  %s9 = ssub.s32 1, %s7
  %s10 = scalar_select 0, %s9, %s7
  $region1: #{bert_like_embedder_forward.15} parent=0
    #allocation3 [shape = 'u8[32768]{0}', space=vmem, size = 0x8000, scoped, tag = 'input window, operand 1, single buffered']
    #allocation4 [shape = 's32[1]{0}', space=sflag, size = 0x4, scoped, tag = 'scoped memory for bert_like_embedder_forward.15']
    %11 = vsyncpa [#allocation4], 0
    // Predicated region
    $region2: #{bert_like_embedder_forward.15} parent=1 // pred_check
      _
    $region3: #{bert_like_embedder_forward.15} parent=1 // pred_check_branch
      %13 = sbr.rel (0) target = $region5
    $region4: #{bert_like_embedder_forward.15} parent=1 // pred_region
      _
    $region5: #{bert_like_embedder_forward.15} parent=1 // pred_fallthru
      _
    // Predicated region
    $region6: #{bert_like_embedder_forward.15} parent=1 // pred_check
      _
    $region7: #{bert_like_embedder_forward.15} parent=1 // pred_check_branch
      %15 = sbr.rel (0) target = $region9
    $region8: #{bert_like_embedder_forward.15} parent=1 // pred_region
      %17 = vsyncadd [#allocation4], 0
      %s18 = sshll.u32 %s1, 4
      %s19 = int_to_ptr.hbm [resolvable:$true] %s18
      %s20 = sshll.u32 [#allocation3], 4
      %s21 = int_to_ptr.vmem [resolvable:$true] %s20
      %26 = dma.hbm_to_vmem [thread:$0]  %s19, 1024, %s21, [#allocation4], 64, 64, 4
    $region9: #{bert_like_embedder_forward.15} parent=1 // pred_fallthru
      _
    // Predicated region
    $region10: #{bert_like_embedder_forward.15} parent=1 // pred_check
      _
    $region11: #{bert_like_embedder_forward.15} parent=1 // pred_check_branch
      %28 = sbr.rel (0) target = $region13
    $region12: #{bert_like_embedder_forward.15} parent=1 // pred_region
      _
    $region13: #{bert_like_embedder_forward.15} parent=1 // pred_fallthru
      _
    // Predicated region
    $region14: #{bert_like_embedder_forward.15} parent=1 // pred_check
      _
    $region15: #{bert_like_embedder_forward.15} parent=1 // pred_check_branch
      %30 = sbr.rel (0) target = $region17
    $region16: #{bert_like_embedder_forward.15} parent=1 // pred_region
      _
    $region17: #{bert_like_embedder_forward.15} parent=1 // pred_fallthru
      _
    // Predicated region
    $region18: #{bert_like_embedder_forward.15} parent=1 // pred_check
      _
    $region19: #{bert_like_embedder_forward.15} parent=1 // pred_check_branch
      %32 = sbr.rel (0) target = $region21
    $region20: #{bert_like_embedder_forward.15} parent=1 // pred_region
      _
    $region21: #{bert_like_embedder_forward.15} parent=1 // pred_fallthru
      _
    // Predicated region
    $region22: #{bert_like_embedder_forward.15} parent=1 // pred_check
      _
    $region23: #{bert_like_embedder_forward.15} parent=1 // pred_check_branch
      %34 = sbr.rel (0) target = $region25
    $region24: #{bert_like_embedder_forward.15} parent=1 // pred_region
      _
    $region25: #{bert_like_embedder_forward.15} parent=1 // pred_fallthru
      _
    // Predicated region
    $region26: #{bert_like_embedder_forward.15} parent=1 // pred_check
      _
    $region27: #{bert_like_embedder_forward.15} parent=1 // pred_check_branch
      %36 = sbr.rel (0) target = $region29
    $region28: #{bert_like_embedder_forward.15} parent=1 // pred_region
      %38 = dma.done [#allocation4], 1024
    $region29: #{bert_like_embedder_forward.15} parent=1 // pred_fallthru
      _
    %p39 = scmp.eq.s32.totalorder 0, 0
    // Predicated region
    $region30: #{bert_like_embedder_forward.15} parent=1 // pred_check
      %p40 = pneg %p39
    $region31: #{bert_like_embedder_forward.15} parent=1 // pred_check_branch
      %42 = sbr.rel (%p40) target = $region33
    $region32: #{bert_like_embedder_forward.15} parent=1 // pred_region
      %43 = vst [vmem:[#allocation2] sm:$0xff] 0.0
      %44 = vst [vmem:[#allocation2 + $0x8] sm:$0xff] 0.0
      %45 = vst [vmem:[#allocation2 + $0x10] sm:$0xf] 0.0
    $region33: #{bert_like_embedder_forward.15} parent=1 // pred_fallthru
      _
    %v46 = vld [vmem:[#allocation2] sm:$0xff]
    %v47 = vld [vmem:[#allocation2 + $0x8] sm:$0xff]
    %v48 = vld [vmem:[#allocation2 + $0x10] sm:$0xf]
    %v49 = vld [vmem:[%s0] sm:$0xf]
    %v50 = vld [vmem:[%s0 + $0x4] sm:$0xf]
    %v51 = vld [vmem:[%s0 + $0x8] sm:$0x3]
    %v52 = vld [vmem:[#allocation3] sm:$0xf]
    %v53 = vld [vmem:[#allocation3 + $0x4] sm:$0xf]
    %v54 = vld [vmem:[#allocation3 + $0x8] sm:$0xf]
    %v55 = vld [vmem:[#allocation3 + $0xc] sm:$0xf]
    %v56 = vld [vmem:[#allocation3 + $0x10] sm:$0xf]
    %v57 = vld [vmem:[#allocation3 + $0x14] sm:$0xf]
    %v58 = vld [vmem:[#allocation3 + $0x18] sm:$0xf]
    %v59 = vld [vmem:[#allocation3 + $0x1c] sm:$0xf]
    %v60 = vld [vmem:[#allocation3 + $0x20] sm:$0xf]
    %v61 = vld [vmem:[#allocation3 + $0x24] sm:$0xf]
    %v62 = vld [vmem:[#allocation3 + $0x28] sm:$0xf]
    %v63 = vld [vmem:[#allocation3 + $0x2c] sm:$0xf]
    %v64 = vld [vmem:[#allocation3 + $0x30] sm:$0xf]
    %v65 = vld [vmem:[#allocation3 + $0x34] sm:$0xf]
    %v66 = vld [vmem:[#allocation3 + $0x38] sm:$0xf]
    %v67 = vld [vmem:[#allocation3 + $0x3c] sm:$0xf]
    %v71 = vunpack.c.l.b16 %v49
    %v72 = vunpack.c.l.b16 %v50
    %v73 = vunpack.c.l.b16 %v51
    %v74 = vpack.c.b16 %v72, %v71
    %v75 = vpack.c.b16 %v73, %v73
    %v94 = vunpack.c.l.b16 %v52
    %v95 = vunpack.c.l.b16 %v53
    %v96 = vunpack.c.l.b16 %v54
    %v97 = vunpack.c.l.b16 %v55
    %v98 = vunpack.c.l.b16 %v56
    %v99 = vunpack.c.l.b16 %v57
    %v100 = vunpack.c.l.b16 %v58
    %v101 = vunpack.c.l.b16 %v59
    %v102 = vunpack.c.l.b16 %v60
    %v103 = vunpack.c.l.b16 %v61
    %v104 = vunpack.c.l.b16 %v62
    %v105 = vunpack.c.l.b16 %v63
    %v106 = vunpack.c.l.b16 %v64
    %v107 = vunpack.c.l.b16 %v65
    %v108 = vunpack.c.l.b16 %v66
    %v109 = vunpack.c.l.b16 %v67
    %v110 = vpack.c.b16 %v95, %v94
    %v111 = vpack.c.b16 %v97, %v96
    %v112 = vpack.c.b16 %v99, %v98
    %v113 = vpack.c.b16 %v101, %v100
    %v114 = vpack.c.b16 %v103, %v102
    %v115 = vpack.c.b16 %v105, %v104
    %v116 = vpack.c.b16 %v107, %v106
    %v117 = vpack.c.b16 %v109, %v108
    %126 = vmatpush.bf16.msra.mxu0 %v117
    %127 = vmatpush.bf16.msra.mxu0 %v116
    %128 = vmatpush.bf16.msra.mxu0 %v115
    %129 = vmatpush.bf16.msra.mxu0 %v114
    %130 = vmatpush.bf16.msra.mxu0 %v113
    %131 = vmatpush.bf16.msra.mxu0 %v112
    %132 = vmatpush.bf16.msra.mxu0 %v111
    %133 = vmatpush.bf16.msra.mxu0 %v110
    %134 = vmatmul.bf16.gmra.mxu0 %v74
    %v135 = vpop.f32.mrf.mxu0
    %v136 = vadd.f32 0.0, %v135
    %v137 = vpop.f32.mrf.mxu0
    %v138 = vadd.f32 0.0, %v137
    %139 = vmatmul.bf16.gmra.mxu0 %v75
    %v140 = vpop.f32.mrf.mxu0
    %v141 = vadd.f32 0.0, %v140
    %v142 = vpop.f32.mrf.mxu0
    %143 = vdwg.mxu0
    %v144 = vadd.f32 %v46, %v136
    %v145 = vadd.f32 %v47, %v138
    %v146 = vadd.f32 %v48, %v141
    %147 = vst [vmem:[#allocation2] sm:$0xff] %v144
    %148 = vst [vmem:[#allocation2 + $0x8] sm:$0xff] %v145
    %149 = vst [vmem:[#allocation2 + $0x10] sm:$0xf] %v146
    // Predicated region
    $region34: #{bert_like_embedder_forward.15} parent=1 // pred_check
      %p150 = pneg %p39
    $region35: #{bert_like_embedder_forward.15} parent=1 // pred_check_branch
      %152 = sbr.rel (%p150) target = $region37
    $region36: #{bert_like_embedder_forward.15} parent=1 // pred_region
      %v153 = vld [vmem:[#allocation2] sm:$0xff]
      %v154 = vld [vmem:[#allocation2 + $0x8] sm:$0xff]
      %v155 = vld [vmem:[#allocation2 + $0x10] sm:$0xf]
      %v156 = vld [vmem:[%s2] sm:$0x1]
      %v158 = vperm.slane %v156, 0
      %v160 = vadd.f32 %v153, %v158
      %v161 = vadd.f32 %v154, %v158
      %v162 = vadd.f32 %v155, %v158
      %v163 = vld [vmem:[%s3] sm:$0xf]
      %v164 = vld [vmem:[%s3 + $0x4] sm:$0xf]
      %v165 = vld [vmem:[%s3 + $0x8] sm:$0x3]
      %v166 = vunpack.c.l.bf16 %v163
      %v167 = vunpack.c.l.bf16 %v164
      %v168 = vunpack.c.l.bf16 %v165
      %v169 = vadd.f32 %v160, %v166
      %v170 = vadd.f32 %v161, %v167
      %v171 = vadd.f32 %v162, %v168
      %172 = vadd.xlane.f32.xlu0 %v169
      %v173 = vpop.xlane.xlu0 %172
      %174 = vadd.xlane.f32.xlu0 %v170
      %v175 = vpop.xlane.xlu0 %174
      %vm176 = vcmask 1043456
      %v177 = vsel %vm176, %v171, 0.0
      %178 = vadd.xlane.f32.xlu0 %v177
      %v179 = vpop.xlane.xlu0 %178
      %v180 = vrcp.pop 128.0
      %v181 = vmul.f32 128.0, %v180
      %v182 = vsub.f32 1.0, %v181
      %v183 = vmul.f32 %v180, %v182
      %v184 = vadd.f32 %v180, %v183
      %vm185 = vweird.f32 %v180
      %v186 = vsel %vm185, %v180, %v184
      %v187 = vmul.f32 %v173, %v186
      %v188 = vmul.f32 %v175, %v186
      %v189 = vmul.f32 %v179, %v186
      %v190 = vsub.f32 %v169, %v187
      %v191 = vsub.f32 %v170, %v188
      %v192 = vsub.f32 %v171, %v189
      %v193 = vmul.f32 %v190, %v190
      %v194 = vmul.f32 %v191, %v191
      %v195 = vmul.f32 %v192, %v192
      %196 = vadd.xlane.f32.xlu0 %v193
      %v197 = vpop.xlane.xlu0 %196
      %198 = vadd.xlane.f32.xlu0 %v194
      %v199 = vpop.xlane.xlu0 %198
      %v200 = vsel %vm176, %v195, 0.0
      %201 = vadd.xlane.f32.xlu0 %v200
      %v202 = vpop.xlane.xlu0 %201
      %v203 = vmul.f32 %v197, %v186
      %v204 = vmul.f32 %v199, %v186
      %v205 = vmul.f32 %v202, %v186
      %v206 = vadd.f32 %v203, 1e-12
      %v207 = vadd.f32 %v204, 1e-12
      %v208 = vadd.f32 %v205, 1e-12
      %v209 = vrsqrt.pop %v206
      %v210 = vmul.f32 %v209, %v206
      %v211 = vmul.f32 %v210, %v209
      %v212 = vmul.f32 0.5, %v211
      %v213 = vsub.f32 1.5, %v212
      %v214 = vmul.f32 %v209, %v213
      %vm215 = vweird.f32 %v206
      %vm216 = vweird.f32 %v209
      %vm217 = vmor %vm215, %vm216
      %v218 = vsel %vm217, %v209, %v214
      %v219 = vrsqrt.pop %v207
      %v220 = vmul.f32 %v219, %v207
      %v221 = vmul.f32 %v220, %v219
      %v222 = vmul.f32 0.5, %v221
      %v223 = vsub.f32 1.5, %v222
      %v224 = vmul.f32 %v219, %v223
      %vm225 = vweird.f32 %v207
      %vm226 = vweird.f32 %v219
      %vm227 = vmor %vm225, %vm226
      %v228 = vsel %vm227, %v219, %v224
      %v229 = vrsqrt.pop %v208
      %v230 = vmul.f32 %v229, %v208
      %v231 = vmul.f32 %v230, %v229
      %v232 = vmul.f32 0.5, %v231
      %v233 = vsub.f32 1.5, %v232
      %v234 = vmul.f32 %v229, %v233
      %vm235 = vweird.f32 %v208
      %vm236 = vweird.f32 %v229
      %vm237 = vmor %vm235, %vm236
      %v238 = vsel %vm237, %v229, %v234
      %v239 = vmul.f32 %v190, %v218
      %v240 = vmul.f32 %v191, %v228
      %v241 = vmul.f32 %v192, %v238
      %v242 = vld [vmem:[%s4] sm:$0x1]
      %v244 = vperm.slane %v242, 0
      %v246 = vmul.f32 %v239, %v244
      %v247 = vmul.f32 %v240, %v244
      %v248 = vmul.f32 %v241, %v244
      %v249 = vld [vmem:[%s5] sm:$0x1]
      %v251 = vperm.slane %v249, 0
      %v253 = vadd.f32 %v246, %v251
      %v254 = vadd.f32 %v247, %v251
      %v255 = vadd.f32 %v248, %v251
      %v256 = vpack.c.bf16 %v253, %v253
      %v257 = vpack.c.bf16 %v254, %v254
      %v258 = vpack.c.bf16 %v255, %v255
      %259 = vst [vmem:[%s6] sm:$0xf] %v256
      %260 = vst [vmem:[%s6 + $0x4] sm:$0xf] %v257
      %261 = vst [vmem:[%s6 + $0x8] sm:$0x3] %v258
    $region37: #{bert_like_embedder_forward.15} parent=1 // pred_fallthru
      _
    // Predicated region
    $region38: #{bert_like_embedder_forward.15} parent=1 // pred_check
      _
    $region39: #{bert_like_embedder_forward.15} parent=1 // pred_check_branch
      %263 = sbr.rel (0) target = $region41
    $region40: #{bert_like_embedder_forward.15} parent=1 // pred_region
      _
    $region41: #{bert_like_embedder_forward.15} parent=1 // pred_fallthru
      _
    // Predicated region
    $region42: #{bert_like_embedder_forward.15} parent=1 // pred_check
      _
    $region43: #{bert_like_embedder_forward.15} parent=1 // pred_check_branch
      %265 = sbr.rel (0) target = $region45
    $region44: #{bert_like_embedder_forward.15} parent=1 // pred_region
      _
    $region45: #{bert_like_embedder_forward.15} parent=1 // pred_fallthru
      _
    %266 = vsyncpa [#allocation4], 1

// kernel: bert_like_embedder_forward.14
$region0: #{bert_like_embedder_forward.14}
  #allocation0 [shape = 'u32[]', space=smem, size = 0x4, offset = 0x4, fixed_abs, tag = 'smem constant byte address 0x4 - core index']
  #allocation1 [shape = 'u32[72,128]{1,0:T(1,128)}', space=vmem, size = 0x9000, scoped, tag = 'internal scratch']
  %s0 = inlined_call_operand.vmem [shape: bf16[2,10,384], index: 0, kind: input, shape index: {}, may-alias: {0,1,2}]
  %s1 = inlined_call_operand.vmem [shape: bf16[2,10,384], index: 1, kind: input, shape index: {}, may-alias: {0,1,2}]
  %s2 = inlined_call_operand.vmem [shape: bf16[2,10,384], index: 2, kind: input, shape index: {}, may-alias: {0,1,2}]
  %s3 = inlined_call_operand.vmem [shape: f32[2,1,10], index: 3, kind: input, shape index: {}]
  %s4 = inlined_call_operand.vmem [shape: bf16[2,10,128], index: 4, kind: output, shape index: {}]
  %s5 = sld [smem:[#allocation0]]
  $region172: #{bert_like_embedder_forward.14} parent=0
    _
  %s7 = ssub.s32 1, %s5
  %s8 = scalar_select 0, %s7, %s5
  $region1: #{bert_like_embedder_forward.14} parent=0
    #allocation2 [shape = 'u8[8192]{0}', space=vmem, size = 0x2000, scoped, tag = 'input window, operand 0']
    #allocation3 [shape = 'u8[8192]{0}', space=vmem, size = 0x2000, scoped, tag = 'input window, operand 1']
    #allocation4 [shape = 'u8[8192]{0}', space=vmem, size = 0x2000, scoped, tag = 'input window, operand 2']
    loop: start=0, step=1, limit=4
    $region2: #{bert_like_embedder_forward.14} parent=1 // loop_pre_header
      _
    $region3: #{bert_like_embedder_forward.14} parent=1 // loop_header
      %s10 = sphi 0, %s14
      %p11 = scmp.ge.s32.totalorder %s10, 4
      %s17 = sphi 0, %s29
      %s18 = sphi 0, %s25
      %s19 = sphi 0, %s17
      %s20 = sphi 0, %s18
      %s21 = sphi 0, %s19
      %s22 = sphi 0, %s20
      %s34 = sphi 0, %s36
      %s37 = sphi 0, %s34
      %s38 = sphi 0, %s37
      %s54 = sphi 0, %s38
      %s64 = sphi 0, %s66
      %s67 = sphi 0, %s64
      %s68 = sphi 0, %s67
      %s84 = sphi 0, %s68
      %s94 = sphi 0, %s96
      %s97 = sphi 0, %s94
      %s98 = sphi 0, %s97
      %s114 = sphi 0, %s98
      %s120 = sphi 0, %s122
      %s123 = sphi 0, %s120
      %s124 = sphi 0, %s123
      %s140 = sphi 0, %s124
      %s148 = sphi 0, %s150
      %s151 = sphi 0, %s148
      %s152 = sphi 0, %s151
      %s168 = sphi 0, %s152
    $region4: #{bert_like_embedder_forward.14} parent=1 // loop_header_branch
      %13 = sbr.rel (%p11) target = $region8
    $region5: #{bert_like_embedder_forward.14} parent=1 // loop_body
      %s15 = ssub.s32 %s10, 1
      %s16 = ssub.s32 %s10, 2
      %s23 = sadd.s32 1, %s18
      %p24 = scmp.ge.s32.totalorder %s23, 1
      %s25 = scalar_select %p24, 0, %s23
      %s26 = sadd.s32 1, %s17
      %s27 = scalar_select %p24, %s26, %s17
      %p28 = scmp.ge.s32.totalorder %s27, 2
      %s29 = scalar_select %p28, 0, %s27
      %s30 = ssub.s32 %s17, %s29
      %s31 = ssub.s32 %s18, %s25
      %s32 = sor.u32 %s30, %s31
      %p33 = scmp.eq.s32.totalorder %s32, 0
      %s35 = sadd.s32 %s34, 1
      %s36 = scalar_select %p33, %s34, %s35
      %p39 = pneg %p33
      %p40 = scmp.eq.s32.totalorder %s10, 1
      %p41 = por %p39, %p40
      %p42 = scmp.ne.s32.totalorder %s34, %s37
      %p43 = scmp.eq.s32.totalorder %s10, 0
      %p44 = por %p42, %p43
      %p45 = scmp.ne.s32.totalorder %s34, %s37
      %p46 = scmp.eq.s32.totalorder %s15, 1
      %p47 = por %p45, %p46
      %p48 = scmp.ne.s32.totalorder %s37, %s38
      %p49 = scmp.eq.s32.totalorder %s15, 0
      %p50 = por %p48, %p49
      %p51 = scmp.ne.s32.totalorder %s37, %s38
      %p52 = scmp.eq.s32.totalorder %s16, 1
      %p53 = por %p51, %p52
      %p55 = scmp.ne.s32.totalorder %s38, %s54
      %p56 = scmp.eq.s32.totalorder %s16, 0
      %p57 = por %p55, %p56
      %s58 = sadd.s32 %s18, 1
      %s59 = sadd.s32 %s25, 1
      %s60 = ssub.s32 %s17, %s29
      %s61 = ssub.s32 %s58, %s59
      %s62 = sor.u32 %s60, %s61
      %p63 = scmp.eq.s32.totalorder %s62, 0
      %s65 = sadd.s32 %s64, 1
      %s66 = scalar_select %p63, %s64, %s65
      %p69 = pneg %p63
      %p70 = scmp.eq.s32.totalorder %s10, 1
      %p71 = por %p69, %p70
      %p72 = scmp.ne.s32.totalorder %s64, %s67
      %p73 = scmp.eq.s32.totalorder %s10, 0
      %p74 = por %p72, %p73
      %p75 = scmp.ne.s32.totalorder %s64, %s67
      %p76 = scmp.eq.s32.totalorder %s15, 1
      %p77 = por %p75, %p76
      %p78 = scmp.ne.s32.totalorder %s67, %s68
      %p79 = scmp.eq.s32.totalorder %s15, 0
      %p80 = por %p78, %p79
      %p81 = scmp.ne.s32.totalorder %s67, %s68
      %p82 = scmp.eq.s32.totalorder %s16, 1
      %p83 = por %p81, %p82
      %p85 = scmp.ne.s32.totalorder %s68, %s84
      %p86 = scmp.eq.s32.totalorder %s16, 0
      %p87 = por %p85, %p86
      %s88 = sadd.s32 %s18, 2
      %s89 = sadd.s32 %s25, 2
      %s90 = ssub.s32 %s17, %s29
      %s91 = ssub.s32 %s88, %s89
      %s92 = sor.u32 %s90, %s91
      %p93 = scmp.eq.s32.totalorder %s92, 0
      %s95 = sadd.s32 %s94, 1
      %s96 = scalar_select %p93, %s94, %s95
      %p99 = pneg %p93
      %p100 = scmp.eq.s32.totalorder %s10, 1
      %p101 = por %p99, %p100
      %p102 = scmp.ne.s32.totalorder %s94, %s97
      %p103 = scmp.eq.s32.totalorder %s10, 0
      %p104 = por %p102, %p103
      %p105 = scmp.ne.s32.totalorder %s94, %s97
      %p106 = scmp.eq.s32.totalorder %s15, 1
      %p107 = por %p105, %p106
      %p108 = scmp.ne.s32.totalorder %s97, %s98
      %p109 = scmp.eq.s32.totalorder %s15, 0
      %p110 = por %p108, %p109
      %p111 = scmp.ne.s32.totalorder %s97, %s98
      %p112 = scmp.eq.s32.totalorder %s16, 1
      %p113 = por %p111, %p112
      %p115 = scmp.ne.s32.totalorder %s98, %s114
      %p116 = scmp.eq.s32.totalorder %s16, 0
      %p117 = por %p115, %p116
      %s118 = ssub.s32 %s17, %s29
      %p119 = scmp.eq.s32.totalorder %s118, 0
      %s121 = sadd.s32 %s120, 1
      %s122 = scalar_select %p119, %s120, %s121
      %p125 = pneg %p119
      %p126 = scmp.eq.s32.totalorder %s10, 1
      %p127 = por %p125, %p126
      %p128 = scmp.ne.s32.totalorder %s120, %s123
      %p129 = scmp.eq.s32.totalorder %s10, 0
      %p130 = por %p128, %p129
      %p131 = scmp.ne.s32.totalorder %s120, %s123
      %p132 = scmp.eq.s32.totalorder %s15, 1
      %p133 = por %p131, %p132
      %p134 = scmp.ne.s32.totalorder %s123, %s124
      %p135 = scmp.eq.s32.totalorder %s15, 0
      %p136 = por %p134, %p135
      %p137 = scmp.ne.s32.totalorder %s123, %s124
      %p138 = scmp.eq.s32.totalorder %s16, 1
      %p139 = por %p137, %p138
      %p141 = scmp.ne.s32.totalorder %s124, %s140
      %p142 = scmp.eq.s32.totalorder %s16, 0
      %p143 = por %p141, %p142
      %s144 = ssub.s32 %s17, %s29
      %s145 = ssub.s32 %s18, %s25
      %s146 = sor.u32 %s144, %s145
      %p147 = scmp.eq.s32.totalorder %s146, 0
      %s149 = sadd.s32 %s148, 1
      %s150 = scalar_select %p147, %s148, %s149
      %p153 = pneg %p147
      %p154 = scmp.eq.s32.totalorder %s10, 1
      %p155 = por %p153, %p154
      %p156 = scmp.ne.s32.totalorder %s148, %s151
      %p157 = scmp.eq.s32.totalorder %s10, 0
      %p158 = por %p156, %p157
      %p159 = scmp.ne.s32.totalorder %s148, %s151
      %p160 = scmp.eq.s32.totalorder %s15, 1
      %p161 = por %p159, %p160
      %p162 = scmp.ne.s32.totalorder %s151, %s152
      %p163 = scmp.eq.s32.totalorder %s15, 0
      %p164 = por %p162, %p163
      %p165 = scmp.ne.s32.totalorder %s151, %s152
      %p166 = scmp.eq.s32.totalorder %s16, 1
      %p167 = por %p165, %p166
      %p169 = scmp.ne.s32.totalorder %s152, %s168
      %p170 = scmp.eq.s32.totalorder %s16, 0
      %p171 = por %p169, %p170
      %p172 = scmp.le.s32.totalorder 1, %s10
      %p173 = scmp.lt.s32.totalorder %s10, 3
      %p174 = pnand %p172, %p173
      %p175 = pneg %p174
      // Predicated region
      $region9: #{bert_like_embedder_forward.14} parent=5 // pred_check
        _
      $region10: #{bert_like_embedder_forward.14} parent=5 // pred_check_branch
        %177 = sbr.rel (%p174) target = $region12
      $region11: #{bert_like_embedder_forward.14} parent=5 // pred_region
        %s178 = ssub.s32 %s10, 1
      $region12: #{bert_like_embedder_forward.14} parent=5 // pred_fallthru
        _
      %p179 = scmp.lt.s32.totalorder %s10, 2
      // Predicated region
      $region13: #{bert_like_embedder_forward.14} parent=5 // pred_check
        %p180 = pneg %p179
      $region14: #{bert_like_embedder_forward.14} parent=5 // pred_check_branch
        %182 = sbr.rel (%p180) target = $region16
      $region15: #{bert_like_embedder_forward.14} parent=5 // pred_region
        // Predicated region
        $region17: #{bert_like_embedder_forward.14} parent=15 // pred_check
          %p183 = pneg %p44
        $region18: #{bert_like_embedder_forward.14} parent=15 // pred_check_branch
          %185 = sbr.rel (%p183) target = $region20
        $region19: #{bert_like_embedder_forward.14} parent=15 // pred_region
          %s186 = sand.u32 %s34, 1
          %s187 = sand.u32 %s34, 1
          %s188 = smul.addr %s187, 8
          %s189 = scalar_lea.vmem [#allocation2], %s188
          %s190 = smul.addr %s17, 6
          %s191 = sadd.s32 %s18, %s190
          %s192 = smul.addr %s191, 4
          %s193 = scalar_lea.vmem %s0, %s192
          // Predicated region
          $region21: #{bert_like_embedder_forward.14} parent=19 // pred_check
            _
          $region22: #{bert_like_embedder_forward.14} parent=19 // pred_check_branch
            %195 = sbr.rel (0) target = $region24
          $region23: #{bert_like_embedder_forward.14} parent=19 // pred_region
            // Predicated region
            $region25: #{bert_like_embedder_forward.14} parent=23 // pred_check
              _
            $region26: #{bert_like_embedder_forward.14} parent=23 // pred_check_branch
              %197 = sbr.rel target = $region28
            $region27: #{bert_like_embedder_forward.14} parent=23 // pred_region
              // Predicated region
              $region40: #{bert_like_embedder_forward.14} parent=27 // pred_check
                _
              $region41: #{bert_like_embedder_forward.14} parent=27 // pred_check_branch
                %215 = sbr.rel (0) target = $region43
              $region42: #{bert_like_embedder_forward.14} parent=27 // pred_region
                loop: start=0, step=1, limit=1
                $region44: #{bert_like_embedder_forward.14} parent=42 // loop_pre_header
                  _
                $region45: #{bert_like_embedder_forward.14} parent=42 // loop_header
                  %s217 = sphi 0, %s221
                  %p218 = scmp.ge.s32.totalorder %s217, 1
                  %s222 = sphi %s193, %s193
                  %s223 = sphi %s189, %s189
                $region46: #{bert_like_embedder_forward.14} parent=42 // loop_header_branch
                  %220 = sbr.rel (%p218) target = $region50
                $region47: #{bert_like_embedder_forward.14} parent=42 // loop_body
                  _
                $region48: #{bert_like_embedder_forward.14} parent=42 // loop_footer
                  %s221 = sadd.s32 1, %s217
                $region49: #{bert_like_embedder_forward.14} parent=42 // loop_footer_branch
                  %216 = sbr.rel target = $region45
                $region50: #{bert_like_embedder_forward.14} parent=42 // loop_exit
                  _
                %s225 = ssub.s32 16, 1
                loop: start=0, step=1, limit=1
                $region51: #{bert_like_embedder_forward.14} parent=42 // loop_pre_header
                  _
                $region52: #{bert_like_embedder_forward.14} parent=42 // loop_header
                  %s227 = sphi 0, %s231
                  %p228 = scmp.ge.s32.totalorder %s227, 1
                  %s232 = sphi %s193, %s193
                  %s233 = sphi %s189, %s189
                $region53: #{bert_like_embedder_forward.14} parent=42 // loop_header_branch
                  %230 = sbr.rel (%p228) target = $region57
                $region54: #{bert_like_embedder_forward.14} parent=42 // loop_body
                  %v234 = vld [vmem:[%s232] sm:%s225]
                  %235 = vst [vmem:[%s233] sm:%s225] %v234
                  %v236 = vld [vmem:[%s232 + $0xc] sm:%s225]
                  %237 = vst [vmem:[%s233 + $0x4] sm:%s225] %v236
                $region55: #{bert_like_embedder_forward.14} parent=42 // loop_footer
                  %s231 = sadd.s32 1, %s227
                $region56: #{bert_like_embedder_forward.14} parent=42 // loop_footer_branch
                  %226 = sbr.rel target = $region52
                $region57: #{bert_like_embedder_forward.14} parent=42 // loop_exit
                  _
              $region43: #{bert_like_embedder_forward.14} parent=27 // pred_fallthru
                _
            $region28: #{bert_like_embedder_forward.14} parent=23 // pred_fallthru
              _
            // Predicated region
            $region29: #{bert_like_embedder_forward.14} parent=23 // pred_check
              _
            $region30: #{bert_like_embedder_forward.14} parent=23 // pred_check_branch
              %199 = sbr.rel (0) target = $region32
            $region31: #{bert_like_embedder_forward.14} parent=23 // pred_region
              %s201 = ssub.s32 16, 1
              loop: start=0, step=1, limit=1
              $region33: #{bert_like_embedder_forward.14} parent=31 // loop_pre_header
                _
              $region34: #{bert_like_embedder_forward.14} parent=31 // loop_header
                %s203 = sphi 0, %s207
                %p204 = scmp.ge.s32.totalorder %s203, 1
                %s208 = sphi %s193, %s193
                %s209 = sphi %s189, %s189
              $region35: #{bert_like_embedder_forward.14} parent=31 // loop_header_branch
                %206 = sbr.rel (%p204) target = $region39
              $region36: #{bert_like_embedder_forward.14} parent=31 // loop_body
                %v210 = vld [vmem:[%s208] sm:%s201]
                %211 = vst [vmem:[%s209] sm:%s201] %v210
                %v212 = vld [vmem:[%s208 + $0xc] sm:%s201]
                %213 = vst [vmem:[%s209 + $0x4] sm:%s201] %v212
              $region37: #{bert_like_embedder_forward.14} parent=31 // loop_footer
                %s207 = sadd.s32 1, %s203
              $region38: #{bert_like_embedder_forward.14} parent=31 // loop_footer_branch
                %202 = sbr.rel target = $region34
              $region39: #{bert_like_embedder_forward.14} parent=31 // loop_exit
                _
            $region32: #{bert_like_embedder_forward.14} parent=23 // pred_fallthru
              _
          $region24: #{bert_like_embedder_forward.14} parent=19 // pred_fallthru
            _
          %238 = vnop
        $region20: #{bert_like_embedder_forward.14} parent=15 // pred_fallthru
          _
        // Predicated region
        $region58: #{bert_like_embedder_forward.14} parent=15 // pred_check
          %p239 = pneg %p74
        $region59: #{bert_like_embedder_forward.14} parent=15 // pred_check_branch
          %241 = sbr.rel (%p239) target = $region61
        $region60: #{bert_like_embedder_forward.14} parent=15 // pred_region
          %s242 = sand.u32 %s64, 1
          %s243 = sand.u32 %s64, 1
          %s244 = smul.addr %s243, 8
          %s245 = scalar_lea.vmem [#allocation3], %s244
          %s246 = sadd.s32 %s18, 1
          %s247 = smul.addr %s17, 6
          %s248 = sadd.s32 %s246, %s247
          %s249 = smul.addr %s248, 4
          %s250 = scalar_lea.vmem %s1, %s249
          // Predicated region
          $region62: #{bert_like_embedder_forward.14} parent=60 // pred_check
            _
          $region63: #{bert_like_embedder_forward.14} parent=60 // pred_check_branch
            %252 = sbr.rel (0) target = $region65
          $region64: #{bert_like_embedder_forward.14} parent=60 // pred_region
            // Predicated region
            $region66: #{bert_like_embedder_forward.14} parent=64 // pred_check
              _
            $region67: #{bert_like_embedder_forward.14} parent=64 // pred_check_branch
              %254 = sbr.rel target = $region69
            $region68: #{bert_like_embedder_forward.14} parent=64 // pred_region
              // Predicated region
              $region81: #{bert_like_embedder_forward.14} parent=68 // pred_check
                _
              $region82: #{bert_like_embedder_forward.14} parent=68 // pred_check_branch
                %272 = sbr.rel (0) target = $region84
              $region83: #{bert_like_embedder_forward.14} parent=68 // pred_region
                loop: start=0, step=1, limit=1
                $region85: #{bert_like_embedder_forward.14} parent=83 // loop_pre_header
                  _
                $region86: #{bert_like_embedder_forward.14} parent=83 // loop_header
                  %s274 = sphi 0, %s278
                  %p275 = scmp.ge.s32.totalorder %s274, 1
                  %s279 = sphi %s250, %s250
                  %s280 = sphi %s245, %s245
                $region87: #{bert_like_embedder_forward.14} parent=83 // loop_header_branch
                  %277 = sbr.rel (%p275) target = $region91
                $region88: #{bert_like_embedder_forward.14} parent=83 // loop_body
                  _
                $region89: #{bert_like_embedder_forward.14} parent=83 // loop_footer
                  %s278 = sadd.s32 1, %s274
                $region90: #{bert_like_embedder_forward.14} parent=83 // loop_footer_branch
                  %273 = sbr.rel target = $region86
                $region91: #{bert_like_embedder_forward.14} parent=83 // loop_exit
                  _
                %s282 = ssub.s32 16, 1
                loop: start=0, step=1, limit=1
                $region92: #{bert_like_embedder_forward.14} parent=83 // loop_pre_header
                  _
                $region93: #{bert_like_embedder_forward.14} parent=83 // loop_header
                  %s284 = sphi 0, %s288
                  %p285 = scmp.ge.s32.totalorder %s284, 1
                  %s289 = sphi %s250, %s250
                  %s290 = sphi %s245, %s245
                $region94: #{bert_like_embedder_forward.14} parent=83 // loop_header_branch
                  %287 = sbr.rel (%p285) target = $region98
                $region95: #{bert_like_embedder_forward.14} parent=83 // loop_body
                  %v291 = vld [vmem:[%s289] sm:%s282]
                  %292 = vst [vmem:[%s290] sm:%s282] %v291
                  %v293 = vld [vmem:[%s289 + $0xc] sm:%s282]
                  %294 = vst [vmem:[%s290 + $0x4] sm:%s282] %v293
                $region96: #{bert_like_embedder_forward.14} parent=83 // loop_footer
                  %s288 = sadd.s32 1, %s284
                $region97: #{bert_like_embedder_forward.14} parent=83 // loop_footer_branch
                  %283 = sbr.rel target = $region93
                $region98: #{bert_like_embedder_forward.14} parent=83 // loop_exit
                  _
              $region84: #{bert_like_embedder_forward.14} parent=68 // pred_fallthru
                _
            $region69: #{bert_like_embedder_forward.14} parent=64 // pred_fallthru
              _
            // Predicated region
            $region70: #{bert_like_embedder_forward.14} parent=64 // pred_check
              _
            $region71: #{bert_like_embedder_forward.14} parent=64 // pred_check_branch
              %256 = sbr.rel (0) target = $region73
            $region72: #{bert_like_embedder_forward.14} parent=64 // pred_region
              %s258 = ssub.s32 16, 1
              loop: start=0, step=1, limit=1
              $region74: #{bert_like_embedder_forward.14} parent=72 // loop_pre_header
                _
              $region75: #{bert_like_embedder_forward.14} parent=72 // loop_header
                %s260 = sphi 0, %s264
                %p261 = scmp.ge.s32.totalorder %s260, 1
                %s265 = sphi %s250, %s250
                %s266 = sphi %s245, %s245
              $region76: #{bert_like_embedder_forward.14} parent=72 // loop_header_branch
                %263 = sbr.rel (%p261) target = $region80
              $region77: #{bert_like_embedder_forward.14} parent=72 // loop_body
                %v267 = vld [vmem:[%s265] sm:%s258]
                %268 = vst [vmem:[%s266] sm:%s258] %v267
                %v269 = vld [vmem:[%s265 + $0xc] sm:%s258]
                %270 = vst [vmem:[%s266 + $0x4] sm:%s258] %v269
              $region78: #{bert_like_embedder_forward.14} parent=72 // loop_footer
                %s264 = sadd.s32 1, %s260
              $region79: #{bert_like_embedder_forward.14} parent=72 // loop_footer_branch
                %259 = sbr.rel target = $region75
              $region80: #{bert_like_embedder_forward.14} parent=72 // loop_exit
                _
            $region73: #{bert_like_embedder_forward.14} parent=64 // pred_fallthru
              _
          $region65: #{bert_like_embedder_forward.14} parent=60 // pred_fallthru
            _
          %295 = vnop
        $region61: #{bert_like_embedder_forward.14} parent=15 // pred_fallthru
          _
        // Predicated region
        $region99: #{bert_like_embedder_forward.14} parent=15 // pred_check
          %p296 = pneg %p104
        $region100: #{bert_like_embedder_forward.14} parent=15 // pred_check_branch
          %298 = sbr.rel (%p296) target = $region102
        $region101: #{bert_like_embedder_forward.14} parent=15 // pred_region
          %s299 = sand.u32 %s94, 1
          %s300 = sand.u32 %s94, 1
          %s301 = smul.addr %s300, 8
          %s302 = scalar_lea.vmem [#allocation4], %s301
          %s303 = sadd.s32 %s18, 2
          %s304 = smul.addr %s17, 6
          %s305 = sadd.s32 %s303, %s304
          %s306 = smul.addr %s305, 4
          %s307 = scalar_lea.vmem %s2, %s306
          // Predicated region
          $region103: #{bert_like_embedder_forward.14} parent=101 // pred_check
            _
          $region104: #{bert_like_embedder_forward.14} parent=101 // pred_check_branch
            %309 = sbr.rel (0) target = $region106
          $region105: #{bert_like_embedder_forward.14} parent=101 // pred_region
            // Predicated region
            $region107: #{bert_like_embedder_forward.14} parent=105 // pred_check
              _
            $region108: #{bert_like_embedder_forward.14} parent=105 // pred_check_branch
              %311 = sbr.rel target = $region110
            $region109: #{bert_like_embedder_forward.14} parent=105 // pred_region
              // Predicated region
              $region122: #{bert_like_embedder_forward.14} parent=109 // pred_check
                _
              $region123: #{bert_like_embedder_forward.14} parent=109 // pred_check_branch
                %329 = sbr.rel (0) target = $region125
              $region124: #{bert_like_embedder_forward.14} parent=109 // pred_region
                loop: start=0, step=1, limit=1
                $region126: #{bert_like_embedder_forward.14} parent=124 // loop_pre_header
                  _
                $region127: #{bert_like_embedder_forward.14} parent=124 // loop_header
                  %s331 = sphi 0, %s335
                  %p332 = scmp.ge.s32.totalorder %s331, 1
                  %s336 = sphi %s307, %s307
                  %s337 = sphi %s302, %s302
                $region128: #{bert_like_embedder_forward.14} parent=124 // loop_header_branch
                  %334 = sbr.rel (%p332) target = $region132
                $region129: #{bert_like_embedder_forward.14} parent=124 // loop_body
                  _
                $region130: #{bert_like_embedder_forward.14} parent=124 // loop_footer
                  %s335 = sadd.s32 1, %s331
                $region131: #{bert_like_embedder_forward.14} parent=124 // loop_footer_branch
                  %330 = sbr.rel target = $region127
                $region132: #{bert_like_embedder_forward.14} parent=124 // loop_exit
                  _
                %s339 = ssub.s32 16, 1
                loop: start=0, step=1, limit=1
                $region133: #{bert_like_embedder_forward.14} parent=124 // loop_pre_header
                  _
                $region134: #{bert_like_embedder_forward.14} parent=124 // loop_header
                  %s341 = sphi 0, %s345
                  %p342 = scmp.ge.s32.totalorder %s341, 1
                  %s346 = sphi %s307, %s307
                  %s347 = sphi %s302, %s302
                $region135: #{bert_like_embedder_forward.14} parent=124 // loop_header_branch
                  %344 = sbr.rel (%p342) target = $region139
                $region136: #{bert_like_embedder_forward.14} parent=124 // loop_body
                  %v348 = vld [vmem:[%s346] sm:%s339]
                  %349 = vst [vmem:[%s347] sm:%s339] %v348
                  %v350 = vld [vmem:[%s346 + $0xc] sm:%s339]
                  %351 = vst [vmem:[%s347 + $0x4] sm:%s339] %v350
                $region137: #{bert_like_embedder_forward.14} parent=124 // loop_footer
                  %s345 = sadd.s32 1, %s341
                $region138: #{bert_like_embedder_forward.14} parent=124 // loop_footer_branch
                  %340 = sbr.rel target = $region134
                $region139: #{bert_like_embedder_forward.14} parent=124 // loop_exit
                  _
              $region125: #{bert_like_embedder_forward.14} parent=109 // pred_fallthru
                _
            $region110: #{bert_like_embedder_forward.14} parent=105 // pred_fallthru
              _
            // Predicated region
            $region111: #{bert_like_embedder_forward.14} parent=105 // pred_check
              _
            $region112: #{bert_like_embedder_forward.14} parent=105 // pred_check_branch
              %313 = sbr.rel (0) target = $region114
            $region113: #{bert_like_embedder_forward.14} parent=105 // pred_region
              %s315 = ssub.s32 16, 1
              loop: start=0, step=1, limit=1
              $region115: #{bert_like_embedder_forward.14} parent=113 // loop_pre_header
                _
              $region116: #{bert_like_embedder_forward.14} parent=113 // loop_header
                %s317 = sphi 0, %s321
                %p318 = scmp.ge.s32.totalorder %s317, 1
                %s322 = sphi %s307, %s307
                %s323 = sphi %s302, %s302
              $region117: #{bert_like_embedder_forward.14} parent=113 // loop_header_branch
                %320 = sbr.rel (%p318) target = $region121
              $region118: #{bert_like_embedder_forward.14} parent=113 // loop_body
                %v324 = vld [vmem:[%s322] sm:%s315]
                %325 = vst [vmem:[%s323] sm:%s315] %v324
                %v326 = vld [vmem:[%s322 + $0xc] sm:%s315]
                %327 = vst [vmem:[%s323 + $0x4] sm:%s315] %v326
              $region119: #{bert_like_embedder_forward.14} parent=113 // loop_footer
                %s321 = sadd.s32 1, %s317
              $region120: #{bert_like_embedder_forward.14} parent=113 // loop_footer_branch
                %316 = sbr.rel target = $region116
              $region121: #{bert_like_embedder_forward.14} parent=113 // loop_exit
                _
            $region114: #{bert_like_embedder_forward.14} parent=105 // pred_fallthru
              _
          $region106: #{bert_like_embedder_forward.14} parent=101 // pred_fallthru
            _
          %352 = vnop
        $region102: #{bert_like_embedder_forward.14} parent=15 // pred_fallthru
          _
        // Predicated region
        $region140: #{bert_like_embedder_forward.14} parent=15 // pred_check
          %p353 = pneg %p130
        $region141: #{bert_like_embedder_forward.14} parent=15 // pred_check_branch
          %355 = sbr.rel (%p353) target = $region143
        $region142: #{bert_like_embedder_forward.14} parent=15 // pred_region
          %p356 = scmp.lt.s32.totalorder %s17, 1
          %s357 = scalar_select %p356, %s17, 1
          %s358 = scalar_lea.vmem %s3, %s357
        $region143: #{bert_like_embedder_forward.14} parent=15 // pred_fallthru
          _
      $region16: #{bert_like_embedder_forward.14} parent=5 // pred_fallthru
        _
      %p359 = scmp.le.s32.totalorder 1, %s10
      %p360 = scmp.lt.s32.totalorder %s10, 3
      %p361 = pnand %p359, %p360
      %p362 = pneg %p361
      // Predicated region
      $region144: #{bert_like_embedder_forward.14} parent=5 // pred_check
        _
      $region145: #{bert_like_embedder_forward.14} parent=5 // pred_check_branch
        %364 = sbr.rel (%p361) target = $region147
      $region146: #{bert_like_embedder_forward.14} parent=5 // pred_region
        %s365 = ssub.s32 %s10, 1
        %s366 = sand.u32 %s37, 1
        %s367 = sand.u32 %s37, 1
        %s368 = smul.addr %s367, 8
        %s369 = scalar_lea.vmem [#allocation2], %s368
        // Predicated region
        $region148: #{bert_like_embedder_forward.14} parent=146 // pred_check
          %p370 = pneg %p50
        $region149: #{bert_like_embedder_forward.14} parent=146 // pred_check_branch
          %372 = sbr.rel (%p370) target = $region151
        $region150: #{bert_like_embedder_forward.14} parent=146 // pred_region
          _
        $region151: #{bert_like_embedder_forward.14} parent=146 // pred_fallthru
          _
        %s373 = sand.u32 %s67, 1
        %s374 = sand.u32 %s67, 1
        %s375 = smul.addr %s374, 8
        %s376 = scalar_lea.vmem [#allocation3], %s375
        // Predicated region
        $region152: #{bert_like_embedder_forward.14} parent=146 // pred_check
          %p377 = pneg %p80
        $region153: #{bert_like_embedder_forward.14} parent=146 // pred_check_branch
          %379 = sbr.rel (%p377) target = $region155
        $region154: #{bert_like_embedder_forward.14} parent=146 // pred_region
          _
        $region155: #{bert_like_embedder_forward.14} parent=146 // pred_fallthru
          _
        %s380 = sand.u32 %s97, 1
        %s381 = sand.u32 %s97, 1
        %s382 = smul.addr %s381, 8
        %s383 = scalar_lea.vmem [#allocation4], %s382
        // Predicated region
        $region156: #{bert_like_embedder_forward.14} parent=146 // pred_check
          %p384 = pneg %p110
        $region157: #{bert_like_embedder_forward.14} parent=146 // pred_check_branch
          %386 = sbr.rel (%p384) target = $region159
        $region158: #{bert_like_embedder_forward.14} parent=146 // pred_region
          _
        $region159: #{bert_like_embedder_forward.14} parent=146 // pred_fallthru
          _
        %s387 = sand.u32 %s37, 1
        %s388 = sand.u32 %s37, 1
        %s389 = smul.addr %s388, 8
        %s390 = scalar_lea.vmem [#allocation2], %s389
        %p391 = pneg %p50
        %p392 = pneg %p47
        %s393 = sand.u32 %s67, 1
        %s394 = sand.u32 %s67, 1
        %s395 = smul.addr %s394, 8
        %s396 = scalar_lea.vmem [#allocation3], %s395
        %p397 = pneg %p80
        %p398 = pneg %p77
        %s399 = sand.u32 %s97, 1
        %s400 = sand.u32 %s97, 1
        %s401 = smul.addr %s400, 8
        %s402 = scalar_lea.vmem [#allocation4], %s401
        %p403 = pneg %p110
        %p404 = pneg %p107
        %p405 = scmp.lt.s32.totalorder %s19, 1
        %s406 = scalar_select %p405, %s19, 1
        %s407 = scalar_lea.vmem %s3, %s406
        %p408 = pneg %p136
        %p409 = pneg %p133
        %p410 = pneg %p164
        %p411 = pneg %p161
        %p412 = scmp.lt.s32.totalorder %s19, 1
        %s413 = scalar_select %p412, %s19, 1
        %p414 = scmp.lt.s32.totalorder %s20, 0
        %s415 = scalar_select %p414, %s20, 0
        %s416 = smul.addr %s413, 2
        %s417 = sadd.s32 %s415, %s416
        %s418 = smul.addr %s417, 4
        %s419 = scalar_lea.vmem %s4, %s418
        %s420 = sadd.s32 %s20, 1
        %s421 = sadd.s32 %s20, 2
        %p422 = scmp.lt.s32.totalorder %s19, 1
        %s423 = scalar_select %p422, %s19, 1
        %s424 = scalar_lea.vmem %s3, %s423
        %p425 = scmp.lt.s32.totalorder %s19, 1
        %s426 = scalar_select %p425, %s19, 1
        %p427 = scmp.lt.s32.totalorder %s20, 0
        %s428 = scalar_select %p427, %s20, 0
        %s429 = smul.addr %s426, 2
        %s430 = sadd.s32 %s428, %s429
        %s431 = smul.addr %s430, 4
        %s432 = scalar_lea.vmem %s4, %s431
        %v434 = vld [vmem:[%s424] sm:$0x1]
        %v435 = vld [vmem:[%s369] sm:$0xf]
        %v436 = vld [vmem:[%s369 + $0x4] sm:$0x1]
        %v437 = vunpack.c.l.bf16 %v435
        %v438 = vunpack.c.l.bf16 %v436
        %v439 = vmul.f32 %v437, 0.125
        %v440 = vmul.f32 %v438, 0.125
        %v441 = vpack.c.bf16 %v440, %v439
        %v442 = vld [vmem:[%s376] sm:$0xf]
        %v443 = vld [vmem:[%s376 + $0x4] sm:$0x1]
        %v444 = vld [vmem:[%s383] sm:$0xf]
        %v445 = vld [vmem:[%s383 + $0x4] sm:$0x1]
        %v447 = vperm.slane %v434, 0
        %v451 = vunpack.c.l.b16 %v442
        %v452 = vunpack.c.l.b16 %v443
        %v453 = vpack.c.b16 %v452, %v451
        %vm454 = vcmask 523264
        %v456 = vsel %vm454, %v441, 0
        %v459 = vsel %vm454, %v453, 0
        %461 = vmatpush.bf16.xpose.msra.mxu0 0
        %462 = vmatpush.bf16.xpose.msra.mxu0 0
        %463 = vmatpush.bf16.xpose.msra.mxu0 0
        %464 = vmatpush.bf16.xpose.msra.mxu0 0
        %465 = vmatpush.bf16.xpose.msra.mxu0 0
        %466 = vmatpush.bf16.xpose.msra.mxu0 0
        %467 = vmatpush.bf16.xpose.msra.mxu0 0
        %468 = vmatpush.bf16.xpose.msra.mxu0 %v459
        %469 = vmatmul.bf16.gmra.mxu0 %v456
        %v470 = vpop.f32.mrf.mxu0
        %v471 = vadd.f32 %v447, %v470
        %v472 = vpop.f32.mrf.mxu0
        %v473 = vadd.f32 %v447, %v472
        %474 = vdwg.mxu0
        %vm475 = vcmask 80896
        %v476 = vsel %vm475, %v471, -inf
        %477 = vmax.xlane.f32.xlu0 %v476
        %v478 = vpop.xlane.xlu0 %477
        %vm479 = vcmask 74752
        %v480 = vsel %vm479, %v473, -inf
        %481 = vmax.xlane.f32.xlu0 %v480
        %v482 = vpop.xlane.xlu0 %481
        %v483 = vsub.f32 %v471, %v478
        %v484 = vsub.f32 %v473, %v482
        %v485 = vmul.f32 %v483, 1.442695
        %v486 = vpow.pop %v485
        %v487 = vmul.f32 %v484, 1.442695
        %v488 = vpow.pop %v487
        %v489 = vsel %vm475, %v486, 0.0
        %490 = vadd.xlane.f32.xlu0 %v489
        %v491 = vpop.xlane.xlu0 %490
        %v492 = vsel %vm479, %v488, 0.0
        %493 = vadd.xlane.f32.xlu0 %v492
        %v494 = vpop.xlane.xlu0 %493
        %v495 = vrcp.pop %v491
        %v496 = vrcp.pop %v494
        %v497 = vmul.f32 %v486, %v495
        %v498 = vmul.f32 %v488, %v496
        %v499 = vpack.c.bf16 %v498, %v497
        %v502 = vunpack.c.l.b16 %v444
        %v503 = vunpack.c.l.b16 %v445
        %v504 = vpack.c.b16 %v503, %v502
        %v506 = vsel %vm475, %v499, 0
        %vm508 = vcmask 1044480
        %v510 = vsel %vm508, %v504, 0
        %512 = vmatpush.bf16.msra.mxu0 0
        %513 = vmatpush.bf16.msra.mxu0 0
        %514 = vmatpush.bf16.msra.mxu0 0
        %515 = vmatpush.bf16.msra.mxu0 0
        %516 = vmatpush.bf16.msra.mxu0 0
        %517 = vmatpush.bf16.msra.mxu0 0
        %518 = vmatpush.bf16.msra.mxu0 0
        %519 = vmatpush.bf16.msra.mxu0 %v510
        %520 = vmatmul.bf16.gmra.mxu0 %v506
        %v521 = vpop.f32.mrf.mxu0
        %v522 = vadd.f32 0.0, %v521
        %v523 = vpop.f32.mrf.mxu0
        %v524 = vadd.f32 0.0, %v523
        %525 = vdwg.mxu0
        %v526 = vpack.c.bf16 %v522, %v522
        %v527 = vpack.c.bf16 %v524, %v524
        %vm528 = vcmask 519168
        %529 = vst.msk [vmem:[%s432] sm:$0xf] %vm528, %v526
        %vm530 = vcmask 516096
        %531 = vst.msk [vmem:[%s432 + $0x4] sm:$0x1] %vm530, %v527
        %v532 = vld [vmem:[%s369] sm:$0xf]
        %v533 = vld [vmem:[%s369 + $0x4] sm:$0x1]
        %v534 = vunpack.c.l.bf16 %v532
        %v535 = vunpack.c.l.bf16 %v533
        %v536 = vmul.f32 %v534, 0.125
        %v537 = vmul.f32 %v535, 0.125
        %v538 = vpack.c.bf16 %v537, %v536
        %v539 = vld [vmem:[%s376] sm:$0xf]
        %v540 = vld [vmem:[%s376 + $0x4] sm:$0x1]
        %v541 = vld [vmem:[%s383] sm:$0xf]
        %v542 = vld [vmem:[%s383 + $0x4] sm:$0x1]
        %544 = vrot.lane.b32.xlu0 %v538, 64
        %v545 = vpop.permute.xlu0 %544
        %v548 = vunpack.c.l.b16 %v539
        %v549 = vunpack.c.l.b16 %v540
        %v550 = vpack.c.b16 %v549, %v548
        %551 = vrot.lane.b32.xlu0 %v550, 64
        %v552 = vpop.permute.xlu0 %551
        %v554 = vsel %vm454, %v545, 0
        %v557 = vsel %vm454, %v552, 0
        %559 = vmatpush.bf16.xpose.msra.mxu0 0
        %560 = vmatpush.bf16.xpose.msra.mxu0 0
        %561 = vmatpush.bf16.xpose.msra.mxu0 0
        %562 = vmatpush.bf16.xpose.msra.mxu0 0
        %563 = vmatpush.bf16.xpose.msra.mxu0 0
        %564 = vmatpush.bf16.xpose.msra.mxu0 0
        %565 = vmatpush.bf16.xpose.msra.mxu0 0
        %566 = vmatpush.bf16.xpose.msra.mxu0 %v557
        %567 = vmatmul.bf16.gmra.mxu0 %v554
        %v568 = vpop.f32.mrf.mxu0
        %v569 = vadd.f32 %v447, %v568
        %v570 = vpop.f32.mrf.mxu0
        %v571 = vadd.f32 %v447, %v570
        %572 = vdwg.mxu0
        %v573 = vsel %vm475, %v569, -inf
        %574 = vmax.xlane.f32.xlu0 %v573
        %v575 = vpop.xlane.xlu0 %574
        %v576 = vsel %vm479, %v571, -inf
        %577 = vmax.xlane.f32.xlu0 %v576
        %v578 = vpop.xlane.xlu0 %577
        %v579 = vsub.f32 %v569, %v575
        %v580 = vsub.f32 %v571, %v578
        %v581 = vmul.f32 %v579, 1.442695
        %v582 = vpow.pop %v581
        %v583 = vmul.f32 %v580, 1.442695
        %v584 = vpow.pop %v583
        %v585 = vsel %vm475, %v582, 0.0
        %586 = vadd.xlane.f32.xlu0 %v585
        %v587 = vpop.xlane.xlu0 %586
        %v588 = vsel %vm479, %v584, 0.0
        %589 = vadd.xlane.f32.xlu0 %v588
        %v590 = vpop.xlane.xlu0 %589
        %v591 = vrcp.pop %v587
        %v592 = vrcp.pop %v590
        %v593 = vmul.f32 %v582, %v591
        %v594 = vmul.f32 %v584, %v592
        %v595 = vpack.c.bf16 %v594, %v593
        %v598 = vunpack.c.l.b16 %v541
        %v599 = vunpack.c.l.b16 %v542
        %v600 = vpack.c.b16 %v599, %v598
        %601 = vrot.lane.b32.xlu0 %v600, 64
        %v602 = vpop.permute.xlu0 %601
        %v604 = vsel %vm475, %v595, 0
        %v607 = vsel %vm508, %v602, 0
        %609 = vmatpush.bf16.msra.mxu0 0
        %610 = vmatpush.bf16.msra.mxu0 0
        %611 = vmatpush.bf16.msra.mxu0 0
        %612 = vmatpush.bf16.msra.mxu0 0
        %613 = vmatpush.bf16.msra.mxu0 0
        %614 = vmatpush.bf16.msra.mxu0 0
        %615 = vmatpush.bf16.msra.mxu0 0
        %616 = vmatpush.bf16.msra.mxu0 %v607
        %617 = vmatmul.bf16.gmra.mxu0 %v604
        %v618 = vpop.f32.mrf.mxu0
        %v619 = vadd.f32 0.0, %v618
        %v620 = vpop.f32.mrf.mxu0
        %v621 = vadd.f32 0.0, %v620
        %622 = vdwg.mxu0
        %v623 = vpack.c.bf16 %v619, %v619
        %v624 = vpack.c.bf16 %v621, %v621
        %627 = vrot.lane.b32.xlu0 %v623, 64
        %v628 = vpop.permute.xlu0 %627
        %629 = vrot.lane.b32.xlu0 %v624, 64
        %v630 = vpop.permute.xlu0 %629
        %vm633 = vcmask 1043968
        %634 = vst.msk [vmem:[%s432] sm:$0xf] %vm633, %v628
        %vm635 = vcmask 1040896
        %636 = vst.msk [vmem:[%s432 + $0x4] sm:$0x1] %vm635, %v630
        %p637 = scmp.lt.s32.totalorder %s19, 1
        %s638 = scalar_select %p637, %s19, 1
        %p639 = scmp.lt.s32.totalorder %s20, 0
        %s640 = scalar_select %p639, %s20, 0
        %s641 = smul.addr %s638, 2
        %s642 = sadd.s32 %s640, %s641
        %s643 = smul.addr %s642, 4
        %s644 = scalar_lea.vmem %s4, %s643
        // Predicated region
        $region160: #{bert_like_embedder_forward.14} parent=146 // pred_check
          %p645 = pneg %p161
        $region161: #{bert_like_embedder_forward.14} parent=146 // pred_check_branch
          %647 = sbr.rel (%p645) target = $region163
        $region162: #{bert_like_embedder_forward.14} parent=146 // pred_region
          _
        $region163: #{bert_like_embedder_forward.14} parent=146 // pred_fallthru
          _
      $region147: #{bert_like_embedder_forward.14} parent=5 // pred_fallthru
        _
      %p648 = scmp.le.s32.totalorder 2, %s10
      // Predicated region
      $region164: #{bert_like_embedder_forward.14} parent=5 // pred_check
        %p649 = pneg %p648
      $region165: #{bert_like_embedder_forward.14} parent=5 // pred_check_branch
        %651 = sbr.rel (%p649) target = $region167
      $region166: #{bert_like_embedder_forward.14} parent=5 // pred_region
        %s652 = ssub.s32 %s10, 2
        // Predicated region
        $region168: #{bert_like_embedder_forward.14} parent=166 // pred_check
          %p653 = pneg %p167
        $region169: #{bert_like_embedder_forward.14} parent=166 // pred_check_branch
          %655 = sbr.rel (%p653) target = $region171
        $region170: #{bert_like_embedder_forward.14} parent=166 // pred_region
          %p656 = scmp.lt.s32.totalorder %s21, 1
          %s657 = scalar_select %p656, %s21, 1
          %p658 = scmp.lt.s32.totalorder %s22, 0
          %s659 = scalar_select %p658, %s22, 0
          %s660 = smul.addr %s657, 2
          %s661 = sadd.s32 %s659, %s660
          %s662 = smul.addr %s661, 4
          %s663 = scalar_lea.vmem %s4, %s662
        $region171: #{bert_like_embedder_forward.14} parent=166 // pred_fallthru
          _
      $region167: #{bert_like_embedder_forward.14} parent=5 // pred_fallthru
        _
    $region6: #{bert_like_embedder_forward.14} parent=1 // loop_footer
      %s14 = sadd.s32 1, %s10
    $region7: #{bert_like_embedder_forward.14} parent=1 // loop_footer_branch
      %9 = sbr.rel target = $region3
    $region8: #{bert_like_embedder_forward.14} parent=1 // loop_exit
      _

// kernel: bert_like_embedder_forward.16
$region0: #{bert_like_embedder_forward.16}
  #allocation0 [shape = 'u32[]', space=smem, size = 0x4, offset = 0x4, fixed_abs, tag = 'smem constant byte address 0x4 - core index']
  #allocation1 [shape = 'u32[72,128]{1,0:T(1,128)}', space=vmem, size = 0x9000, scoped, tag = 'internal scratch']
  #allocation2 [shape = 'f32[20,256]{1,0:T(8,128)}', space=vmem, size = 0x6000, scoped, tag = 'scratch operand']
  %s0 = inlined_call_operand.vmem [shape: bf16[20,128], index: 0, kind: input, shape index: {}]
  %s1 = inlined_call_operand.vmem [shape: bf16[128,256], index: 1, kind: input, shape index: {}]
  %s2 = inlined_call_operand.vmem [shape: f32[1,256], index: 2, kind: input, shape index: {}]
  %s3 = inlined_call_operand.vmem [shape: bf16[20,256], index: 3, kind: output, shape index: {}]
  %s4 = sld [smem:[#allocation0]]
  $region30: #{bert_like_embedder_forward.16} parent=0
    _
  %s6 = ssub.s32 1, %s4
  %s7 = scalar_select 0, %s6, %s4
  // Predicated region
  $region2: #{bert_like_embedder_forward.16} parent=0 // pred_check
    _
  $region3: #{bert_like_embedder_forward.16} parent=0 // pred_check_branch
    %9 = sbr.rel (0) target = $region5
  $region4: #{bert_like_embedder_forward.16} parent=0 // pred_region
    _
  $region5: #{bert_like_embedder_forward.16} parent=0 // pred_fallthru
    _
  // Predicated region
  $region6: #{bert_like_embedder_forward.16} parent=0 // pred_check
    _
  $region7: #{bert_like_embedder_forward.16} parent=0 // pred_check_branch
    %11 = sbr.rel (0) target = $region9
  $region8: #{bert_like_embedder_forward.16} parent=0 // pred_region
    _
  $region9: #{bert_like_embedder_forward.16} parent=0 // pred_fallthru
    _
  // Predicated region
  $region10: #{bert_like_embedder_forward.16} parent=0 // pred_check
    _
  $region11: #{bert_like_embedder_forward.16} parent=0 // pred_check_branch
    %13 = sbr.rel (0) target = $region13
  $region12: #{bert_like_embedder_forward.16} parent=0 // pred_region
    _
  $region13: #{bert_like_embedder_forward.16} parent=0 // pred_fallthru
    _
  %p14 = scmp.eq.s32.totalorder 0, 0
  // Predicated region
  $region14: #{bert_like_embedder_forward.16} parent=0 // pred_check
    %p15 = pneg %p14
  $region15: #{bert_like_embedder_forward.16} parent=0 // pred_check_branch
    %17 = sbr.rel (%p15) target = $region17
  $region16: #{bert_like_embedder_forward.16} parent=0 // pred_region
    %18 = vst [vmem:[#allocation2] sm:$0xff] 0.0
    %19 = vst [vmem:[#allocation2 + $0x8] sm:$0xff] 0.0
    %20 = vst [vmem:[#allocation2 + $0x10] sm:$0xff] 0.0
    %21 = vst [vmem:[#allocation2 + $0x18] sm:$0xff] 0.0
    %22 = vst [vmem:[#allocation2 + $0x20] sm:$0xf] 0.0
    %23 = vst [vmem:[#allocation2 + $0x28] sm:$0xf] 0.0
  $region17: #{bert_like_embedder_forward.16} parent=0 // pred_fallthru
    _
  %v24 = vld [vmem:[#allocation2] sm:$0xff]
  %v25 = vld [vmem:[#allocation2 + $0x8] sm:$0xff]
  %v26 = vld [vmem:[#allocation2 + $0x10] sm:$0xff]
  %v27 = vld [vmem:[#allocation2 + $0x18] sm:$0xff]
  %v28 = vld [vmem:[#allocation2 + $0x20] sm:$0xf]
  %v29 = vld [vmem:[#allocation2 + $0x28] sm:$0xf]
  %v30 = vld [vmem:[%s0] sm:$0xf]
  %v31 = vld [vmem:[%s0 + $0x4] sm:$0xf]
  %v32 = vld [vmem:[%s0 + $0x8] sm:$0x3]
  %v33 = vld [vmem:[%s1] sm:$0xff]
  %v34 = vld [vmem:[%s1 + $0x8] sm:$0xff]
  %v35 = vld [vmem:[%s1 + $0x10] sm:$0xff]
  %v36 = vld [vmem:[%s1 + $0x18] sm:$0xff]
  %v37 = vld [vmem:[%s1 + $0x20] sm:$0xff]
  %v38 = vld [vmem:[%s1 + $0x28] sm:$0xff]
  %v39 = vld [vmem:[%s1 + $0x30] sm:$0xff]
  %v40 = vld [vmem:[%s1 + $0x38] sm:$0xff]
  %v41 = vld [vmem:[%s1 + $0x40] sm:$0xff]
  %v42 = vld [vmem:[%s1 + $0x48] sm:$0xff]
  %v43 = vld [vmem:[%s1 + $0x50] sm:$0xff]
  %v44 = vld [vmem:[%s1 + $0x58] sm:$0xff]
  %v45 = vld [vmem:[%s1 + $0x60] sm:$0xff]
  %v46 = vld [vmem:[%s1 + $0x68] sm:$0xff]
  %v47 = vld [vmem:[%s1 + $0x70] sm:$0xff]
  %v48 = vld [vmem:[%s1 + $0x78] sm:$0xff]
  %v52 = vunpack.c.l.b16 %v30
  %v53 = vunpack.c.l.b16 %v31
  %v54 = vunpack.c.l.b16 %v32
  %v55 = vpack.c.b16 %v53, %v52
  %v56 = vpack.c.b16 %v54, %v54
  %v75 = vunpack.c.l.b16 %v33
  %v76 = vunpack.c.h.b16 %v33
  %v77 = vunpack.c.l.b16 %v34
  %v78 = vunpack.c.h.b16 %v34
  %v79 = vunpack.c.l.b16 %v35
  %v80 = vunpack.c.h.b16 %v35
  %v81 = vunpack.c.l.b16 %v36
  %v82 = vunpack.c.h.b16 %v36
  %v83 = vunpack.c.l.b16 %v37
  %v84 = vunpack.c.h.b16 %v37
  %v85 = vunpack.c.l.b16 %v38
  %v86 = vunpack.c.h.b16 %v38
  %v87 = vunpack.c.l.b16 %v39
  %v88 = vunpack.c.h.b16 %v39
  %v89 = vunpack.c.l.b16 %v40
  %v90 = vunpack.c.h.b16 %v40
  %v91 = vunpack.c.l.b16 %v41
  %v92 = vunpack.c.h.b16 %v41
  %v93 = vunpack.c.l.b16 %v42
  %v94 = vunpack.c.h.b16 %v42
  %v95 = vunpack.c.l.b16 %v43
  %v96 = vunpack.c.h.b16 %v43
  %v97 = vunpack.c.l.b16 %v44
  %v98 = vunpack.c.h.b16 %v44
  %v99 = vunpack.c.l.b16 %v45
  %v100 = vunpack.c.h.b16 %v45
  %v101 = vunpack.c.l.b16 %v46
  %v102 = vunpack.c.h.b16 %v46
  %v103 = vunpack.c.l.b16 %v47
  %v104 = vunpack.c.h.b16 %v47
  %v105 = vunpack.c.l.b16 %v48
  %v106 = vunpack.c.h.b16 %v48
  %v107 = vpack.c.b16 %v77, %v75
  %v108 = vpack.c.b16 %v78, %v76
  %v109 = vpack.c.b16 %v81, %v79
  %v110 = vpack.c.b16 %v82, %v80
  %v111 = vpack.c.b16 %v85, %v83
  %v112 = vpack.c.b16 %v86, %v84
  %v113 = vpack.c.b16 %v89, %v87
  %v114 = vpack.c.b16 %v90, %v88
  %v115 = vpack.c.b16 %v93, %v91
  %v116 = vpack.c.b16 %v94, %v92
  %v117 = vpack.c.b16 %v97, %v95
  %v118 = vpack.c.b16 %v98, %v96
  %v119 = vpack.c.b16 %v101, %v99
  %v120 = vpack.c.b16 %v102, %v100
  %v121 = vpack.c.b16 %v105, %v103
  %v122 = vpack.c.b16 %v106, %v104
  %139 = vmatpush.bf16.msra.mxu0 %v121
  %140 = vmatpush.bf16.msra.mxu0 %v119
  %141 = vmatpush.bf16.msra.mxu0 %v117
  %142 = vmatpush.bf16.msra.mxu0 %v115
  %143 = vmatpush.bf16.msra.mxu0 %v113
  %144 = vmatpush.bf16.msra.mxu0 %v111
  %145 = vmatpush.bf16.msra.mxu0 %v109
  %146 = vmatpush.bf16.msra.mxu0 %v107
  %147 = vmatmul.bf16.gmra.mxu0 %v55
  %v148 = vpop.f32.mrf.mxu0
  %v149 = vadd.f32 0.0, %v148
  %v150 = vpop.f32.mrf.mxu0
  %v151 = vadd.f32 0.0, %v150
  %152 = vmatmul.bf16.gmra.mxu0 %v56
  %v153 = vpop.f32.mrf.mxu0
  %v154 = vadd.f32 0.0, %v153
  %v155 = vpop.f32.mrf.mxu0
  %156 = vdwg.mxu0
  %157 = vmatpush.bf16.msra.mxu0 %v122
  %158 = vmatpush.bf16.msra.mxu0 %v120
  %159 = vmatpush.bf16.msra.mxu0 %v118
  %160 = vmatpush.bf16.msra.mxu0 %v116
  %161 = vmatpush.bf16.msra.mxu0 %v114
  %162 = vmatpush.bf16.msra.mxu0 %v112
  %163 = vmatpush.bf16.msra.mxu0 %v110
  %164 = vmatpush.bf16.msra.mxu0 %v108
  %165 = vmatmul.bf16.gmra.mxu0 %v55
  %v166 = vpop.f32.mrf.mxu0
  %v167 = vadd.f32 0.0, %v166
  %v168 = vpop.f32.mrf.mxu0
  %v169 = vadd.f32 0.0, %v168
  %170 = vmatmul.bf16.gmra.mxu0 %v56
  %v171 = vpop.f32.mrf.mxu0
  %v172 = vadd.f32 0.0, %v171
  %v173 = vpop.f32.mrf.mxu0
  %174 = vdwg.mxu0
  %v175 = vadd.f32 %v24, %v149
  %v176 = vadd.f32 %v25, %v167
  %v177 = vadd.f32 %v26, %v151
  %v178 = vadd.f32 %v27, %v169
  %v179 = vadd.f32 %v28, %v154
  %v180 = vadd.f32 %v29, %v172
  %181 = vst [vmem:[#allocation2] sm:$0xff] %v175
  %182 = vst [vmem:[#allocation2 + $0x8] sm:$0xff] %v176
  %183 = vst [vmem:[#allocation2 + $0x10] sm:$0xff] %v177
  %184 = vst [vmem:[#allocation2 + $0x18] sm:$0xff] %v178
  %185 = vst [vmem:[#allocation2 + $0x20] sm:$0xf] %v179
  %186 = vst [vmem:[#allocation2 + $0x28] sm:$0xf] %v180
  // Predicated region
  $region18: #{bert_like_embedder_forward.16} parent=0 // pred_check
    %p187 = pneg %p14
  $region19: #{bert_like_embedder_forward.16} parent=0 // pred_check_branch
    %189 = sbr.rel (%p187) target = $region21
  $region20: #{bert_like_embedder_forward.16} parent=0 // pred_region
    %v190 = vld [vmem:[#allocation2] sm:$0xff]
    %v191 = vld [vmem:[#allocation2 + $0x8] sm:$0xff]
    %v192 = vld [vmem:[#allocation2 + $0x10] sm:$0xff]
    %v193 = vld [vmem:[#allocation2 + $0x18] sm:$0xff]
    %v194 = vld [vmem:[#allocation2 + $0x20] sm:$0xf]
    %v195 = vld [vmem:[#allocation2 + $0x28] sm:$0xf]
    %v196 = vld [vmem:[%s2] sm:$0x3]
    %v198 = vperm.slane %v196, 0
    %v199 = vperm.slane %v196, 1
    %v202 = vadd.f32 %v190, %v198
    %v203 = vadd.f32 %v191, %v199
    %v204 = vadd.f32 %v192, %v198
    %v205 = vadd.f32 %v193, %v199
    %v206 = vadd.f32 %v194, %v198
    %v207 = vadd.f32 %v195, %v199
    %v208 = vmul.f32 %v202, %v202
    %v209 = vmul.f32 %v203, %v203
    %v210 = vmul.f32 %v204, %v204
    %v211 = vmul.f32 %v205, %v205
    %v212 = vmul.f32 %v206, %v206
    %v213 = vmul.f32 %v207, %v207
    %v214 = vmul.f32 %v202, %v208
    %v215 = vmul.f32 %v203, %v209
    %v216 = vmul.f32 %v204, %v210
    %v217 = vmul.f32 %v205, %v211
    %v218 = vmul.f32 %v206, %v212
    %v219 = vmul.f32 %v207, %v213
    %v220 = vmul.f32 %v214, 0.044715
    %v221 = vmul.f32 %v215, 0.044715
    %v222 = vmul.f32 %v216, 0.044715
    %v223 = vmul.f32 %v217, 0.044715
    %v224 = vmul.f32 %v218, 0.044715
    %v225 = vmul.f32 %v219, 0.044715
    %v226 = vadd.f32 %v202, %v220
    %v227 = vadd.f32 %v203, %v221
    %v228 = vadd.f32 %v204, %v222
    %v229 = vadd.f32 %v205, %v223
    %v230 = vadd.f32 %v206, %v224
    %v231 = vadd.f32 %v207, %v225
    %v232 = vmul.f32 %v226, 0.7978846
    %v233 = vmul.f32 %v227, 0.7978846
    %v234 = vmul.f32 %v228, 0.7978846
    %v235 = vmul.f32 %v229, 0.7978846
    %v236 = vmul.f32 %v230, 0.7978846
    %v237 = vmul.f32 %v231, 0.7978846
    %v238 = vtanh.pop %v232
    %v239 = vtanh.pop %v233
    %v240 = vtanh.pop %v234
    %v241 = vtanh.pop %v235
    %v242 = vtanh.pop %v236
    %v243 = vtanh.pop %v237
    %v244 = vadd.f32 %v238, 1.0
    %v245 = vadd.f32 %v239, 1.0
    %v246 = vadd.f32 %v240, 1.0
    %v247 = vadd.f32 %v241, 1.0
    %v248 = vadd.f32 %v242, 1.0
    %v249 = vadd.f32 %v243, 1.0
    %v250 = vmul.f32 %v244, 0.5
    %v251 = vmul.f32 %v245, 0.5
    %v252 = vmul.f32 %v246, 0.5
    %v253 = vmul.f32 %v247, 0.5
    %v254 = vmul.f32 %v248, 0.5
    %v255 = vmul.f32 %v249, 0.5
    %v256 = vmul.f32 %v202, %v250
    %v257 = vmul.f32 %v203, %v251
    %v258 = vmul.f32 %v204, %v252
    %v259 = vmul.f32 %v205, %v253
    %v260 = vmul.f32 %v206, %v254
    %v261 = vmul.f32 %v207, %v255
    %v262 = vpack.c.bf16 %v257, %v256
    %v263 = vpack.c.bf16 %v259, %v258
    %v264 = vpack.c.bf16 %v261, %v260
    %265 = vst [vmem:[%s3] sm:$0xff] %v262
    %266 = vst [vmem:[%s3 + $0x8] sm:$0xff] %v263
    %267 = vst [vmem:[%s3 + $0x10] sm:$0x33] %v264
  $region21: #{bert_like_embedder_forward.16} parent=0 // pred_fallthru
    _
  // Predicated region
  $region22: #{bert_like_embedder_forward.16} parent=0 // pred_check
    _
  $region23: #{bert_like_embedder_forward.16} parent=0 // pred_check_branch
    %269 = sbr.rel (0) target = $region25
  $region24: #{bert_like_embedder_forward.16} parent=0 // pred_region
    _
  $region25: #{bert_like_embedder_forward.16} parent=0 // pred_fallthru
    _
  // Predicated region
  $region26: #{bert_like_embedder_forward.16} parent=0 // pred_check
    _
  $region27: #{bert_like_embedder_forward.16} parent=0 // pred_check_branch
    %271 = sbr.rel (0) target = $region29
  $region28: #{bert_like_embedder_forward.16} parent=0 // pred_region
    _
  $region29: #{bert_like_embedder_forward.16} parent=0 // pred_fallthru
    _

// kernel: bert_like_embedder_forward.17
$region0: #{bert_like_embedder_forward.17}
  #allocation0 [shape = 'u32[]', space=smem, size = 0x4, offset = 0x4, fixed_abs, tag = 'smem constant byte address 0x4 - core index']
  #allocation1 [shape = 'u32[72,128]{1,0:T(1,128)}', space=vmem, size = 0x9000, scoped, tag = 'internal scratch']
  #allocation2 [shape = 'f32[20,128]{1,0:T(8,128)}', space=vmem, size = 0x3000, scoped, tag = 'scratch operand']
  %s0 = inlined_call_operand.vmem [shape: bf16[20,256], index: 0, kind: input, shape index: {}]
  %s1 = inlined_call_operand.vmem [shape: bf16[256,128], index: 1, kind: input, shape index: {}]
  %s2 = inlined_call_operand.vmem [shape: f32[1,128], index: 2, kind: input, shape index: {}]
  %s3 = inlined_call_operand.vmem [shape: bf16[20,128], index: 3, kind: input, shape index: {}]
  %s4 = inlined_call_operand.vmem [shape: f32[1,128], index: 4, kind: input, shape index: {}]
  %s5 = inlined_call_operand.vmem [shape: f32[1,128], index: 5, kind: input, shape index: {}]
  %s6 = inlined_call_operand.vmem [shape: bf16[20,128], index: 6, kind: output, shape index: {}]
  %s7 = sld [smem:[#allocation0]]
  $region42: #{bert_like_embedder_forward.17} parent=0
    _
  %s9 = ssub.s32 1, %s7
  %s10 = scalar_select 0, %s9, %s7
  // Predicated region
  $region2: #{bert_like_embedder_forward.17} parent=0 // pred_check
    _
  $region3: #{bert_like_embedder_forward.17} parent=0 // pred_check_branch
    %12 = sbr.rel (0) target = $region5
  $region4: #{bert_like_embedder_forward.17} parent=0 // pred_region
    _
  $region5: #{bert_like_embedder_forward.17} parent=0 // pred_fallthru
    _
  // Predicated region
  $region6: #{bert_like_embedder_forward.17} parent=0 // pred_check
    _
  $region7: #{bert_like_embedder_forward.17} parent=0 // pred_check_branch
    %14 = sbr.rel (0) target = $region9
  $region8: #{bert_like_embedder_forward.17} parent=0 // pred_region
    _
  $region9: #{bert_like_embedder_forward.17} parent=0 // pred_fallthru
    _
  // Predicated region
  $region10: #{bert_like_embedder_forward.17} parent=0 // pred_check
    _
  $region11: #{bert_like_embedder_forward.17} parent=0 // pred_check_branch
    %16 = sbr.rel (0) target = $region13
  $region12: #{bert_like_embedder_forward.17} parent=0 // pred_region
    _
  $region13: #{bert_like_embedder_forward.17} parent=0 // pred_fallthru
    _
  // Predicated region
  $region14: #{bert_like_embedder_forward.17} parent=0 // pred_check
    _
  $region15: #{bert_like_embedder_forward.17} parent=0 // pred_check_branch
    %18 = sbr.rel (0) target = $region17
  $region16: #{bert_like_embedder_forward.17} parent=0 // pred_region
    _
  $region17: #{bert_like_embedder_forward.17} parent=0 // pred_fallthru
    _
  // Predicated region
  $region18: #{bert_like_embedder_forward.17} parent=0 // pred_check
    _
  $region19: #{bert_like_embedder_forward.17} parent=0 // pred_check_branch
    %20 = sbr.rel (0) target = $region21
  $region20: #{bert_like_embedder_forward.17} parent=0 // pred_region
    _
  $region21: #{bert_like_embedder_forward.17} parent=0 // pred_fallthru
    _
  // Predicated region
  $region22: #{bert_like_embedder_forward.17} parent=0 // pred_check
    _
  $region23: #{bert_like_embedder_forward.17} parent=0 // pred_check_branch
    %22 = sbr.rel (0) target = $region25
  $region24: #{bert_like_embedder_forward.17} parent=0 // pred_region
    _
  $region25: #{bert_like_embedder_forward.17} parent=0 // pred_fallthru
    _
  %p23 = scmp.eq.s32.totalorder 0, 0
  // Predicated region
  $region26: #{bert_like_embedder_forward.17} parent=0 // pred_check
    %p24 = pneg %p23
  $region27: #{bert_like_embedder_forward.17} parent=0 // pred_check_branch
    %26 = sbr.rel (%p24) target = $region29
  $region28: #{bert_like_embedder_forward.17} parent=0 // pred_region
    %27 = vst [vmem:[#allocation2] sm:$0xff] 0.0
    %28 = vst [vmem:[#allocation2 + $0x8] sm:$0xff] 0.0
    %29 = vst [vmem:[#allocation2 + $0x10] sm:$0xf] 0.0
  $region29: #{bert_like_embedder_forward.17} parent=0 // pred_fallthru
    _
  %v30 = vld [vmem:[#allocation2] sm:$0xff]
  %v31 = vld [vmem:[#allocation2 + $0x8] sm:$0xff]
  %v32 = vld [vmem:[#allocation2 + $0x10] sm:$0xf]
  %v33 = vld [vmem:[%s0] sm:$0xff]
  %v34 = vld [vmem:[%s0 + $0x8] sm:$0xff]
  %v35 = vld [vmem:[%s0 + $0x10] sm:$0x33]
  %v36 = vld [vmem:[%s1] sm:$0xf]
  %v37 = vld [vmem:[%s1 + $0x4] sm:$0xf]
  %v38 = vld [vmem:[%s1 + $0x8] sm:$0xf]
  %v39 = vld [vmem:[%s1 + $0xc] sm:$0xf]
  %v40 = vld [vmem:[%s1 + $0x10] sm:$0xf]
  %v41 = vld [vmem:[%s1 + $0x14] sm:$0xf]
  %v42 = vld [vmem:[%s1 + $0x18] sm:$0xf]
  %v43 = vld [vmem:[%s1 + $0x1c] sm:$0xf]
  %v44 = vld [vmem:[%s1 + $0x20] sm:$0xf]
  %v45 = vld [vmem:[%s1 + $0x24] sm:$0xf]
  %v46 = vld [vmem:[%s1 + $0x28] sm:$0xf]
  %v47 = vld [vmem:[%s1 + $0x2c] sm:$0xf]
  %v48 = vld [vmem:[%s1 + $0x30] sm:$0xf]
  %v49 = vld [vmem:[%s1 + $0x34] sm:$0xf]
  %v50 = vld [vmem:[%s1 + $0x38] sm:$0xf]
  %v51 = vld [vmem:[%s1 + $0x3c] sm:$0xf]
  %v52 = vld [vmem:[%s1 + $0x40] sm:$0xf]
  %v53 = vld [vmem:[%s1 + $0x44] sm:$0xf]
  %v54 = vld [vmem:[%s1 + $0x48] sm:$0xf]
  %v55 = vld [vmem:[%s1 + $0x4c] sm:$0xf]
  %v56 = vld [vmem:[%s1 + $0x50] sm:$0xf]
  %v57 = vld [vmem:[%s1 + $0x54] sm:$0xf]
  %v58 = vld [vmem:[%s1 + $0x58] sm:$0xf]
  %v59 = vld [vmem:[%s1 + $0x5c] sm:$0xf]
  %v60 = vld [vmem:[%s1 + $0x60] sm:$0xf]
  %v61 = vld [vmem:[%s1 + $0x64] sm:$0xf]
  %v62 = vld [vmem:[%s1 + $0x68] sm:$0xf]
  %v63 = vld [vmem:[%s1 + $0x6c] sm:$0xf]
  %v64 = vld [vmem:[%s1 + $0x70] sm:$0xf]
  %v65 = vld [vmem:[%s1 + $0x74] sm:$0xf]
  %v66 = vld [vmem:[%s1 + $0x78] sm:$0xf]
  %v67 = vld [vmem:[%s1 + $0x7c] sm:$0xf]
  %v71 = vunpack.c.l.b16 %v33
  %v72 = vunpack.c.h.b16 %v33
  %v73 = vunpack.c.l.b16 %v34
  %v74 = vunpack.c.h.b16 %v34
  %v75 = vunpack.c.l.b16 %v35
  %v76 = vunpack.c.h.b16 %v35
  %v77 = vpack.c.b16 %v73, %v71
  %v78 = vpack.c.b16 %v74, %v72
  %v79 = vpack.c.b16 %v75, %v75
  %v80 = vpack.c.b16 %v76, %v76
  %v117 = vunpack.c.l.b16 %v36
  %v118 = vunpack.c.l.b16 %v37
  %v119 = vunpack.c.l.b16 %v38
  %v120 = vunpack.c.l.b16 %v39
  %v121 = vunpack.c.l.b16 %v40
  %v122 = vunpack.c.l.b16 %v41
  %v123 = vunpack.c.l.b16 %v42
  %v124 = vunpack.c.l.b16 %v43
  %v125 = vunpack.c.l.b16 %v44
  %v126 = vunpack.c.l.b16 %v45
  %v127 = vunpack.c.l.b16 %v46
  %v128 = vunpack.c.l.b16 %v47
  %v129 = vunpack.c.l.b16 %v48
  %v130 = vunpack.c.l.b16 %v49
  %v131 = vunpack.c.l.b16 %v50
  %v132 = vunpack.c.l.b16 %v51
  %v133 = vunpack.c.l.b16 %v52
  %v134 = vunpack.c.l.b16 %v53
  %v135 = vunpack.c.l.b16 %v54
  %v136 = vunpack.c.l.b16 %v55
  %v137 = vunpack.c.l.b16 %v56
  %v138 = vunpack.c.l.b16 %v57
  %v139 = vunpack.c.l.b16 %v58
  %v140 = vunpack.c.l.b16 %v59
  %v141 = vunpack.c.l.b16 %v60
  %v142 = vunpack.c.l.b16 %v61
  %v143 = vunpack.c.l.b16 %v62
  %v144 = vunpack.c.l.b16 %v63
  %v145 = vunpack.c.l.b16 %v64
  %v146 = vunpack.c.l.b16 %v65
  %v147 = vunpack.c.l.b16 %v66
  %v148 = vunpack.c.l.b16 %v67
  %v149 = vpack.c.b16 %v118, %v117
  %v150 = vpack.c.b16 %v120, %v119
  %v151 = vpack.c.b16 %v122, %v121
  %v152 = vpack.c.b16 %v124, %v123
  %v153 = vpack.c.b16 %v126, %v125
  %v154 = vpack.c.b16 %v128, %v127
  %v155 = vpack.c.b16 %v130, %v129
  %v156 = vpack.c.b16 %v132, %v131
  %v157 = vpack.c.b16 %v134, %v133
  %v158 = vpack.c.b16 %v136, %v135
  %v159 = vpack.c.b16 %v138, %v137
  %v160 = vpack.c.b16 %v140, %v139
  %v161 = vpack.c.b16 %v142, %v141
  %v162 = vpack.c.b16 %v144, %v143
  %v163 = vpack.c.b16 %v146, %v145
  %v164 = vpack.c.b16 %v148, %v147
  %181 = vmatpush.bf16.msra.mxu0 %v156
  %182 = vmatpush.bf16.msra.mxu0 %v155
  %183 = vmatpush.bf16.msra.mxu0 %v154
  %184 = vmatpush.bf16.msra.mxu0 %v153
  %185 = vmatpush.bf16.msra.mxu0 %v152
  %186 = vmatpush.bf16.msra.mxu0 %v151
  %187 = vmatpush.bf16.msra.mxu0 %v150
  %188 = vmatpush.bf16.msra.mxu0 %v149
  %189 = vmatmul.bf16.gmra.mxu0 %v77
  %v190 = vpop.f32.mrf.mxu0
  %v191 = vadd.f32 0.0, %v190
  %v192 = vpop.f32.mrf.mxu0
  %v193 = vadd.f32 0.0, %v192
  %194 = vmatmul.bf16.gmra.mxu0 %v79
  %v195 = vpop.f32.mrf.mxu0
  %v196 = vadd.f32 0.0, %v195
  %v197 = vpop.f32.mrf.mxu0
  %198 = vdwg.mxu0
  %199 = vmatpush.bf16.msra.mxu0 %v164
  %200 = vmatpush.bf16.msra.mxu0 %v163
  %201 = vmatpush.bf16.msra.mxu0 %v162
  %202 = vmatpush.bf16.msra.mxu0 %v161
  %203 = vmatpush.bf16.msra.mxu0 %v160
  %204 = vmatpush.bf16.msra.mxu0 %v159
  %205 = vmatpush.bf16.msra.mxu0 %v158
  %206 = vmatpush.bf16.msra.mxu0 %v157
  %207 = vmatmul.bf16.gmra.mxu0 %v78
  %v208 = vpop.f32.mrf.mxu0
  %v209 = vadd.f32 %v191, %v208
  %v210 = vpop.f32.mrf.mxu0
  %v211 = vadd.f32 %v193, %v210
  %212 = vmatmul.bf16.gmra.mxu0 %v80
  %v213 = vpop.f32.mrf.mxu0
  %v214 = vadd.f32 %v196, %v213
  %v215 = vpop.f32.mrf.mxu0
  %216 = vdwg.mxu0
  %v217 = vadd.f32 %v30, %v209
  %v218 = vadd.f32 %v31, %v211
  %v219 = vadd.f32 %v32, %v214
  %220 = vst [vmem:[#allocation2] sm:$0xff] %v217
  %221 = vst [vmem:[#allocation2 + $0x8] sm:$0xff] %v218
  %222 = vst [vmem:[#allocation2 + $0x10] sm:$0xf] %v219
  // Predicated region
  $region30: #{bert_like_embedder_forward.17} parent=0 // pred_check
    %p223 = pneg %p23
  $region31: #{bert_like_embedder_forward.17} parent=0 // pred_check_branch
    %225 = sbr.rel (%p223) target = $region33
  $region32: #{bert_like_embedder_forward.17} parent=0 // pred_region
    %v226 = vld [vmem:[#allocation2] sm:$0xff]
    %v227 = vld [vmem:[#allocation2 + $0x8] sm:$0xff]
    %v228 = vld [vmem:[#allocation2 + $0x10] sm:$0xf]
    %v229 = vld [vmem:[%s2] sm:$0x1]
    %v231 = vperm.slane %v229, 0
    %v233 = vadd.f32 %v226, %v231
    %v234 = vadd.f32 %v227, %v231
    %v235 = vadd.f32 %v228, %v231
    %v236 = vld [vmem:[%s3] sm:$0xf]
    %v237 = vld [vmem:[%s3 + $0x4] sm:$0xf]
    %v238 = vld [vmem:[%s3 + $0x8] sm:$0x3]
    %v239 = vunpack.c.l.bf16 %v236
    %v240 = vunpack.c.l.bf16 %v237
    %v241 = vunpack.c.l.bf16 %v238
    %v242 = vadd.f32 %v233, %v239
    %v243 = vadd.f32 %v234, %v240
    %v244 = vadd.f32 %v235, %v241
    %245 = vadd.xlane.f32.xlu0 %v242
    %v246 = vpop.xlane.xlu0 %245
    %247 = vadd.xlane.f32.xlu0 %v243
    %v248 = vpop.xlane.xlu0 %247
    %vm249 = vcmask 1043456
    %v250 = vsel %vm249, %v244, 0.0
    %251 = vadd.xlane.f32.xlu0 %v250
    %v252 = vpop.xlane.xlu0 %251
    %v253 = vrcp.pop 128.0
    %v254 = vmul.f32 128.0, %v253
    %v255 = vsub.f32 1.0, %v254
    %v256 = vmul.f32 %v253, %v255
    %v257 = vadd.f32 %v253, %v256
    %vm258 = vweird.f32 %v253
    %v259 = vsel %vm258, %v253, %v257
    %v260 = vmul.f32 %v246, %v259
    %v261 = vmul.f32 %v248, %v259
    %v262 = vmul.f32 %v252, %v259
    %v263 = vsub.f32 %v242, %v260
    %v264 = vsub.f32 %v243, %v261
    %v265 = vsub.f32 %v244, %v262
    %v266 = vmul.f32 %v263, %v263
    %v267 = vmul.f32 %v264, %v264
    %v268 = vmul.f32 %v265, %v265
    %269 = vadd.xlane.f32.xlu0 %v266
    %v270 = vpop.xlane.xlu0 %269
    %271 = vadd.xlane.f32.xlu0 %v267
    %v272 = vpop.xlane.xlu0 %271
    %v273 = vsel %vm249, %v268, 0.0
    %274 = vadd.xlane.f32.xlu0 %v273
    %v275 = vpop.xlane.xlu0 %274
    %v276 = vmul.f32 %v270, %v259
    %v277 = vmul.f32 %v272, %v259
    %v278 = vmul.f32 %v275, %v259
    %v279 = vadd.f32 %v276, 1e-12
    %v280 = vadd.f32 %v277, 1e-12
    %v281 = vadd.f32 %v278, 1e-12
    %v282 = vrsqrt.pop %v279
    %v283 = vmul.f32 %v282, %v279
    %v284 = vmul.f32 %v283, %v282
    %v285 = vmul.f32 0.5, %v284
    %v286 = vsub.f32 1.5, %v285
    %v287 = vmul.f32 %v282, %v286
    %vm288 = vweird.f32 %v279
    %vm289 = vweird.f32 %v282
    %vm290 = vmor %vm288, %vm289
    %v291 = vsel %vm290, %v282, %v287
    %v292 = vrsqrt.pop %v280
    %v293 = vmul.f32 %v292, %v280
    %v294 = vmul.f32 %v293, %v292
    %v295 = vmul.f32 0.5, %v294
    %v296 = vsub.f32 1.5, %v295
    %v297 = vmul.f32 %v292, %v296
    %vm298 = vweird.f32 %v280
    %vm299 = vweird.f32 %v292
    %vm300 = vmor %vm298, %vm299
    %v301 = vsel %vm300, %v292, %v297
    %v302 = vrsqrt.pop %v281
    %v303 = vmul.f32 %v302, %v281
    %v304 = vmul.f32 %v303, %v302
    %v305 = vmul.f32 0.5, %v304
    %v306 = vsub.f32 1.5, %v305
    %v307 = vmul.f32 %v302, %v306
    %vm308 = vweird.f32 %v281
    %vm309 = vweird.f32 %v302
    %vm310 = vmor %vm308, %vm309
    %v311 = vsel %vm310, %v302, %v307
    %v312 = vmul.f32 %v263, %v291
    %v313 = vmul.f32 %v264, %v301
    %v314 = vmul.f32 %v265, %v311
    %v315 = vld [vmem:[%s4] sm:$0x1]
    %v317 = vperm.slane %v315, 0
    %v319 = vmul.f32 %v312, %v317
    %v320 = vmul.f32 %v313, %v317
    %v321 = vmul.f32 %v314, %v317
    %v322 = vld [vmem:[%s5] sm:$0x1]
    %v324 = vperm.slane %v322, 0
    %v326 = vadd.f32 %v319, %v324
    %v327 = vadd.f32 %v320, %v324
    %v328 = vadd.f32 %v321, %v324
    %v329 = vpack.c.bf16 %v326, %v326
    %v330 = vpack.c.bf16 %v327, %v327
    %v331 = vpack.c.bf16 %v328, %v328
    %332 = vst [vmem:[%s6] sm:$0xf] %v329
    %333 = vst [vmem:[%s6 + $0x4] sm:$0xf] %v330
    %334 = vst [vmem:[%s6 + $0x8] sm:$0x3] %v331
  $region33: #{bert_like_embedder_forward.17} parent=0 // pred_fallthru
    _
  // Predicated region
  $region34: #{bert_like_embedder_forward.17} parent=0 // pred_check
    _
  $region35: #{bert_like_embedder_forward.17} parent=0 // pred_check_branch
    %336 = sbr.rel (0) target = $region37
  $region36: #{bert_like_embedder_forward.17} parent=0 // pred_region
    _
  $region37: #{bert_like_embedder_forward.17} parent=0 // pred_fallthru
    _
  // Predicated region
  $region38: #{bert_like_embedder_forward.17} parent=0 // pred_check
    _
  $region39: #{bert_like_embedder_forward.17} parent=0 // pred_check_branch
    %338 = sbr.rel (0) target = $region41
  $region40: #{bert_like_embedder_forward.17} parent=0 // pred_region
    _
  $region41: #{bert_like_embedder_forward.17} parent=0 // pred_fallthru
    _

// kernel: bert_like_embedder_forward.18
$region0: #{bert_like_embedder_forward.18}
  #allocation0 [shape = 'u32[]', space=smem, size = 0x4, offset = 0x4, fixed_abs, tag = 'smem constant byte address 0x4 - core index']
  #allocation1 [shape = 'u32[72,128]{1,0:T(1,128)}', space=vmem, size = 0x9000, scoped, tag = 'internal scratch']
  #allocation2 [shape = 'f32[20,384]{1,0:T(8,128)}', space=vmem, size = 0x9000, scoped, tag = 'scratch operand']
  %s0 = inlined_call_operand.vmem [shape: bf16[20,128], index: 0, kind: input, shape index: {}]
  %s1 = inlined_call_operand.hbm [shape: bf16[128,384], index: 1, kind: input, shape index: {}]
  %s2 = inlined_call_operand.vmem [shape: f32[1,384], index: 2, kind: input, shape index: {}]
  %s3 = inlined_call_operand.vmem [shape: bf16[20,384], index: 3, kind: output, shape index: {}]
  %s4 = sld [smem:[#allocation0]]
  $region34: #{bert_like_embedder_forward.18} parent=0
    _
  %s6 = ssub.s32 1, %s4
  %s7 = scalar_select 0, %s6, %s4
  $region1: #{bert_like_embedder_forward.18} parent=0
    #allocation3 [shape = 'u8[98304]{0}', space=vmem, size = 0x18000, scoped, tag = 'input window, operand 1, single buffered']
    #allocation4 [shape = 's32[1]{0}', space=sflag, size = 0x4, scoped, tag = 'scoped memory for bert_like_embedder_forward.18']
    %8 = vsyncpa [#allocation4], 0
    // Predicated region
    $region2: #{bert_like_embedder_forward.18} parent=1 // pred_check
      _
    $region3: #{bert_like_embedder_forward.18} parent=1 // pred_check_branch
      %10 = sbr.rel (0) target = $region5
    $region4: #{bert_like_embedder_forward.18} parent=1 // pred_region
      _
    $region5: #{bert_like_embedder_forward.18} parent=1 // pred_fallthru
      _
    // Predicated region
    $region6: #{bert_like_embedder_forward.18} parent=1 // pred_check
      _
    $region7: #{bert_like_embedder_forward.18} parent=1 // pred_check_branch
      %12 = sbr.rel (0) target = $region9
    $region8: #{bert_like_embedder_forward.18} parent=1 // pred_region
      %14 = vsyncadd [#allocation4], 0
      %s15 = sshll.u32 %s1, 4
      %s16 = int_to_ptr.hbm [resolvable:$true] %s15
      %s17 = sshll.u32 [#allocation3], 4
      %s18 = int_to_ptr.vmem [resolvable:$true] %s17
      %23 = dma.hbm_to_vmem [thread:$0]  %s16, 3072, %s18, [#allocation4], 192, 192, 12
    $region9: #{bert_like_embedder_forward.18} parent=1 // pred_fallthru
      _
    // Predicated region
    $region10: #{bert_like_embedder_forward.18} parent=1 // pred_check
      _
    $region11: #{bert_like_embedder_forward.18} parent=1 // pred_check_branch
      %25 = sbr.rel (0) target = $region13
    $region12: #{bert_like_embedder_forward.18} parent=1 // pred_region
      _
    $region13: #{bert_like_embedder_forward.18} parent=1 // pred_fallthru
      _
    // Predicated region
    $region14: #{bert_like_embedder_forward.18} parent=1 // pred_check
      _
    $region15: #{bert_like_embedder_forward.18} parent=1 // pred_check_branch
      %27 = sbr.rel (0) target = $region17
    $region16: #{bert_like_embedder_forward.18} parent=1 // pred_region
      %29 = dma.done [#allocation4], 3072
    $region17: #{bert_like_embedder_forward.18} parent=1 // pred_fallthru
      _
    %p30 = scmp.eq.s32.totalorder 0, 0
    // Predicated region
    $region18: #{bert_like_embedder_forward.18} parent=1 // pred_check
      %p31 = pneg %p30
    $region19: #{bert_like_embedder_forward.18} parent=1 // pred_check_branch
      %33 = sbr.rel (%p31) target = $region21
    $region20: #{bert_like_embedder_forward.18} parent=1 // pred_region
      %34 = vst [vmem:[#allocation2] sm:$0xff] 0.0
      %35 = vst [vmem:[#allocation2 + $0x8] sm:$0xff] 0.0
      %36 = vst [vmem:[#allocation2 + $0x10] sm:$0xff] 0.0
      %37 = vst [vmem:[#allocation2 + $0x18] sm:$0xff] 0.0
      %38 = vst [vmem:[#allocation2 + $0x20] sm:$0xff] 0.0
      %39 = vst [vmem:[#allocation2 + $0x28] sm:$0xff] 0.0
      %40 = vst [vmem:[#allocation2 + $0x30] sm:$0xf] 0.0
      %41 = vst [vmem:[#allocation2 + $0x38] sm:$0xf] 0.0
      %42 = vst [vmem:[#allocation2 + $0x40] sm:$0xf] 0.0
    $region21: #{bert_like_embedder_forward.18} parent=1 // pred_fallthru
      _
    %v43 = vld [vmem:[#allocation2] sm:$0xff]
    %v44 = vld [vmem:[#allocation2 + $0x8] sm:$0xff]
    %v45 = vld [vmem:[#allocation2 + $0x10] sm:$0xff]
    %v46 = vld [vmem:[#allocation2 + $0x18] sm:$0xff]
    %v47 = vld [vmem:[#allocation2 + $0x20] sm:$0xff]
    %v48 = vld [vmem:[#allocation2 + $0x28] sm:$0xff]
    %v49 = vld [vmem:[#allocation2 + $0x30] sm:$0xf]
    %v50 = vld [vmem:[#allocation2 + $0x38] sm:$0xf]
    %v51 = vld [vmem:[#allocation2 + $0x40] sm:$0xf]
    %v52 = vld [vmem:[%s0] sm:$0xf]
    %v53 = vld [vmem:[%s0 + $0x4] sm:$0xf]
    %v54 = vld [vmem:[%s0 + $0x8] sm:$0x3]
    %v55 = vld [vmem:[#allocation3] sm:$0xff]
    %v56 = vld [vmem:[#allocation3 + $0x8] sm:$0xf]
    %v57 = vld [vmem:[#allocation3 + $0xc] sm:$0xff]
    %v58 = vld [vmem:[#allocation3 + $0x14] sm:$0xf]
    %v59 = vld [vmem:[#allocation3 + $0x18] sm:$0xff]
    %v60 = vld [vmem:[#allocation3 + $0x20] sm:$0xf]
    %v61 = vld [vmem:[#allocation3 + $0x24] sm:$0xff]
    %v62 = vld [vmem:[#allocation3 + $0x2c] sm:$0xf]
    %v63 = vld [vmem:[#allocation3 + $0x30] sm:$0xff]
    %v64 = vld [vmem:[#allocation3 + $0x38] sm:$0xf]
    %v65 = vld [vmem:[#allocation3 + $0x3c] sm:$0xff]
    %v66 = vld [vmem:[#allocation3 + $0x44] sm:$0xf]
    %v67 = vld [vmem:[#allocation3 + $0x48] sm:$0xff]
    %v68 = vld [vmem:[#allocation3 + $0x50] sm:$0xf]
    %v69 = vld [vmem:[#allocation3 + $0x54] sm:$0xff]
    %v70 = vld [vmem:[#allocation3 + $0x5c] sm:$0xf]
    %v71 = vld [vmem:[#allocation3 + $0x60] sm:$0xff]
    %v72 = vld [vmem:[#allocation3 + $0x68] sm:$0xf]
    %v73 = vld [vmem:[#allocation3 + $0x6c] sm:$0xff]
    %v74 = vld [vmem:[#allocation3 + $0x74] sm:$0xf]
    %v75 = vld [vmem:[#allocation3 + $0x78] sm:$0xff]
    %v76 = vld [vmem:[#allocation3 + $0x80] sm:$0xf]
    %v77 = vld [vmem:[#allocation3 + $0x84] sm:$0xff]
    %v78 = vld [vmem:[#allocation3 + $0x8c] sm:$0xf]
    %v79 = vld [vmem:[#allocation3 + $0x90] sm:$0xff]
    %v80 = vld [vmem:[#allocation3 + $0x98] sm:$0xf]
    %v81 = vld [vmem:[#allocation3 + $0x9c] sm:$0xff]
    %v82 = vld [vmem:[#allocation3 + $0xa4] sm:$0xf]
    %v83 = vld [vmem:[#allocation3 + $0xa8] sm:$0xff]
    %v84 = vld [vmem:[#allocation3 + $0xb0] sm:$0xf]
    %v85 = vld [vmem:[#allocation3 + $0xb4] sm:$0xff]
    %v86 = vld [vmem:[#allocation3 + $0xbc] sm:$0xf]
    %v90 = vunpack.c.l.b16 %v52
    %v91 = vunpack.c.l.b16 %v53
    %v92 = vunpack.c.l.b16 %v54
    %v93 = vpack.c.b16 %v91, %v90
    %v94 = vpack.c.b16 %v92, %v92
    %v129 = vunpack.c.l.b16 %v55
    %v130 = vunpack.c.h.b16 %v55
    %v131 = vunpack.c.l.b16 %v56
    %v132 = vunpack.c.l.b16 %v57
    %v133 = vunpack.c.h.b16 %v57
    %v134 = vunpack.c.l.b16 %v58
    %v135 = vunpack.c.l.b16 %v59
    %v136 = vunpack.c.h.b16 %v59
    %v137 = vunpack.c.l.b16 %v60
    %v138 = vunpack.c.l.b16 %v61
    %v139 = vunpack.c.h.b16 %v61
    %v140 = vunpack.c.l.b16 %v62
    %v141 = vunpack.c.l.b16 %v63
    %v142 = vunpack.c.h.b16 %v63
    %v143 = vunpack.c.l.b16 %v64
    %v144 = vunpack.c.l.b16 %v65
    %v145 = vunpack.c.h.b16 %v65
    %v146 = vunpack.c.l.b16 %v66
    %v147 = vunpack.c.l.b16 %v67
    %v148 = vunpack.c.h.b16 %v67
    %v149 = vunpack.c.l.b16 %v68
    %v150 = vunpack.c.l.b16 %v69
    %v151 = vunpack.c.h.b16 %v69
    %v152 = vunpack.c.l.b16 %v70
    %v153 = vunpack.c.l.b16 %v71
    %v154 = vunpack.c.h.b16 %v71
    %v155 = vunpack.c.l.b16 %v72
    %v156 = vunpack.c.l.b16 %v73
    %v157 = vunpack.c.h.b16 %v73
    %v158 = vunpack.c.l.b16 %v74
    %v159 = vunpack.c.l.b16 %v75
    %v160 = vunpack.c.h.b16 %v75
    %v161 = vunpack.c.l.b16 %v76
    %v162 = vunpack.c.l.b16 %v77
    %v163 = vunpack.c.h.b16 %v77
    %v164 = vunpack.c.l.b16 %v78
    %v165 = vunpack.c.l.b16 %v79
    %v166 = vunpack.c.h.b16 %v79
    %v167 = vunpack.c.l.b16 %v80
    %v168 = vunpack.c.l.b16 %v81
    %v169 = vunpack.c.h.b16 %v81
    %v170 = vunpack.c.l.b16 %v82
    %v171 = vunpack.c.l.b16 %v83
    %v172 = vunpack.c.h.b16 %v83
    %v173 = vunpack.c.l.b16 %v84
    %v174 = vunpack.c.l.b16 %v85
    %v175 = vunpack.c.h.b16 %v85
    %v176 = vunpack.c.l.b16 %v86
    %v177 = vpack.c.b16 %v132, %v129
    %v178 = vpack.c.b16 %v133, %v130
    %v179 = vpack.c.b16 %v134, %v131
    %v180 = vpack.c.b16 %v138, %v135
    %v181 = vpack.c.b16 %v139, %v136
    %v182 = vpack.c.b16 %v140, %v137
    %v183 = vpack.c.b16 %v144, %v141
    %v184 = vpack.c.b16 %v145, %v142
    %v185 = vpack.c.b16 %v146, %v143
    %v186 = vpack.c.b16 %v150, %v147
    %v187 = vpack.c.b16 %v151, %v148
    %v188 = vpack.c.b16 %v152, %v149
    %v189 = vpack.c.b16 %v156, %v153
    %v190 = vpack.c.b16 %v157, %v154
    %v191 = vpack.c.b16 %v158, %v155
    %v192 = vpack.c.b16 %v162, %v159
    %v193 = vpack.c.b16 %v163, %v160
    %v194 = vpack.c.b16 %v164, %v161
    %v195 = vpack.c.b16 %v168, %v165
    %v196 = vpack.c.b16 %v169, %v166
    %v197 = vpack.c.b16 %v170, %v167
    %v198 = vpack.c.b16 %v174, %v171
    %v199 = vpack.c.b16 %v175, %v172
    %v200 = vpack.c.b16 %v176, %v173
    %225 = vmatpush.bf16.msra.mxu0 %v198
    %226 = vmatpush.bf16.msra.mxu0 %v195
    %227 = vmatpush.bf16.msra.mxu0 %v192
    %228 = vmatpush.bf16.msra.mxu0 %v189
    %229 = vmatpush.bf16.msra.mxu0 %v186
    %230 = vmatpush.bf16.msra.mxu0 %v183
    %231 = vmatpush.bf16.msra.mxu0 %v180
    %232 = vmatpush.bf16.msra.mxu0 %v177
    %233 = vmatmul.bf16.gmra.mxu0 %v93
    %v234 = vpop.f32.mrf.mxu0
    %v235 = vadd.f32 0.0, %v234
    %v236 = vpop.f32.mrf.mxu0
    %v237 = vadd.f32 0.0, %v236
    %238 = vmatmul.bf16.gmra.mxu0 %v94
    %v239 = vpop.f32.mrf.mxu0
    %v240 = vadd.f32 0.0, %v239
    %v241 = vpop.f32.mrf.mxu0
    %242 = vdwg.mxu0
    %243 = vmatpush.bf16.msra.mxu0 %v199
    %244 = vmatpush.bf16.msra.mxu0 %v196
    %245 = vmatpush.bf16.msra.mxu0 %v193
    %246 = vmatpush.bf16.msra.mxu0 %v190
    %247 = vmatpush.bf16.msra.mxu0 %v187
    %248 = vmatpush.bf16.msra.mxu0 %v184
    %249 = vmatpush.bf16.msra.mxu0 %v181
    %250 = vmatpush.bf16.msra.mxu0 %v178
    %251 = vmatmul.bf16.gmra.mxu0 %v93
    %v252 = vpop.f32.mrf.mxu0
    %v253 = vadd.f32 0.0, %v252
    %v254 = vpop.f32.mrf.mxu0
    %v255 = vadd.f32 0.0, %v254
    %256 = vmatmul.bf16.gmra.mxu0 %v94
    %v257 = vpop.f32.mrf.mxu0
    %v258 = vadd.f32 0.0, %v257
    %v259 = vpop.f32.mrf.mxu0
    %260 = vdwg.mxu0
    %261 = vmatpush.bf16.msra.mxu0 %v200
    %262 = vmatpush.bf16.msra.mxu0 %v197
    %263 = vmatpush.bf16.msra.mxu0 %v194
    %264 = vmatpush.bf16.msra.mxu0 %v191
    %265 = vmatpush.bf16.msra.mxu0 %v188
    %266 = vmatpush.bf16.msra.mxu0 %v185
    %267 = vmatpush.bf16.msra.mxu0 %v182
    %268 = vmatpush.bf16.msra.mxu0 %v179
    %269 = vmatmul.bf16.gmra.mxu0 %v93
    %v270 = vpop.f32.mrf.mxu0
    %v271 = vadd.f32 0.0, %v270
    %v272 = vpop.f32.mrf.mxu0
    %v273 = vadd.f32 0.0, %v272
    %274 = vmatmul.bf16.gmra.mxu0 %v94
    %v275 = vpop.f32.mrf.mxu0
    %v276 = vadd.f32 0.0, %v275
    %v277 = vpop.f32.mrf.mxu0
    %278 = vdwg.mxu0
    %v279 = vadd.f32 %v43, %v235
    %v280 = vadd.f32 %v44, %v253
    %v281 = vadd.f32 %v45, %v271
    %v282 = vadd.f32 %v46, %v237
    %v283 = vadd.f32 %v47, %v255
    %v284 = vadd.f32 %v48, %v273
    %v285 = vadd.f32 %v49, %v240
    %v286 = vadd.f32 %v50, %v258
    %v287 = vadd.f32 %v51, %v276
    %288 = vst [vmem:[#allocation2] sm:$0xff] %v279
    %289 = vst [vmem:[#allocation2 + $0x8] sm:$0xff] %v280
    %290 = vst [vmem:[#allocation2 + $0x10] sm:$0xff] %v281
    %291 = vst [vmem:[#allocation2 + $0x18] sm:$0xff] %v282
    %292 = vst [vmem:[#allocation2 + $0x20] sm:$0xff] %v283
    %293 = vst [vmem:[#allocation2 + $0x28] sm:$0xff] %v284
    %294 = vst [vmem:[#allocation2 + $0x30] sm:$0xf] %v285
    %295 = vst [vmem:[#allocation2 + $0x38] sm:$0xf] %v286
    %296 = vst [vmem:[#allocation2 + $0x40] sm:$0xf] %v287
    // Predicated region
    $region22: #{bert_like_embedder_forward.18} parent=1 // pred_check
      %p297 = pneg %p30
    $region23: #{bert_like_embedder_forward.18} parent=1 // pred_check_branch
      %299 = sbr.rel (%p297) target = $region25
    $region24: #{bert_like_embedder_forward.18} parent=1 // pred_region
      %v300 = vld [vmem:[#allocation2] sm:$0xff]
      %v301 = vld [vmem:[#allocation2 + $0x8] sm:$0xff]
      %v302 = vld [vmem:[#allocation2 + $0x10] sm:$0xff]
      %v303 = vld [vmem:[#allocation2 + $0x18] sm:$0xff]
      %v304 = vld [vmem:[#allocation2 + $0x20] sm:$0xff]
      %v305 = vld [vmem:[#allocation2 + $0x28] sm:$0xff]
      %v306 = vld [vmem:[#allocation2 + $0x30] sm:$0xf]
      %v307 = vld [vmem:[#allocation2 + $0x38] sm:$0xf]
      %v308 = vld [vmem:[#allocation2 + $0x40] sm:$0xf]
      %v309 = vld [vmem:[%s2] sm:$0x7]
      %v311 = vperm.slane %v309, 0
      %v312 = vperm.slane %v309, 1
      %v313 = vperm.slane %v309, 2
      %v317 = vadd.f32 %v300, %v311
      %v318 = vadd.f32 %v301, %v312
      %v319 = vadd.f32 %v302, %v313
      %v320 = vadd.f32 %v303, %v311
      %v321 = vadd.f32 %v304, %v312
      %v322 = vadd.f32 %v305, %v313
      %v323 = vadd.f32 %v306, %v311
      %v324 = vadd.f32 %v307, %v312
      %v325 = vadd.f32 %v308, %v313
      %v326 = vpack.c.bf16 %v318, %v317
      %v327 = vpack.c.bf16 %v319, %v319
      %v328 = vpack.c.bf16 %v321, %v320
      %v329 = vpack.c.bf16 %v322, %v322
      %v330 = vpack.c.bf16 %v324, %v323
      %v331 = vpack.c.bf16 %v325, %v325
      %332 = vst [vmem:[%s3] sm:$0xff] %v326
      %333 = vst [vmem:[%s3 + $0x8] sm:$0xf] %v327
      %334 = vst [vmem:[%s3 + $0xc] sm:$0xff] %v328
      %335 = vst [vmem:[%s3 + $0x14] sm:$0xf] %v329
      %336 = vst [vmem:[%s3 + $0x18] sm:$0x33] %v330
      %337 = vst [vmem:[%s3 + $0x20] sm:$0x3] %v331
    $region25: #{bert_like_embedder_forward.18} parent=1 // pred_fallthru
      _
    // Predicated region
    $region26: #{bert_like_embedder_forward.18} parent=1 // pred_check
      _
    $region27: #{bert_like_embedder_forward.18} parent=1 // pred_check_branch
      %339 = sbr.rel (0) target = $region29
    $region28: #{bert_like_embedder_forward.18} parent=1 // pred_region
      _
    $region29: #{bert_like_embedder_forward.18} parent=1 // pred_fallthru
      _
    // Predicated region
    $region30: #{bert_like_embedder_forward.18} parent=1 // pred_check
      _
    $region31: #{bert_like_embedder_forward.18} parent=1 // pred_check_branch
      %341 = sbr.rel (0) target = $region33
    $region32: #{bert_like_embedder_forward.18} parent=1 // pred_region
      _
    $region33: #{bert_like_embedder_forward.18} parent=1 // pred_fallthru
      _
    %342 = vsyncpa [#allocation4], 1

// kernel: bert_like_embedder_forward.23
$region0: #{bert_like_embedder_forward.23}
  #allocation0 [shape = 'u32[]', space=smem, size = 0x4, offset = 0x4, fixed_abs, tag = 'smem constant byte address 0x4 - core index']
  #allocation1 [shape = 'u32[72,128]{1,0:T(1,128)}', space=vmem, size = 0x9000, scoped, tag = 'internal scratch']
  %s0 = inlined_call_operand.vmem [shape: s32[2,1,10], index: 0, kind: input, shape index: {}]
  %s1 = inlined_call_operand.vmem [shape: bf16[2,10,128], index: 1, kind: input, shape index: {}]
  %s2 = inlined_call_operand.vmem [shape: bf16[2,10,128], index: 2, kind: input, shape index: {}]
  %s3 = inlined_call_operand.vmem [shape: bf16[2,10,128], index: 3, kind: input, shape index: {}]
  %s4 = inlined_call_operand.vmem [shape: f32[2,6,128], index: 4, kind: output, shape index: {0}]
  %s5 = inlined_call_operand.vmem [shape: f32[2,6,128], index: 5, kind: output, shape index: {1}]
  %s6 = inlined_call_operand.vmem [shape: f32[2,6,128], index: 6, kind: output, shape index: {2}]
  %7 = xla_tuple %s4, %s5, %s6
  %s8 = sld [smem:[#allocation0]]
  $region65: #{bert_like_embedder_forward.23} parent=0
    _
  %s10 = ssub.s32 1, %s8
  %s11 = scalar_select 0, %s10, %s8
  loop: start=0, step=1, limit=4
  $region2: #{bert_like_embedder_forward.23} parent=0 // loop_pre_header
    _
  $region3: #{bert_like_embedder_forward.23} parent=0 // loop_header
    %s13 = sphi 0, %s17
    %p14 = scmp.ge.s32.totalorder %s13, 4
    %s23 = sphi 0, %s25
    %s26 = sphi 0, %s23
    %s27 = sphi 0, %s26
    %s43 = sphi 0, %s27
    %s49 = sphi 0, %s51
    %s52 = sphi 0, %s49
    %s53 = sphi 0, %s52
    %s69 = sphi 0, %s53
    %s75 = sphi 0, %s77
    %s78 = sphi 0, %s75
    %s79 = sphi 0, %s78
    %s95 = sphi 0, %s79
    %s101 = sphi 0, %s103
    %s104 = sphi 0, %s101
    %s105 = sphi 0, %s104
    %s121 = sphi 0, %s105
    %s127 = sphi 0, %s129
    %s130 = sphi 0, %s127
    %s131 = sphi 0, %s130
    %s147 = sphi 0, %s131
    %s153 = sphi 0, %s155
    %s156 = sphi 0, %s153
    %s157 = sphi 0, %s156
    %s173 = sphi 0, %s157
    %s179 = sphi 0, %s181
    %s182 = sphi 0, %s179
    %s183 = sphi 0, %s182
    %s199 = sphi 0, %s183
  $region4: #{bert_like_embedder_forward.23} parent=0 // loop_header_branch
    %16 = sbr.rel (%p14) target = $region8
  $region5: #{bert_like_embedder_forward.23} parent=0 // loop_body
    %s18 = ssub.s32 %s13, 1
    %s19 = ssub.s32 %s13, 2
    %s20 = sadd.s32 %s13, 1
    %s21 = ssub.s32 %s13, %s20
    %p22 = scmp.eq.s32.totalorder %s21, 0
    %s24 = sadd.s32 %s23, 1
    %s25 = scalar_select %p22, %s23, %s24
    %p28 = pneg %p22
    %p29 = scmp.eq.s32.totalorder %s13, 1
    %p30 = por %p28, %p29
    %p31 = scmp.ne.s32.totalorder %s23, %s26
    %p32 = scmp.eq.s32.totalorder %s13, 0
    %p33 = por %p31, %p32
    %p34 = scmp.ne.s32.totalorder %s23, %s26
    %p35 = scmp.eq.s32.totalorder %s18, 1
    %p36 = por %p34, %p35
    %p37 = scmp.ne.s32.totalorder %s26, %s27
    %p38 = scmp.eq.s32.totalorder %s18, 0
    %p39 = por %p37, %p38
    %p40 = scmp.ne.s32.totalorder %s26, %s27
    %p41 = scmp.eq.s32.totalorder %s19, 1
    %p42 = por %p40, %p41
    %p44 = scmp.ne.s32.totalorder %s27, %s43
    %p45 = scmp.eq.s32.totalorder %s19, 0
    %p46 = por %p44, %p45
    %s47 = ssub.s32 %s13, %s20
    %p48 = scmp.eq.s32.totalorder %s47, 0
    %s50 = sadd.s32 %s49, 1
    %s51 = scalar_select %p48, %s49, %s50
    %p54 = pneg %p48
    %p55 = scmp.eq.s32.totalorder %s13, 1
    %p56 = por %p54, %p55
    %p57 = scmp.ne.s32.totalorder %s49, %s52
    %p58 = scmp.eq.s32.totalorder %s13, 0
    %p59 = por %p57, %p58
    %p60 = scmp.ne.s32.totalorder %s49, %s52
    %p61 = scmp.eq.s32.totalorder %s18, 1
    %p62 = por %p60, %p61
    %p63 = scmp.ne.s32.totalorder %s52, %s53
    %p64 = scmp.eq.s32.totalorder %s18, 0
    %p65 = por %p63, %p64
    %p66 = scmp.ne.s32.totalorder %s52, %s53
    %p67 = scmp.eq.s32.totalorder %s19, 1
    %p68 = por %p66, %p67
    %p70 = scmp.ne.s32.totalorder %s53, %s69
    %p71 = scmp.eq.s32.totalorder %s19, 0
    %p72 = por %p70, %p71
    %s73 = ssub.s32 %s13, %s20
    %p74 = scmp.eq.s32.totalorder %s73, 0
    %s76 = sadd.s32 %s75, 1
    %s77 = scalar_select %p74, %s75, %s76
    %p80 = pneg %p74
    %p81 = scmp.eq.s32.totalorder %s13, 1
    %p82 = por %p80, %p81
    %p83 = scmp.ne.s32.totalorder %s75, %s78
    %p84 = scmp.eq.s32.totalorder %s13, 0
    %p85 = por %p83, %p84
    %p86 = scmp.ne.s32.totalorder %s75, %s78
    %p87 = scmp.eq.s32.totalorder %s18, 1
    %p88 = por %p86, %p87
    %p89 = scmp.ne.s32.totalorder %s78, %s79
    %p90 = scmp.eq.s32.totalorder %s18, 0
    %p91 = por %p89, %p90
    %p92 = scmp.ne.s32.totalorder %s78, %s79
    %p93 = scmp.eq.s32.totalorder %s19, 1
    %p94 = por %p92, %p93
    %p96 = scmp.ne.s32.totalorder %s79, %s95
    %p97 = scmp.eq.s32.totalorder %s19, 0
    %p98 = por %p96, %p97
    %s99 = ssub.s32 %s13, %s20
    %p100 = scmp.eq.s32.totalorder %s99, 0
    %s102 = sadd.s32 %s101, 1
    %s103 = scalar_select %p100, %s101, %s102
    %p106 = pneg %p100
    %p107 = scmp.eq.s32.totalorder %s13, 1
    %p108 = por %p106, %p107
    %p109 = scmp.ne.s32.totalorder %s101, %s104
    %p110 = scmp.eq.s32.totalorder %s13, 0
    %p111 = por %p109, %p110
    %p112 = scmp.ne.s32.totalorder %s101, %s104
    %p113 = scmp.eq.s32.totalorder %s18, 1
    %p114 = por %p112, %p113
    %p115 = scmp.ne.s32.totalorder %s104, %s105
    %p116 = scmp.eq.s32.totalorder %s18, 0
    %p117 = por %p115, %p116
    %p118 = scmp.ne.s32.totalorder %s104, %s105
    %p119 = scmp.eq.s32.totalorder %s19, 1
    %p120 = por %p118, %p119
    %p122 = scmp.ne.s32.totalorder %s105, %s121
    %p123 = scmp.eq.s32.totalorder %s19, 0
    %p124 = por %p122, %p123
    %s125 = ssub.s32 %s13, %s20
    %p126 = scmp.eq.s32.totalorder %s125, 0
    %s128 = sadd.s32 %s127, 1
    %s129 = scalar_select %p126, %s127, %s128
    %p132 = pneg %p126
    %p133 = scmp.eq.s32.totalorder %s13, 1
    %p134 = por %p132, %p133
    %p135 = scmp.ne.s32.totalorder %s127, %s130
    %p136 = scmp.eq.s32.totalorder %s13, 0
    %p137 = por %p135, %p136
    %p138 = scmp.ne.s32.totalorder %s127, %s130
    %p139 = scmp.eq.s32.totalorder %s18, 1
    %p140 = por %p138, %p139
    %p141 = scmp.ne.s32.totalorder %s130, %s131
    %p142 = scmp.eq.s32.totalorder %s18, 0
    %p143 = por %p141, %p142
    %p144 = scmp.ne.s32.totalorder %s130, %s131
    %p145 = scmp.eq.s32.totalorder %s19, 1
    %p146 = por %p144, %p145
    %p148 = scmp.ne.s32.totalorder %s131, %s147
    %p149 = scmp.eq.s32.totalorder %s19, 0
    %p150 = por %p148, %p149
    %s151 = ssub.s32 %s13, %s20
    %p152 = scmp.eq.s32.totalorder %s151, 0
    %s154 = sadd.s32 %s153, 1
    %s155 = scalar_select %p152, %s153, %s154
    %p158 = pneg %p152
    %p159 = scmp.eq.s32.totalorder %s13, 1
    %p160 = por %p158, %p159
    %p161 = scmp.ne.s32.totalorder %s153, %s156
    %p162 = scmp.eq.s32.totalorder %s13, 0
    %p163 = por %p161, %p162
    %p164 = scmp.ne.s32.totalorder %s153, %s156
    %p165 = scmp.eq.s32.totalorder %s18, 1
    %p166 = por %p164, %p165
    %p167 = scmp.ne.s32.totalorder %s156, %s157
    %p168 = scmp.eq.s32.totalorder %s18, 0
    %p169 = por %p167, %p168
    %p170 = scmp.ne.s32.totalorder %s156, %s157
    %p171 = scmp.eq.s32.totalorder %s19, 1
    %p172 = por %p170, %p171
    %p174 = scmp.ne.s32.totalorder %s157, %s173
    %p175 = scmp.eq.s32.totalorder %s19, 0
    %p176 = por %p174, %p175
    %s177 = ssub.s32 %s13, %s20
    %p178 = scmp.eq.s32.totalorder %s177, 0
    %s180 = sadd.s32 %s179, 1
    %s181 = scalar_select %p178, %s179, %s180
    %p184 = pneg %p178
    %p185 = scmp.eq.s32.totalorder %s13, 1
    %p186 = por %p184, %p185
    %p187 = scmp.ne.s32.totalorder %s179, %s182
    %p188 = scmp.eq.s32.totalorder %s13, 0
    %p189 = por %p187, %p188
    %p190 = scmp.ne.s32.totalorder %s179, %s182
    %p191 = scmp.eq.s32.totalorder %s18, 1
    %p192 = por %p190, %p191
    %p193 = scmp.ne.s32.totalorder %s182, %s183
    %p194 = scmp.eq.s32.totalorder %s18, 0
    %p195 = por %p193, %p194
    %p196 = scmp.ne.s32.totalorder %s182, %s183
    %p197 = scmp.eq.s32.totalorder %s19, 1
    %p198 = por %p196, %p197
    %p200 = scmp.ne.s32.totalorder %s183, %s199
    %p201 = scmp.eq.s32.totalorder %s19, 0
    %p202 = por %p200, %p201
    %p203 = scmp.le.s32.totalorder 1, %s13
    %p204 = scmp.lt.s32.totalorder %s13, 3
    %p205 = pnand %p203, %p204
    %p206 = pneg %p205
    // Predicated region
    $region9: #{bert_like_embedder_forward.23} parent=5 // pred_check
      _
    $region10: #{bert_like_embedder_forward.23} parent=5 // pred_check_branch
      %208 = sbr.rel (%p205) target = $region12
    $region11: #{bert_like_embedder_forward.23} parent=5 // pred_region
      %s209 = ssub.s32 %s13, 1
    $region12: #{bert_like_embedder_forward.23} parent=5 // pred_fallthru
      _
    %p210 = scmp.lt.s32.totalorder %s13, 2
    // Predicated region
    $region13: #{bert_like_embedder_forward.23} parent=5 // pred_check
      %p211 = pneg %p210
    $region14: #{bert_like_embedder_forward.23} parent=5 // pred_check_branch
      %213 = sbr.rel (%p211) target = $region16
    $region15: #{bert_like_embedder_forward.23} parent=5 // pred_region
      // Predicated region
      $region17: #{bert_like_embedder_forward.23} parent=15 // pred_check
        %p214 = pneg %p33
      $region18: #{bert_like_embedder_forward.23} parent=15 // pred_check_branch
        %216 = sbr.rel (%p214) target = $region20
      $region19: #{bert_like_embedder_forward.23} parent=15 // pred_region
        %p217 = scmp.lt.s32.totalorder %s13, 1
        %s218 = scalar_select %p217, %s13, 1
        %s219 = scalar_lea.vmem %s0, %s218
      $region20: #{bert_like_embedder_forward.23} parent=15 // pred_fallthru
        _
      // Predicated region
      $region21: #{bert_like_embedder_forward.23} parent=15 // pred_check
        %p220 = pneg %p59
      $region22: #{bert_like_embedder_forward.23} parent=15 // pred_check_branch
        %222 = sbr.rel (%p220) target = $region24
      $region23: #{bert_like_embedder_forward.23} parent=15 // pred_region
        %p223 = scmp.lt.s32.totalorder %s13, 1
        %s224 = scalar_select %p223, %s13, 1
        %s225 = smul.addr %s224, 2
        %s226 = smul.addr %s225, 4
        %s227 = scalar_lea.vmem %s1, %s226
      $region24: #{bert_like_embedder_forward.23} parent=15 // pred_fallthru
        _
      // Predicated region
      $region25: #{bert_like_embedder_forward.23} parent=15 // pred_check
        %p228 = pneg %p85
      $region26: #{bert_like_embedder_forward.23} parent=15 // pred_check_branch
        %230 = sbr.rel (%p228) target = $region28
      $region27: #{bert_like_embedder_forward.23} parent=15 // pred_region
        %p231 = scmp.lt.s32.totalorder %s13, 1
        %s232 = scalar_select %p231, %s13, 1
        %s233 = smul.addr %s232, 2
        %s234 = smul.addr %s233, 4
        %s235 = scalar_lea.vmem %s2, %s234
      $region28: #{bert_like_embedder_forward.23} parent=15 // pred_fallthru
        _
      // Predicated region
      $region29: #{bert_like_embedder_forward.23} parent=15 // pred_check
        %p236 = pneg %p111
      $region30: #{bert_like_embedder_forward.23} parent=15 // pred_check_branch
        %238 = sbr.rel (%p236) target = $region32
      $region31: #{bert_like_embedder_forward.23} parent=15 // pred_region
        %p239 = scmp.lt.s32.totalorder %s13, 1
        %s240 = scalar_select %p239, %s13, 1
        %s241 = smul.addr %s240, 2
        %s242 = smul.addr %s241, 4
        %s243 = scalar_lea.vmem %s3, %s242
      $region32: #{bert_like_embedder_forward.23} parent=15 // pred_fallthru
        _
    $region16: #{bert_like_embedder_forward.23} parent=5 // pred_fallthru
      _
    %p244 = scmp.le.s32.totalorder 1, %s13
    %p245 = scmp.lt.s32.totalorder %s13, 3
    %p246 = pnand %p244, %p245
    %p247 = pneg %p246
    // Predicated region
    $region33: #{bert_like_embedder_forward.23} parent=5 // pred_check
      _
    $region34: #{bert_like_embedder_forward.23} parent=5 // pred_check_branch
      %249 = sbr.rel (%p246) target = $region36
    $region35: #{bert_like_embedder_forward.23} parent=5 // pred_region
      %s250 = ssub.s32 %s13, 1
      %p251 = scmp.lt.s32.totalorder %s18, 1
      %s252 = scalar_select %p251, %s18, 1
      %s253 = scalar_lea.vmem %s0, %s252
      %p254 = pneg %p39
      %p255 = pneg %p36
      %p256 = scmp.lt.s32.totalorder %s18, 1
      %s257 = scalar_select %p256, %s18, 1
      %s258 = smul.addr %s257, 2
      %s259 = smul.addr %s258, 4
      %s260 = scalar_lea.vmem %s1, %s259
      %p261 = pneg %p65
      %p262 = pneg %p62
      %p263 = scmp.lt.s32.totalorder %s18, 1
      %s264 = scalar_select %p263, %s18, 1
      %s265 = smul.addr %s264, 2
      %s266 = smul.addr %s265, 4
      %s267 = scalar_lea.vmem %s2, %s266
      %p268 = pneg %p91
      %p269 = pneg %p88
      %p270 = scmp.lt.s32.totalorder %s18, 1
      %s271 = scalar_select %p270, %s18, 1
      %s272 = smul.addr %s271, 2
      %s273 = smul.addr %s272, 4
      %s274 = scalar_lea.vmem %s3, %s273
      %p275 = pneg %p117
      %p276 = pneg %p114
      %p277 = pneg %p143
      %p278 = pneg %p140
      %p279 = scmp.lt.s32.totalorder %s18, 1
      %s280 = scalar_select %p279, %s18, 1
      %s281 = smul.addr %s280, 8
      %s282 = scalar_lea.vmem %s4, %s281
      %p283 = pneg %p169
      %p284 = pneg %p166
      %p285 = scmp.lt.s32.totalorder %s18, 1
      %s286 = scalar_select %p285, %s18, 1
      %s287 = smul.addr %s286, 8
      %s288 = scalar_lea.vmem %s5, %s287
      %p289 = pneg %p195
      %p290 = pneg %p192
      %p291 = scmp.lt.s32.totalorder %s18, 1
      %s292 = scalar_select %p291, %s18, 1
      %s293 = smul.addr %s292, 8
      %s294 = scalar_lea.vmem %s6, %s293
      %p295 = scmp.lt.s32.totalorder %s18, 1
      %s296 = scalar_select %p295, %s18, 1
      %s297 = scalar_lea.vmem %s0, %s296
      %p298 = scmp.lt.s32.totalorder %s18, 1
      %s299 = scalar_select %p298, %s18, 1
      %s300 = smul.addr %s299, 2
      %s301 = smul.addr %s300, 4
      %s302 = scalar_lea.vmem %s1, %s301
      %p303 = scmp.lt.s32.totalorder %s18, 1
      %s304 = scalar_select %p303, %s18, 1
      %s305 = smul.addr %s304, 2
      %s306 = smul.addr %s305, 4
      %s307 = scalar_lea.vmem %s2, %s306
      %p308 = scmp.lt.s32.totalorder %s18, 1
      %s309 = scalar_select %p308, %s18, 1
      %s310 = smul.addr %s309, 2
      %s311 = smul.addr %s310, 4
      %s312 = scalar_lea.vmem %s3, %s311
      %p313 = scmp.lt.s32.totalorder %s18, 1
      %s314 = scalar_select %p313, %s18, 1
      %s315 = smul.addr %s314, 8
      %s316 = scalar_lea.vmem %s4, %s315
      %p317 = scmp.lt.s32.totalorder %s18, 1
      %s318 = scalar_select %p317, %s18, 1
      %s319 = smul.addr %s318, 8
      %s320 = scalar_lea.vmem %s5, %s319
      %p321 = scmp.lt.s32.totalorder %s18, 1
      %s322 = scalar_select %p321, %s18, 1
      %s323 = smul.addr %s322, 8
      %s324 = scalar_lea.vmem %s6, %s323
      %v326 = vld [vmem:[%s297] sm:$0x1]
      %v327 = vlaneseq
      %v328 = vshrl.u32 %v327, 7
      %v329 = vperm.slane %v326, 0
      %vm330 = vcmp.eq.s32.totalorder %v328, %v329
      %v331 = vsel %vm330, 1, 0
      %v332 = vcvt.s32.f32 %v331
      %vm333 = vcmask 78848
      %v334 = vsel %vm333, %v332, 0.0
      %335 = vadd.xlane.f32.xlu0 %v334
      %v336 = vpop.xlane.xlu0 %335
      %v337 = vmax.f32 %v336, 1.0
      %v338 = vpack.c.bf16 %v332, %v332
      %v339 = vld [vmem:[%s302] sm:$0xf]
      %v340 = vld [vmem:[%s302 + $0x4] sm:$0x1]
      %v343 = vunpack.c.l.b16 %v339
      %v344 = vunpack.c.l.b16 %v340
      %v345 = vpack.c.b16 %v344, %v343
      %vm346 = vcmask 80896
      %v348 = vsel %vm346, %v338, 0
      %vm350 = vcmask 1044480
      %v352 = vsel %vm350, %v345, 0
      %354 = vmatpush.bf16.msra.mxu0 0
      %355 = vmatpush.bf16.msra.mxu0 0
      %356 = vmatpush.bf16.msra.mxu0 0
      %357 = vmatpush.bf16.msra.mxu0 0
      %358 = vmatpush.bf16.msra.mxu0 0
      %359 = vmatpush.bf16.msra.mxu0 0
      %360 = vmatpush.bf16.msra.mxu0 0
      %361 = vmatpush.bf16.msra.mxu0 %v352
      %362 = vmatmul.bf16.gmra.mxu0 %v348
      %v363 = vpop.f32.mrf.mxu0
      %v364 = vadd.f32 0.0, %v363
      %v365 = vpop.f32.mrf.mxu0
      %366 = vdwg.mxu0
      %v367 = vrcp.pop %v337
      %v368 = vmul.f32 %v337, %v367
      %v369 = vsub.f32 1.0, %v368
      %v370 = vmul.f32 %v367, %v369
      %v371 = vadd.f32 %v367, %v370
      %vm372 = vweird.f32 %v337
      %vm373 = vweird.f32 %v367
      %vm374 = vmor %vm372, %vm373
      %v375 = vsel %vm374, %v367, %v371
      %v376 = vand.u32 2147483647, %v337
      %vm377 = vcmp.eq.f32.partialorder %v376, 8.507059e+37
      %v378 = vand.u32 %v337, 2147483648
      %v379 = vor.u32 1.1754944e-38, %v378
      %v380 = vsel %vm377, %v379, %v375
      %v381 = vmul.f32 %v364, %v380
      %382 = vst [vmem:[%s316] sm:$0x3f] %v381
      %v383 = vld [vmem:[%s307] sm:$0xf]
      %v384 = vld [vmem:[%s307 + $0x4] sm:$0x1]
      %v387 = vunpack.c.l.b16 %v383
      %v388 = vunpack.c.l.b16 %v384
      %v389 = vpack.c.b16 %v388, %v387
      %v391 = vsel %vm350, %v389, 0
      %393 = vmatpush.bf16.msra.mxu0 0
      %394 = vmatpush.bf16.msra.mxu0 0
      %395 = vmatpush.bf16.msra.mxu0 0
      %396 = vmatpush.bf16.msra.mxu0 0
      %397 = vmatpush.bf16.msra.mxu0 0
      %398 = vmatpush.bf16.msra.mxu0 0
      %399 = vmatpush.bf16.msra.mxu0 0
      %400 = vmatpush.bf16.msra.mxu0 %v391
      %401 = vmatmul.bf16.gmra.mxu0 %v348
      %v402 = vpop.f32.mrf.mxu0
      %v403 = vadd.f32 0.0, %v402
      %v404 = vpop.f32.mrf.mxu0
      %405 = vdwg.mxu0
      %v406 = vmul.f32 %v403, %v380
      %407 = vst [vmem:[%s320] sm:$0x3f] %v406
      %v408 = vld [vmem:[%s312] sm:$0xf]
      %v409 = vld [vmem:[%s312 + $0x4] sm:$0x1]
      %v412 = vunpack.c.l.b16 %v408
      %v413 = vunpack.c.l.b16 %v409
      %v414 = vpack.c.b16 %v413, %v412
      %v416 = vsel %vm350, %v414, 0
      %418 = vmatpush.bf16.msra.mxu0 0
      %419 = vmatpush.bf16.msra.mxu0 0
      %420 = vmatpush.bf16.msra.mxu0 0
      %421 = vmatpush.bf16.msra.mxu0 0
      %422 = vmatpush.bf16.msra.mxu0 0
      %423 = vmatpush.bf16.msra.mxu0 0
      %424 = vmatpush.bf16.msra.mxu0 0
      %425 = vmatpush.bf16.msra.mxu0 %v416
      %426 = vmatmul.bf16.gmra.mxu0 %v348
      %v427 = vpop.f32.mrf.mxu0
      %v428 = vadd.f32 0.0, %v427
      %v429 = vpop.f32.mrf.mxu0
      %430 = vdwg.mxu0
      %v431 = vmul.f32 %v428, %v380
      %432 = vst [vmem:[%s324] sm:$0x3f] %v431
      %p433 = scmp.lt.s32.totalorder %s18, 1
      %s434 = scalar_select %p433, %s18, 1
      %s435 = smul.addr %s434, 8
      %s436 = scalar_lea.vmem %s4, %s435
      %p437 = scmp.lt.s32.totalorder %s18, 1
      %s438 = scalar_select %p437, %s18, 1
      %s439 = smul.addr %s438, 8
      %s440 = scalar_lea.vmem %s5, %s439
      %p441 = scmp.lt.s32.totalorder %s18, 1
      %s442 = scalar_select %p441, %s18, 1
      %s443 = smul.addr %s442, 8
      %s444 = scalar_lea.vmem %s6, %s443
      // Predicated region
      $region37: #{bert_like_embedder_forward.23} parent=35 // pred_check
        %p445 = pneg %p140
      $region38: #{bert_like_embedder_forward.23} parent=35 // pred_check_branch
        %447 = sbr.rel (%p445) target = $region40
      $region39: #{bert_like_embedder_forward.23} parent=35 // pred_region
        _
      $region40: #{bert_like_embedder_forward.23} parent=35 // pred_fallthru
        _
      // Predicated region
      $region41: #{bert_like_embedder_forward.23} parent=35 // pred_check
        %p448 = pneg %p166
      $region42: #{bert_like_embedder_forward.23} parent=35 // pred_check_branch
        %450 = sbr.rel (%p448) target = $region44
      $region43: #{bert_like_embedder_forward.23} parent=35 // pred_region
        _
      $region44: #{bert_like_embedder_forward.23} parent=35 // pred_fallthru
        _
      // Predicated region
      $region45: #{bert_like_embedder_forward.23} parent=35 // pred_check
        %p451 = pneg %p192
      $region46: #{bert_like_embedder_forward.23} parent=35 // pred_check_branch
        %453 = sbr.rel (%p451) target = $region48
      $region47: #{bert_like_embedder_forward.23} parent=35 // pred_region
        _
      $region48: #{bert_like_embedder_forward.23} parent=35 // pred_fallthru
        _
    $region36: #{bert_like_embedder_forward.23} parent=5 // pred_fallthru
      _
    %p454 = scmp.le.s32.totalorder 2, %s13
    // Predicated region
    $region49: #{bert_like_embedder_forward.23} parent=5 // pred_check
      %p455 = pneg %p454
    $region50: #{bert_like_embedder_forward.23} parent=5 // pred_check_branch
      %457 = sbr.rel (%p455) target = $region52
    $region51: #{bert_like_embedder_forward.23} parent=5 // pred_region
      %s458 = ssub.s32 %s13, 2
      // Predicated region
      $region53: #{bert_like_embedder_forward.23} parent=51 // pred_check
        %p459 = pneg %p146
      $region54: #{bert_like_embedder_forward.23} parent=51 // pred_check_branch
        %461 = sbr.rel (%p459) target = $region56
      $region55: #{bert_like_embedder_forward.23} parent=51 // pred_region
        %p462 = scmp.lt.s32.totalorder %s19, 1
        %s463 = scalar_select %p462, %s19, 1
        %s464 = smul.addr %s463, 8
        %s465 = scalar_lea.vmem %s4, %s464
      $region56: #{bert_like_embedder_forward.23} parent=51 // pred_fallthru
        _
      // Predicated region
      $region57: #{bert_like_embedder_forward.23} parent=51 // pred_check
        %p466 = pneg %p172
      $region58: #{bert_like_embedder_forward.23} parent=51 // pred_check_branch
        %468 = sbr.rel (%p466) target = $region60
      $region59: #{bert_like_embedder_forward.23} parent=51 // pred_region
        %p469 = scmp.lt.s32.totalorder %s19, 1
        %s470 = scalar_select %p469, %s19, 1
        %s471 = smul.addr %s470, 8
        %s472 = scalar_lea.vmem %s5, %s471
      $region60: #{bert_like_embedder_forward.23} parent=51 // pred_fallthru
        _
      // Predicated region
      $region61: #{bert_like_embedder_forward.23} parent=51 // pred_check
        %p473 = pneg %p198
      $region62: #{bert_like_embedder_forward.23} parent=51 // pred_check_branch
        %475 = sbr.rel (%p473) target = $region64
      $region63: #{bert_like_embedder_forward.23} parent=51 // pred_region
        %p476 = scmp.lt.s32.totalorder %s19, 1
        %s477 = scalar_select %p476, %s19, 1
        %s478 = smul.addr %s477, 8
        %s479 = scalar_lea.vmem %s6, %s478
      $region64: #{bert_like_embedder_forward.23} parent=51 // pred_fallthru
        _
    $region52: #{bert_like_embedder_forward.23} parent=5 // pred_fallthru
      _
  $region6: #{bert_like_embedder_forward.23} parent=0 // loop_footer
    %s17 = sadd.s32 1, %s13
  $region7: #{bert_like_embedder_forward.23} parent=0 // loop_footer_branch
    %12 = sbr.rel target = $region3
  $region8: #{bert_like_embedder_forward.23} parent=0 // loop_exit
    _

</llo_original>
